<compile_context>
chip_gen: v7x
topology: tpu7x:2x2x1
jax: 0.10.0
libtpu: 0.0.40
codegen_flags: <defaults>
</compile_context>

<pallas_src>
import functools
import math

import jax
import jax.numpy as jnp
from jax import lax
from jax.experimental import pallas as pl
from jax.experimental.pallas import tpu as pltpu

LN_EPS = 1e-5  # torch.nn.LayerNorm default

_STD = (((1,), (0,)), ((), ()))   # (M,K) @ (K,N)
_TRB = (((1,), (1,)), ((), ()))   # (M,K) @ (N,K)   (rhs transposed)


def _erf_poly(x):
    # Abramowitz & Stegun 7.1.26 rational approximation, |err| < 1.5e-7 —
    # f32-accurate erf from mul/add/exp/where only (matches torch exact GELU).
    a1, a2, a3, a4, a5 = (0.254829592, -0.284496736, 1.421413741,
                          -1.453152027, 1.061405429)
    p = 0.3275911
    ax = jnp.abs(x)
    t = 1.0 / (1.0 + p * ax)
    poly = ((((a5 * t + a4) * t + a3) * t + a2) * t + a1) * t
    y = 1.0 - poly * jnp.exp(-ax * ax)
    return jnp.where(x >= 0.0, y, -y)


def _gelu_exact(x):
    return 0.5 * x * (1.0 + _erf_poly(x * 0.7071067811865476))


def _layernorm(x, gamma, beta):
    mu = jnp.mean(x, axis=-1, keepdims=True)
    var = jnp.mean((x - mu) ** 2, axis=-1, keepdims=True)
    return (x - mu) * jax.lax.rsqrt(var + LN_EPS) * gamma + beta


def transformer_block_kernel(
    x_ref,            # (Bt, L, C) f32   activations, token-major
    wqkv_ref,         # (C, 3C)  bf16    fused in_proj weight, (in,out), q cols pre-scaled
    bqkv_ref,         # (1, 3C)  f32     fused in_proj bias row (q part pre-scaled)
    wo_ref,           # (C, C)   bf16    out_proj weight, (in,out)
    bo_ref,           # (1, C)   f32
    g1_ref, be1_ref,  # (1, C)   f32     LayerNorm1 gamma / beta
    w1_ref,           # (C, 4C)  bf16    MLP linear1 weight (in,out)
    b1_ref,           # (1, 4C)  f32
    w2_ref,           # (4C, C)  bf16    MLP linear2 weight (in,out)
    b2_ref,           # (1, C)   f32
    g2_ref, be2_ref,  # (1, C)   f32     LayerNorm2 gamma / beta
    o_ref,            # (Bt, L, C)       output
    ctx_ref,          # (Bt*L, C) f32    VMEM scratch: lane-dense assembled head outputs
    *,
    num_heads, head_dim, block_b, seq_len,
):
    f32 = jnp.float32
    bf16 = jnp.bfloat16
    H, hd = num_heads, head_dim
    Bt, L = block_b, seq_len
    C = H * hd
    M = Bt * L

    # Merge (Bt, L) into the matmul M dimension (layout-free leading-dim merge).
    x = x_ref[...].reshape(M, C).astype(f32)     # residual path stays f32
    x_bf = x.astype(bf16)

    # ---- fused QKV projection: one (M,C)@(C,3C) MXU call ----
    qkv = lax.dot_general(x_bf, wqkv_ref[...], _STD, preferred_element_type=f32)
    qkv = qkv + bqkv_ref[...]                    # lane-dense (1,3C) bias row
    qkv_bf = qkv.astype(bf16)                    # single cast for all heads

    # ---- per-(batch, head) attention core (scores / softmax / context) ----
    # Head outputs are stored straight into a lane-dense (M, C) scratch so the
    # output projection below is a single well-shaped matmul.
    for b in range(Bt):
        r0 = b * L
        for h in range(H):
            c0 = h * hd
            q_h = qkv_bf[r0:r0 + L, c0:c0 + hd]                  # (L, hd)
            k_h = qkv_bf[r0:r0 + L, C + c0:C + c0 + hd]          # (L, hd)
            v_h = qkv_bf[r0:r0 + L, 2 * C + c0:2 * C + c0 + hd]  # (L, hd)

            # scores (1/sqrt(hd) already folded into the q weights); softmax in f32
            s = lax.dot_general(q_h, k_h, _TRB, preferred_element_type=f32)  # (L, L)
            s = s - jnp.max(s, axis=-1, keepdims=True)
            p = jnp.exp(s)
            p = p * pl.reciprocal(jnp.sum(p, axis=-1, keepdims=True), approx=True)

            ctx_h = lax.dot_general(p.astype(bf16), v_h, _STD,
                                    preferred_element_type=f32)              # (L, hd)
            ctx_ref[r0:r0 + L, c0:c0 + hd] = ctx_h

    # ---- fused output projection: one (M,C)@(C,C) MXU call ----
    attn = lax.dot_general(ctx_ref[...].astype(bf16), wo_ref[...], _STD,
                           preferred_element_type=f32) + bo_ref[...]

    # ---- residual + LN1 -> MLP(GELU) -> residual + LN2 ----
    x1 = _layernorm(x + attn, g1_ref[...], be1_ref[...])
    hid = lax.dot_general(x1.astype(bf16), w1_ref[...], _STD,
                          preferred_element_type=f32) + b1_ref[...]
    hid = _gelu_exact(hid)
    mlp = lax.dot_general(hid.astype(bf16), w2_ref[...], _STD,
                          preferred_element_type=f32) + b2_ref[...]
    x2 = _layernorm(x1 + mlp, g2_ref[...], be2_ref[...])
    o_ref[...] = x2.reshape(Bt, L, C).astype(o_ref.dtype)


def transformer_block(x_nchw, params, num_heads=8, block_b=1):
    """block_b: batch elements folded per grid step.
       - v7x with small B: keep block_b=1 so grid=(B,) 'parallel' uses both TensorCores.
       - v5e/v6e: set block_b so block_b*L >= 128/256 to fill the MXU M dimension."""
    B, C, H, W = x_nchw.shape
    L = H * W
    assert C % num_heads == 0
    assert B % block_b == 0
    hd = C // num_heads
    scale = 1.0 / math.sqrt(hd)

    f32 = jnp.float32
    bf16 = jnp.bfloat16

    # NCHW -> (B, L, C) token-major (negligible at these sizes)
    x = jnp.transpose(x_nchw.reshape(B, C, L), (0, 2, 1))

    # ---- host-side weight prep: pre-transpose to (in,out), pre-scale q, pre-cast bf16 ----
    in_w = params["in_proj_weight"].astype(f32)        # (3C, C), rows [q; k; v]
    in_b = params["in_proj_bias"].astype(f32)          # (3C,)
    row_scale = jnp.concatenate(
        [jnp.full((C,), scale, f32), jnp.ones((2 * C,), f32)])
    wqkv = (in_w * row_scale[:, None]).T.astype(bf16)   # (C, 3C) bf16, q cols scaled
    bqkv = (in_b * row_scale).reshape(1, 3 * C)          # (1, 3C) f32

    wo = params["out_proj_weight"].astype(f32).T.astype(bf16)   # (C, C) (in,out) bf16
    bo = params["out_proj_bias"].reshape(1, C).astype(f32)
    g1 = params["ln1_gamma"].reshape(1, C).astype(f32)
    be1 = params["ln1_beta"].reshape(1, C).astype(f32)
    w1 = params["mlp_w1"].T.astype(bf16)                 # (C, 4C)
    b1 = params["mlp_b1"].reshape(1, 4 * C).astype(f32)
    w2 = params["mlp_w2"].T.astype(bf16)                 # (4C, C)
    b2 = params["mlp_b2"].reshape(1, C).astype(f32)
    g2 = params["ln2_gamma"].reshape(1, C).astype(f32)
    be2 = params["ln2_beta"].reshape(1, C).astype(f32)

    kernel = functools.partial(transformer_block_kernel, num_heads=num_heads,
                               head_dim=hd, block_b=block_b, seq_len=L)
    full2d = lambda i: (0, 0)

    out = pl.pallas_call(
        kernel,
        out_shape=jax.ShapeDtypeStruct((B, L, C), x.dtype),
        grid=(B // block_b,),
        in_specs=[
            pl.BlockSpec((block_b, L, C), lambda i: (i, 0, 0)),   # x
            pl.BlockSpec((C, 3 * C), full2d),                     # wqkv (bf16)
            pl.BlockSpec((1, 3 * C), full2d),                     # bqkv
            pl.BlockSpec((C, C), full2d),                         # wo (bf16)
            pl.BlockSpec((1, C), full2d),                         # bo
            pl.BlockSpec((1, C), full2d),                         # g1
            pl.BlockSpec((1, C), full2d),                         # be1
            pl.BlockSpec((C, 4 * C), full2d),                     # w1 (bf16)
            pl.BlockSpec((1, 4 * C), full2d),                     # b1
            pl.BlockSpec((4 * C, C), full2d),                     # w2 (bf16)
            pl.BlockSpec((1, C), full2d),                         # b2
            pl.BlockSpec((1, C), full2d),                         # g2
            pl.BlockSpec((1, C), full2d),                         # be2
        ],
        out_specs=pl.BlockSpec((block_b, L, C), lambda i: (i, 0, 0)),
        scratch_shapes=[pltpu.VMEM((block_b * L, C), jnp.float32)],
        compiler_params=pltpu.CompilerParams(
            dimension_semantics=("parallel",)),
    )(x, wqkv, bqkv, wo, bo, g1, be1, w1, b1, w2, b2, g2, be2)

    # (B, L, C) -> NCHW
    return jnp.transpose(out, (0, 2, 1)).reshape(B, C, H, W)


def transformer_block_reference(x_nchw, params, num_heads=8):
    """Pure-JAX reference mirroring the PyTorch forward (for verification)."""
    hp = jax.lax.Precision.HIGHEST
    B, C, H, W = x_nchw.shape
    L = H * W
    hd = C // num_heads
    x = jnp.transpose(x_nchw.reshape(B, C, L), (0, 2, 1)).astype(jnp.float32)
    qkv = jnp.einsum("blc,dc->bld", x, params["in_proj_weight"],
                     precision=hp) + params["in_proj_bias"]
    q, k, v = jnp.split(qkv, 3, axis=-1)
    q = q.reshape(B, L, num_heads, hd)
    k = k.reshape(B, L, num_heads, hd)
    v = v.reshape(B, L, num_heads, hd)
    s = jnp.einsum("blhd,bmhd->bhlm", q, k, precision=hp) / math.sqrt(hd)
    a = jax.nn.softmax(s, axis=-1)
    attn = jnp.einsum("bhlm,bmhd->blhd", a, v, precision=hp).reshape(B, L, C)
    attn = jnp.einsum("blc,dc->bld", attn, params["out_proj_weight"],
                      precision=hp) + params["out_proj_bias"]
    x1 = _layernorm(x + attn, params["ln1_gamma"], params["ln1_beta"])
    hid = jnp.einsum("blc,dc->bld", x1, params["mlp_w1"],
                     precision=hp) + params["mlp_b1"]
    hid = jax.nn.gelu(hid, approximate=False)
    mlp = jnp.einsum("bld,cd->blc", hid, params["mlp_w2"],
                     precision=hp) + params["mlp_b2"]
    x2 = _layernorm(x1 + mlp, params["ln2_gamma"], params["ln2_beta"])
    return jnp.transpose(x2, (0, 2, 1)).reshape(B, C, H, W)


if __name__ == "__main__":
    B, C, H, W = 2, 64, 8, 8          # dim = C = 64, num_heads = 8 -> head_dim = 8
    num_heads = 8

    key = jax.random.PRNGKey(0)
    ks = jax.random.split(key, 16)
    s = 0.02
    params = {
        "in_proj_weight": s * jax.random.normal(ks[0], (3 * C, C), jnp.float32),
        "in_proj_bias":   s * jax.random.normal(ks[1], (3 * C,), jnp.float32),
        "out_proj_weight": s * jax.random.normal(ks[2], (C, C), jnp.float32),
        "out_proj_bias":   s * jax.random.normal(ks[3], (C,), jnp.float32),
        "ln1_gamma": 1.0 + 0.1 * jax.random.normal(ks[4], (C,), jnp.float32),
        "ln1_beta":  0.1 * jax.random.normal(ks[5], (C,), jnp.float32),
        "mlp_w1": s * jax.random.normal(ks[6], (4 * C, C), jnp.float32),
        "mlp_b1": s * jax.random.normal(ks[7], (4 * C,), jnp.float32),
        "mlp_w2": s * jax.random.normal(ks[8], (C, 4 * C), jnp.float32),
        "mlp_b2": s * jax.random.normal(ks[9], (C,), jnp.float32),
        "ln2_gamma": 1.0 + 0.1 * jax.random.normal(ks[10], (C,), jnp.float32),
        "ln2_beta":  0.1 * jax.random.normal(ks[11], (C,), jnp.float32),
    }
    x = jax.random.normal(ks[12], (B, C, H, W), jnp.float32)

    # block_b=1: one batch element per grid step (keeps both v7x TensorCores busy at B=2).
    out = jax.block_until_ready(transformer_block(x, params, num_heads=num_heads))
    ref = jax.block_until_ready(
        transformer_block_reference(x, params, num_heads=num_heads))

    assert out.shape == (B, C, H, W), out.shape
    max_err = float(jnp.max(jnp.abs(out - ref)))
    assert max_err < 5e-3, f"mismatch vs reference: max abs err = {max_err}"
    print("KERNEL_OK")
</pallas_src>

<mosaic_0001>
module attributes {stable_mosaic.version = 11 : i64} {
  func.func @transformer_block_kernel(%arg0: i32, %arg1: memref<1x64x64xf32, #tpu.memory_space<vmem>>, %arg2: memref<64x192xbf16, #tpu.memory_space<vmem>>, %arg3: memref<1x192xf32, #tpu.memory_space<vmem>>, %arg4: memref<64x64xbf16, #tpu.memory_space<vmem>>, %arg5: memref<1x64xf32, #tpu.memory_space<vmem>>, %arg6: memref<1x64xf32, #tpu.memory_space<vmem>>, %arg7: memref<1x64xf32, #tpu.memory_space<vmem>>, %arg8: memref<64x256xbf16, #tpu.memory_space<vmem>>, %arg9: memref<1x256xf32, #tpu.memory_space<vmem>>, %arg10: memref<256x64xbf16, #tpu.memory_space<vmem>>, %arg11: memref<1x64xf32, #tpu.memory_space<vmem>>, %arg12: memref<1x64xf32, #tpu.memory_space<vmem>>, %arg13: memref<1x64xf32, #tpu.memory_space<vmem>>, %arg14: memref<1x64x64xf32, #tpu.memory_space<vmem>>, %arg15: memref<64x64xf32, #tpu.memory_space<vmem>>) attributes {dimension_semantics = [#tpu.dimension_semantics<parallel>], iteration_bounds = array<i64: 2>, scalar_prefetch = 0 : i64, scratch_operands = 1 : i64, tpu.core_type = #tpu.core_type<tc>, window_params = [{transform_indices = @transform_0, window_bounds = array<i64: 1, 64, 64>}, {pipeline_mode = #tpu.pipeline_mode<synchronous>, transform_indices = @transform_1, window_bounds = array<i64: 64, 192>}, {pipeline_mode = #tpu.pipeline_mode<synchronous>, transform_indices = @transform_2, window_bounds = array<i64: 1, 192>}, {pipeline_mode = #tpu.pipeline_mode<synchronous>, transform_indices = @transform_3, window_bounds = array<i64: 64, 64>}, {pipeline_mode = #tpu.pipeline_mode<synchronous>, transform_indices = @transform_4, window_bounds = array<i64: 1, 64>}, {pipeline_mode = #tpu.pipeline_mode<synchronous>, transform_indices = @transform_5, window_bounds = array<i64: 1, 64>}, {pipeline_mode = #tpu.pipeline_mode<synchronous>, transform_indices = @transform_6, window_bounds = array<i64: 1, 64>}, {pipeline_mode = #tpu.pipeline_mode<synchronous>, transform_indices = @transform_7, window_bounds = array<i64: 64, 256>}, {pipeline_mode = #tpu.pipeline_mode<synchronous>, transform_indices = @transform_8, window_bounds = array<i64: 1, 256>}, {pipeline_mode = #tpu.pipeline_mode<synchronous>, transform_indices = @transform_9, window_bounds = array<i64: 256, 64>}, {pipeline_mode = #tpu.pipeline_mode<synchronous>, transform_indices = @transform_10, window_bounds = array<i64: 1, 64>}, {pipeline_mode = #tpu.pipeline_mode<synchronous>, transform_indices = @transform_11, window_bounds = array<i64: 1, 64>}, {pipeline_mode = #tpu.pipeline_mode<synchronous>, transform_indices = @transform_12, window_bounds = array<i64: 1, 64>}, {transform_indices = @transform_13, window_bounds = array<i64: 1, 64, 64>}]} {
    %c0 = arith.constant 0 : index
    %c0_0 = arith.constant 0 : index
    %c0_1 = arith.constant 0 : index
    %0 = vector.load %arg1[%c0, %c0_0, %c0_1] : memref<1x64x64xf32, #tpu.memory_space<vmem>>, vector<1x64x64xf32>
    %1 = vector.shape_cast %0 : vector<1x64x64xf32> to vector<64x64xf32>
    %2 = arith.truncf %1 : vector<64x64xf32> to vector<64x64xbf16>
    %c0_2 = arith.constant 0 : index
    %c0_3 = arith.constant 0 : index
    %3 = vector.load %arg2[%c0_2, %c0_3] : memref<64x192xbf16, #tpu.memory_space<vmem>>, vector<64x192xbf16>
    %cst = arith.constant dense<0.000000e+00> : vector<64x192xf32>
    %4 = tpu.matmul %2, %3, %cst {dimension_numbers = #tpu.dot_dimension_numbers<[1], [0], [0], [1], [0, 0, 1, 1], [], []>} : vector<64x64xbf16>, vector<64x192xbf16>, vector<64x192xf32> -> vector<64x192xf32>
    %c0_4 = arith.constant 0 : index
    %c0_5 = arith.constant 0 : index
    %5 = vector.load %arg3[%c0_4, %c0_5] : memref<1x192xf32, #tpu.memory_space<vmem>>, vector<1x192xf32>
    %6 = vector.broadcast %5 : vector<1x192xf32> to vector<64x192xf32>
    %7 = arith.addf %4, %6 : vector<64x192xf32>
    %8 = arith.truncf %7 : vector<64x192xf32> to vector<64x192xbf16>
    %9 = vector.extract_strided_slice %8 {offsets = [0, 0], sizes = [64, 8], strides = [1, 1]} : vector<64x192xbf16> to vector<64x8xbf16>
    %10 = vector.extract_strided_slice %8 {offsets = [0, 64], sizes = [64, 8], strides = [1, 1]} : vector<64x192xbf16> to vector<64x8xbf16>
    %11 = vector.extract_strided_slice %8 {offsets = [0, 128], sizes = [64, 8], strides = [1, 1]} : vector<64x192xbf16> to vector<64x8xbf16>
    %cst_6 = arith.constant dense<0.000000e+00> : vector<64x64xf32>
    %12 = tpu.matmul %9, %10, %cst_6 {dimension_numbers = #tpu.dot_dimension_numbers<[1], [1], [0], [0], [0, 0, 1, 0], [], []>} : vector<64x8xbf16>, vector<64x8xbf16>, vector<64x64xf32> -> vector<64x64xf32>
    %cst_7 = arith.constant dense<0xFF800000> : vector<64xf32>
    %13 = vector.multi_reduction <maximumf>, %12, %cst_7 [1] : vector<64x64xf32> to vector<64xf32>
    %14 = vector.shape_cast %13 : vector<64xf32> to vector<64x1xf32>
    %15 = vector.broadcast %14 : vector<64x1xf32> to vector<64x64xf32>
    %16 = arith.subf %12, %15 : vector<64x64xf32>
    %17 = math.exp %16 : vector<64x64xf32>
    %cst_8 = arith.constant dense<0.000000e+00> : vector<64xf32>
    %18 = vector.multi_reduction <add>, %17, %cst_8 [1] : vector<64x64xf32> to vector<64xf32>
    %19 = vector.shape_cast %18 : vector<64xf32> to vector<64x1xf32>
    %20 = tpu.reciprocal %19 {approx = true} : vector<64x1xf32> -> vector<64x1xf32>
    %21 = vector.broadcast %20 : vector<64x1xf32> to vector<64x64xf32>
    %22 = arith.mulf %17, %21 : vector<64x64xf32>
    %23 = arith.truncf %22 : vector<64x64xf32> to vector<64x64xbf16>
    %cst_9 = arith.constant dense<0.000000e+00> : vector<64x8xf32>
    %24 = tpu.matmul %23, %11, %cst_9 {dimension_numbers = #tpu.dot_dimension_numbers<[1], [0], [0], [1], [0, 0, 1, 1], [], []>} : vector<64x64xbf16>, vector<64x8xbf16>, vector<64x8xf32> -> vector<64x8xf32>
    %c0_10 = arith.constant 0 : index
    %c0_11 = arith.constant 0 : index
    %25 = vector.load %arg15[%c0_10, %c0_11] : memref<64x64xf32, #tpu.memory_space<vmem>>, vector<64x8xf32>
    tpu.vector_store %arg15[%c0_10, %c0_11], %24 {strides = array<i32>} : memref<64x64xf32, #tpu.memory_space<vmem>>, vector<64x8xf32>,
    %26 = vector.extract_strided_slice %8 {offsets = [0, 8], sizes = [64, 8], strides = [1, 1]} : vector<64x192xbf16> to vector<64x8xbf16>
    %27 = vector.extract_strided_slice %8 {offsets = [0, 72], sizes = [64, 8], strides = [1, 1]} : vector<64x192xbf16> to vector<64x8xbf16>
    %28 = vector.extract_strided_slice %8 {offsets = [0, 136], sizes = [64, 8], strides = [1, 1]} : vector<64x192xbf16> to vector<64x8xbf16>
    %cst_12 = arith.constant dense<0.000000e+00> : vector<64x64xf32>
    %29 = tpu.matmul %26, %27, %cst_12 {dimension_numbers = #tpu.dot_dimension_numbers<[1], [1], [0], [0], [0, 0, 1, 0], [], []>} : vector<64x8xbf16>, vector<64x8xbf16>, vector<64x64xf32> -> vector<64x64xf32>
    %cst_13 = arith.constant dense<0xFF800000> : vector<64xf32>
    %30 = vector.multi_reduction <maximumf>, %29, %cst_13 [1] : vector<64x64xf32> to vector<64xf32>
    %31 = vector.shape_cast %30 : vector<64xf32> to vector<64x1xf32>
    %32 = vector.broadcast %31 : vector<64x1xf32> to vector<64x64xf32>
    %33 = arith.subf %29, %32 : vector<64x64xf32>
    %34 = math.exp %33 : vector<64x64xf32>
    %cst_14 = arith.constant dense<0.000000e+00> : vector<64xf32>
    %35 = vector.multi_reduction <add>, %34, %cst_14 [1] : vector<64x64xf32> to vector<64xf32>
    %36 = vector.shape_cast %35 : vector<64xf32> to vector<64x1xf32>
    %37 = tpu.reciprocal %36 {approx = true} : vector<64x1xf32> -> vector<64x1xf32>
    %38 = vector.broadcast %37 : vector<64x1xf32> to vector<64x64xf32>
    %39 = arith.mulf %34, %38 : vector<64x64xf32>
    %40 = arith.truncf %39 : vector<64x64xf32> to vector<64x64xbf16>
    %cst_15 = arith.constant dense<0.000000e+00> : vector<64x8xf32>
    %41 = tpu.matmul %40, %28, %cst_15 {dimension_numbers = #tpu.dot_dimension_numbers<[1], [0], [0], [1], [0, 0, 1, 1], [], []>} : vector<64x64xbf16>, vector<64x8xbf16>, vector<64x8xf32> -> vector<64x8xf32>
    %c0_16 = arith.constant 0 : index
    %c8 = arith.constant 8 : index
    %42 = vector.load %arg15[%c0_16, %c8] : memref<64x64xf32, #tpu.memory_space<vmem>>, vector<64x8xf32>
    tpu.vector_store %arg15[%c0_16, %c8], %41 {strides = array<i32>} : memref<64x64xf32, #tpu.memory_space<vmem>>, vector<64x8xf32>,
    %43 = vector.extract_strided_slice %8 {offsets = [0, 16], sizes = [64, 8], strides = [1, 1]} : vector<64x192xbf16> to vector<64x8xbf16>
    %44 = vector.extract_strided_slice %8 {offsets = [0, 80], sizes = [64, 8], strides = [1, 1]} : vector<64x192xbf16> to vector<64x8xbf16>
    %45 = vector.extract_strided_slice %8 {offsets = [0, 144], sizes = [64, 8], strides = [1, 1]} : vector<64x192xbf16> to vector<64x8xbf16>
    %cst_17 = arith.constant dense<0.000000e+00> : vector<64x64xf32>
    %46 = tpu.matmul %43, %44, %cst_17 {dimension_numbers = #tpu.dot_dimension_numbers<[1], [1], [0], [0], [0, 0, 1, 0], [], []>} : vector<64x8xbf16>, vector<64x8xbf16>, vector<64x64xf32> -> vector<64x64xf32>
    %cst_18 = arith.constant dense<0xFF800000> : vector<64xf32>
    %47 = vector.multi_reduction <maximumf>, %46, %cst_18 [1] : vector<64x64xf32> to vector<64xf32>
    %48 = vector.shape_cast %47 : vector<64xf32> to vector<64x1xf32>
    %49 = vector.broadcast %48 : vector<64x1xf32> to vector<64x64xf32>
    %50 = arith.subf %46, %49 : vector<64x64xf32>
    %51 = math.exp %50 : vector<64x64xf32>
    %cst_19 = arith.constant dense<0.000000e+00> : vector<64xf32>
    %52 = vector.multi_reduction <add>, %51, %cst_19 [1] : vector<64x64xf32> to vector<64xf32>
    %53 = vector.shape_cast %52 : vector<64xf32> to vector<64x1xf32>
    %54 = tpu.reciprocal %53 {approx = true} : vector<64x1xf32> -> vector<64x1xf32>
    %55 = vector.broadcast %54 : vector<64x1xf32> to vector<64x64xf32>
    %56 = arith.mulf %51, %55 : vector<64x64xf32>
    %57 = arith.truncf %56 : vector<64x64xf32> to vector<64x64xbf16>
    %cst_20 = arith.constant dense<0.000000e+00> : vector<64x8xf32>
    %58 = tpu.matmul %57, %45, %cst_20 {dimension_numbers = #tpu.dot_dimension_numbers<[1], [0], [0], [1], [0, 0, 1, 1], [], []>} : vector<64x64xbf16>, vector<64x8xbf16>, vector<64x8xf32> -> vector<64x8xf32>
    %c0_21 = arith.constant 0 : index
    %c16 = arith.constant 16 : index
    %59 = vector.load %arg15[%c0_21, %c16] : memref<64x64xf32, #tpu.memory_space<vmem>>, vector<64x8xf32>
    tpu.vector_store %arg15[%c0_21, %c16], %58 {strides = array<i32>} : memref<64x64xf32, #tpu.memory_space<vmem>>, vector<64x8xf32>,
    %60 = vector.extract_strided_slice %8 {offsets = [0, 24], sizes = [64, 8], strides = [1, 1]} : vector<64x192xbf16> to vector<64x8xbf16>
    %61 = vector.extract_strided_slice %8 {offsets = [0, 88], sizes = [64, 8], strides = [1, 1]} : vector<64x192xbf16> to vector<64x8xbf16>
    %62 = vector.extract_strided_slice %8 {offsets = [0, 152], sizes = [64, 8], strides = [1, 1]} : vector<64x192xbf16> to vector<64x8xbf16>
    %cst_22 = arith.constant dense<0.000000e+00> : vector<64x64xf32>
    %63 = tpu.matmul %60, %61, %cst_22 {dimension_numbers = #tpu.dot_dimension_numbers<[1], [1], [0], [0], [0, 0, 1, 0], [], []>} : vector<64x8xbf16>, vector<64x8xbf16>, vector<64x64xf32> -> vector<64x64xf32>
    %cst_23 = arith.constant dense<0xFF800000> : vector<64xf32>
    %64 = vector.multi_reduction <maximumf>, %63, %cst_23 [1] : vector<64x64xf32> to vector<64xf32>
    %65 = vector.shape_cast %64 : vector<64xf32> to vector<64x1xf32>
    %66 = vector.broadcast %65 : vector<64x1xf32> to vector<64x64xf32>
    %67 = arith.subf %63, %66 : vector<64x64xf32>
    %68 = math.exp %67 : vector<64x64xf32>
    %cst_24 = arith.constant dense<0.000000e+00> : vector<64xf32>
    %69 = vector.multi_reduction <add>, %68, %cst_24 [1] : vector<64x64xf32> to vector<64xf32>
    %70 = vector.shape_cast %69 : vector<64xf32> to vector<64x1xf32>
    %71 = tpu.reciprocal %70 {approx = true} : vector<64x1xf32> -> vector<64x1xf32>
    %72 = vector.broadcast %71 : vector<64x1xf32> to vector<64x64xf32>
    %73 = arith.mulf %68, %72 : vector<64x64xf32>
    %74 = arith.truncf %73 : vector<64x64xf32> to vector<64x64xbf16>
    %cst_25 = arith.constant dense<0.000000e+00> : vector<64x8xf32>
    %75 = tpu.matmul %74, %62, %cst_25 {dimension_numbers = #tpu.dot_dimension_numbers<[1], [0], [0], [1], [0, 0, 1, 1], [], []>} : vector<64x64xbf16>, vector<64x8xbf16>, vector<64x8xf32> -> vector<64x8xf32>
    %c0_26 = arith.constant 0 : index
    %c24 = arith.constant 24 : index
    %76 = vector.load %arg15[%c0_26, %c24] : memref<64x64xf32, #tpu.memory_space<vmem>>, vector<64x8xf32>
    tpu.vector_store %arg15[%c0_26, %c24], %75 {strides = array<i32>} : memref<64x64xf32, #tpu.memory_space<vmem>>, vector<64x8xf32>,
    %77 = vector.extract_strided_slice %8 {offsets = [0, 32], sizes = [64, 8], strides = [1, 1]} : vector<64x192xbf16> to vector<64x8xbf16>
    %78 = vector.extract_strided_slice %8 {offsets = [0, 96], sizes = [64, 8], strides = [1, 1]} : vector<64x192xbf16> to vector<64x8xbf16>
    %79 = vector.extract_strided_slice %8 {offsets = [0, 160], sizes = [64, 8], strides = [1, 1]} : vector<64x192xbf16> to vector<64x8xbf16>
    %cst_27 = arith.constant dense<0.000000e+00> : vector<64x64xf32>
    %80 = tpu.matmul %77, %78, %cst_27 {dimension_numbers = #tpu.dot_dimension_numbers<[1], [1], [0], [0], [0, 0, 1, 0], [], []>} : vector<64x8xbf16>, vector<64x8xbf16>, vector<64x64xf32> -> vector<64x64xf32>
    %cst_28 = arith.constant dense<0xFF800000> : vector<64xf32>
    %81 = vector.multi_reduction <maximumf>, %80, %cst_28 [1] : vector<64x64xf32> to vector<64xf32>
    %82 = vector.shape_cast %81 : vector<64xf32> to vector<64x1xf32>
    %83 = vector.broadcast %82 : vector<64x1xf32> to vector<64x64xf32>
    %84 = arith.subf %80, %83 : vector<64x64xf32>
    %85 = math.exp %84 : vector<64x64xf32>
    %cst_29 = arith.constant dense<0.000000e+00> : vector<64xf32>
    %86 = vector.multi_reduction <add>, %85, %cst_29 [1] : vector<64x64xf32> to vector<64xf32>
    %87 = vector.shape_cast %86 : vector<64xf32> to vector<64x1xf32>
    %88 = tpu.reciprocal %87 {approx = true} : vector<64x1xf32> -> vector<64x1xf32>
    %89 = vector.broadcast %88 : vector<64x1xf32> to vector<64x64xf32>
    %90 = arith.mulf %85, %89 : vector<64x64xf32>
    %91 = arith.truncf %90 : vector<64x64xf32> to vector<64x64xbf16>
    %cst_30 = arith.constant dense<0.000000e+00> : vector<64x8xf32>
    %92 = tpu.matmul %91, %79, %cst_30 {dimension_numbers = #tpu.dot_dimension_numbers<[1], [0], [0], [1], [0, 0, 1, 1], [], []>} : vector<64x64xbf16>, vector<64x8xbf16>, vector<64x8xf32> -> vector<64x8xf32>
    %c0_31 = arith.constant 0 : index
    %c32 = arith.constant 32 : index
    %93 = vector.load %arg15[%c0_31, %c32] : memref<64x64xf32, #tpu.memory_space<vmem>>, vector<64x8xf32>
    tpu.vector_store %arg15[%c0_31, %c32], %92 {strides = array<i32>} : memref<64x64xf32, #tpu.memory_space<vmem>>, vector<64x8xf32>,
    %94 = vector.extract_strided_slice %8 {offsets = [0, 40], sizes = [64, 8], strides = [1, 1]} : vector<64x192xbf16> to vector<64x8xbf16>
    %95 = vector.extract_strided_slice %8 {offsets = [0, 104], sizes = [64, 8], strides = [1, 1]} : vector<64x192xbf16> to vector<64x8xbf16>
    %96 = vector.extract_strided_slice %8 {offsets = [0, 168], sizes = [64, 8], strides = [1, 1]} : vector<64x192xbf16> to vector<64x8xbf16>
    %cst_32 = arith.constant dense<0.000000e+00> : vector<64x64xf32>
    %97 = tpu.matmul %94, %95, %cst_32 {dimension_numbers = #tpu.dot_dimension_numbers<[1], [1], [0], [0], [0, 0, 1, 0], [], []>} : vector<64x8xbf16>, vector<64x8xbf16>, vector<64x64xf32> -> vector<64x64xf32>
    %cst_33 = arith.constant dense<0xFF800000> : vector<64xf32>
    %98 = vector.multi_reduction <maximumf>, %97, %cst_33 [1] : vector<64x64xf32> to vector<64xf32>
    %99 = vector.shape_cast %98 : vector<64xf32> to vector<64x1xf32>
    %100 = vector.broadcast %99 : vector<64x1xf32> to vector<64x64xf32>
    %101 = arith.subf %97, %100 : vector<64x64xf32>
    %102 = math.exp %101 : vector<64x64xf32>
    %cst_34 = arith.constant dense<0.000000e+00> : vector<64xf32>
    %103 = vector.multi_reduction <add>, %102, %cst_34 [1] : vector<64x64xf32> to vector<64xf32>
    %104 = vector.shape_cast %103 : vector<64xf32> to vector<64x1xf32>
    %105 = tpu.reciprocal %104 {approx = true} : vector<64x1xf32> -> vector<64x1xf32>
    %106 = vector.broadcast %105 : vector<64x1xf32> to vector<64x64xf32>
    %107 = arith.mulf %102, %106 : vector<64x64xf32>
    %108 = arith.truncf %107 : vector<64x64xf32> to vector<64x64xbf16>
    %cst_35 = arith.constant dense<0.000000e+00> : vector<64x8xf32>
    %109 = tpu.matmul %108, %96, %cst_35 {dimension_numbers = #tpu.dot_dimension_numbers<[1], [0], [0], [1], [0, 0, 1, 1], [], []>} : vector<64x64xbf16>, vector<64x8xbf16>, vector<64x8xf32> -> vector<64x8xf32>
    %c0_36 = arith.constant 0 : index
    %c40 = arith.constant 40 : index
    %110 = vector.load %arg15[%c0_36, %c40] : memref<64x64xf32, #tpu.memory_space<vmem>>, vector<64x8xf32>
    tpu.vector_store %arg15[%c0_36, %c40], %109 {strides = array<i32>} : memref<64x64xf32, #tpu.memory_space<vmem>>, vector<64x8xf32>,
    %111 = vector.extract_strided_slice %8 {offsets = [0, 48], sizes = [64, 8], strides = [1, 1]} : vector<64x192xbf16> to vector<64x8xbf16>
    %112 = vector.extract_strided_slice %8 {offsets = [0, 112], sizes = [64, 8], strides = [1, 1]} : vector<64x192xbf16> to vector<64x8xbf16>
    %113 = vector.extract_strided_slice %8 {offsets = [0, 176], sizes = [64, 8], strides = [1, 1]} : vector<64x192xbf16> to vector<64x8xbf16>
    %cst_37 = arith.constant dense<0.000000e+00> : vector<64x64xf32>
    %114 = tpu.matmul %111, %112, %cst_37 {dimension_numbers = #tpu.dot_dimension_numbers<[1], [1], [0], [0], [0, 0, 1, 0], [], []>} : vector<64x8xbf16>, vector<64x8xbf16>, vector<64x64xf32> -> vector<64x64xf32>
    %cst_38 = arith.constant dense<0xFF800000> : vector<64xf32>
    %115 = vector.multi_reduction <maximumf>, %114, %cst_38 [1] : vector<64x64xf32> to vector<64xf32>
    %116 = vector.shape_cast %115 : vector<64xf32> to vector<64x1xf32>
    %117 = vector.broadcast %116 : vector<64x1xf32> to vector<64x64xf32>
    %118 = arith.subf %114, %117 : vector<64x64xf32>
    %119 = math.exp %118 : vector<64x64xf32>
    %cst_39 = arith.constant dense<0.000000e+00> : vector<64xf32>
    %120 = vector.multi_reduction <add>, %119, %cst_39 [1] : vector<64x64xf32> to vector<64xf32>
    %121 = vector.shape_cast %120 : vector<64xf32> to vector<64x1xf32>
    %122 = tpu.reciprocal %121 {approx = true} : vector<64x1xf32> -> vector<64x1xf32>
    %123 = vector.broadcast %122 : vector<64x1xf32> to vector<64x64xf32>
    %124 = arith.mulf %119, %123 : vector<64x64xf32>
    %125 = arith.truncf %124 : vector<64x64xf32> to vector<64x64xbf16>
    %cst_40 = arith.constant dense<0.000000e+00> : vector<64x8xf32>
    %126 = tpu.matmul %125, %113, %cst_40 {dimension_numbers = #tpu.dot_dimension_numbers<[1], [0], [0], [1], [0, 0, 1, 1], [], []>} : vector<64x64xbf16>, vector<64x8xbf16>, vector<64x8xf32> -> vector<64x8xf32>
    %c0_41 = arith.constant 0 : index
    %c48 = arith.constant 48 : index
    %127 = vector.load %arg15[%c0_41, %c48] : memref<64x64xf32, #tpu.memory_space<vmem>>, vector<64x8xf32>
    tpu.vector_store %arg15[%c0_41, %c48], %126 {strides = array<i32>} : memref<64x64xf32, #tpu.memory_space<vmem>>, vector<64x8xf32>,
    %128 = vector.extract_strided_slice %8 {offsets = [0, 56], sizes = [64, 8], strides = [1, 1]} : vector<64x192xbf16> to vector<64x8xbf16>
    %129 = vector.extract_strided_slice %8 {offsets = [0, 120], sizes = [64, 8], strides = [1, 1]} : vector<64x192xbf16> to vector<64x8xbf16>
    %130 = vector.extract_strided_slice %8 {offsets = [0, 184], sizes = [64, 8], strides = [1, 1]} : vector<64x192xbf16> to vector<64x8xbf16>
    %cst_42 = arith.constant dense<0.000000e+00> : vector<64x64xf32>
    %131 = tpu.matmul %128, %129, %cst_42 {dimension_numbers = #tpu.dot_dimension_numbers<[1], [1], [0], [0], [0, 0, 1, 0], [], []>} : vector<64x8xbf16>, vector<64x8xbf16>, vector<64x64xf32> -> vector<64x64xf32>
    %cst_43 = arith.constant dense<0xFF800000> : vector<64xf32>
    %132 = vector.multi_reduction <maximumf>, %131, %cst_43 [1] : vector<64x64xf32> to vector<64xf32>
    %133 = vector.shape_cast %132 : vector<64xf32> to vector<64x1xf32>
    %134 = vector.broadcast %133 : vector<64x1xf32> to vector<64x64xf32>
    %135 = arith.subf %131, %134 : vector<64x64xf32>
    %136 = math.exp %135 : vector<64x64xf32>
    %cst_44 = arith.constant dense<0.000000e+00> : vector<64xf32>
    %137 = vector.multi_reduction <add>, %136, %cst_44 [1] : vector<64x64xf32> to vector<64xf32>
    %138 = vector.shape_cast %137 : vector<64xf32> to vector<64x1xf32>
    %139 = tpu.reciprocal %138 {approx = true} : vector<64x1xf32> -> vector<64x1xf32>
    %140 = vector.broadcast %139 : vector<64x1xf32> to vector<64x64xf32>
    %141 = arith.mulf %136, %140 : vector<64x64xf32>
    %142 = arith.truncf %141 : vector<64x64xf32> to vector<64x64xbf16>
    %cst_45 = arith.constant dense<0.000000e+00> : vector<64x8xf32>
    %143 = tpu.matmul %142, %130, %cst_45 {dimension_numbers = #tpu.dot_dimension_numbers<[1], [0], [0], [1], [0, 0, 1, 1], [], []>} : vector<64x64xbf16>, vector<64x8xbf16>, vector<64x8xf32> -> vector<64x8xf32>
    %c0_46 = arith.constant 0 : index
    %c56 = arith.constant 56 : index
    %144 = vector.load %arg15[%c0_46, %c56] : memref<64x64xf32, #tpu.memory_space<vmem>>, vector<64x8xf32>
    tpu.vector_store %arg15[%c0_46, %c56], %143 {strides = array<i32>} : memref<64x64xf32, #tpu.memory_space<vmem>>, vector<64x8xf32>,
    %c0_47 = arith.constant 0 : index
    %c0_48 = arith.constant 0 : index
    %145 = vector.load %arg15[%c0_47, %c0_48] : memref<64x64xf32, #tpu.memory_space<vmem>>, vector<64x64xf32>
    %146 = arith.truncf %145 : vector<64x64xf32> to vector<64x64xbf16>
    %c0_49 = arith.constant 0 : index
    %c0_50 = arith.constant 0 : index
    %147 = vector.load %arg4[%c0_49, %c0_50] : memref<64x64xbf16, #tpu.memory_space<vmem>>, vector<64x64xbf16>
    %cst_51 = arith.constant dense<0.000000e+00> : vector<64x64xf32>
    %148 = tpu.matmul %146, %147, %cst_51 {dimension_numbers = #tpu.dot_dimension_numbers<[1], [0], [0], [1], [0, 0, 1, 1], [], []>} : vector<64x64xbf16>, vector<64x64xbf16>, vector<64x64xf32> -> vector<64x64xf32>
    %c0_52 = arith.constant 0 : index
    %c0_53 = arith.constant 0 : index
    %149 = vector.load %arg5[%c0_52, %c0_53] : memref<1x64xf32, #tpu.memory_space<vmem>>, vector<1x64xf32>
    %150 = vector.broadcast %149 : vector<1x64xf32> to vector<64x64xf32>
    %151 = arith.addf %148, %150 : vector<64x64xf32>
    %152 = arith.addf %1, %151 : vector<64x64xf32>
    %c0_54 = arith.constant 0 : index
    %c0_55 = arith.constant 0 : index
    %153 = vector.load %arg6[%c0_54, %c0_55] : memref<1x64xf32, #tpu.memory_space<vmem>>, vector<1x64xf32>
    %c0_56 = arith.constant 0 : index
    %c0_57 = arith.constant 0 : index
    %154 = vector.load %arg7[%c0_56, %c0_57] : memref<1x64xf32, #tpu.memory_space<vmem>>, vector<1x64xf32>
    %cst_58 = arith.constant dense<0.000000e+00> : vector<64xf32>
    %155 = vector.multi_reduction <add>, %152, %cst_58 [1] : vector<64x64xf32> to vector<64xf32>
    %156 = vector.shape_cast %155 : vector<64xf32> to vector<64x1xf32>
    %cst_59 = arith.constant 6.400000e+01 : f32
    %157 = vector.broadcast %cst_59 : f32 to vector<64x1xf32>
    %158 = arith.divf %156, %157 : vector<64x1xf32>
    %159 = vector.broadcast %158 : vector<64x1xf32> to vector<64x64xf32>
    %160 = arith.subf %152, %159 : vector<64x64xf32>
    %161 = arith.mulf %160, %160 : vector<64x64xf32>
    %cst_60 = arith.constant dense<0.000000e+00> : vector<64xf32>
    %162 = vector.multi_reduction <add>, %161, %cst_60 [1] : vector<64x64xf32> to vector<64xf32>
    %163 = vector.shape_cast %162 : vector<64xf32> to vector<64x1xf32>
    %cst_61 = arith.constant 6.400000e+01 : f32
    %164 = vector.broadcast %cst_61 : f32 to vector<64x1xf32>
    %165 = arith.divf %163, %164 : vector<64x1xf32>
    %166 = vector.broadcast %158 : vector<64x1xf32> to vector<64x64xf32>
    %167 = arith.subf %152, %166 : vector<64x64xf32>
    %cst_62 = arith.constant 9.99999974E-6 : f32
    %168 = vector.broadcast %cst_62 : f32 to vector<64x1xf32>
    %169 = arith.addf %165, %168 : vector<64x1xf32>
    %170 = math.rsqrt %169 : vector<64x1xf32>
    %171 = vector.broadcast %170 : vector<64x1xf32> to vector<64x64xf32>
    %172 = arith.mulf %167, %171 : vector<64x64xf32>
    %173 = vector.broadcast %153 : vector<1x64xf32> to vector<64x64xf32>
    %174 = arith.mulf %172, %173 : vector<64x64xf32>
    %175 = vector.broadcast %154 : vector<1x64xf32> to vector<64x64xf32>
    %176 = arith.addf %174, %175 : vector<64x64xf32>
    %177 = arith.truncf %176 : vector<64x64xf32> to vector<64x64xbf16>
    %c0_63 = arith.constant 0 : index
    %c0_64 = arith.constant 0 : index
    %178 = vector.load %arg8[%c0_63, %c0_64] : memref<64x256xbf16, #tpu.memory_space<vmem>>, vector<64x256xbf16>
    %cst_65 = arith.constant dense<0.000000e+00> : vector<64x256xf32>
    %179 = tpu.matmul %177, %178, %cst_65 {dimension_numbers = #tpu.dot_dimension_numbers<[1], [0], [0], [1], [0, 0, 1, 1], [], []>} : vector<64x64xbf16>, vector<64x256xbf16>, vector<64x256xf32> -> vector<64x256xf32>
    %c0_66 = arith.constant 0 : index
    %c0_67 = arith.constant 0 : index
    %180 = vector.load %arg9[%c0_66, %c0_67] : memref<1x256xf32, #tpu.memory_space<vmem>>, vector<1x256xf32>
    %181 = vector.broadcast %180 : vector<1x256xf32> to vector<64x256xf32>
    %182 = arith.addf %179, %181 : vector<64x256xf32>
    %cst_68 = arith.constant 5.000000e-01 : f32
    %183 = vector.broadcast %cst_68 : f32 to vector<64x256xf32>
    %184 = arith.mulf %183, %182 : vector<64x256xf32>
    %cst_69 = arith.constant 0.707106769 : f32
    %185 = vector.broadcast %cst_69 : f32 to vector<64x256xf32>
    %186 = arith.mulf %182, %185 : vector<64x256xf32>
    %187 = math.absf %186 : vector<64x256xf32>
    %cst_70 = arith.constant 0.327591091 : f32
    %188 = vector.broadcast %cst_70 : f32 to vector<64x256xf32>
    %189 = arith.mulf %188, %187 : vector<64x256xf32>
    %cst_71 = arith.constant 1.000000e+00 : f32
    %190 = vector.broadcast %cst_71 : f32 to vector<64x256xf32>
    %191 = arith.addf %190, %189 : vector<64x256xf32>
    %cst_72 = arith.constant 1.000000e+00 : f32
    %192 = vector.broadcast %cst_72 : f32 to vector<64x256xf32>
    %193 = arith.divf %192, %191 : vector<64x256xf32>
    %cst_73 = arith.constant 1.06140542 : f32
    %194 = vector.broadcast %cst_73 : f32 to vector<64x256xf32>
    %195 = arith.mulf %194, %193 : vector<64x256xf32>
    %cst_74 = arith.constant -1.45315206 : f32
    %196 = vector.broadcast %cst_74 : f32 to vector<64x256xf32>
    %197 = arith.addf %195, %196 : vector<64x256xf32>
    %198 = arith.mulf %197, %193 : vector<64x256xf32>
    %cst_75 = arith.constant 1.42141378 : f32
    %199 = vector.broadcast %cst_75 : f32 to vector<64x256xf32>
    %200 = arith.addf %198, %199 : vector<64x256xf32>
    %201 = arith.mulf %200, %193 : vector<64x256xf32>
    %cst_76 = arith.constant -0.284496725 : f32
    %202 = vector.broadcast %cst_76 : f32 to vector<64x256xf32>
    %203 = arith.addf %201, %202 : vector<64x256xf32>
    %204 = arith.mulf %203, %193 : vector<64x256xf32>
    %cst_77 = arith.constant 0.254829586 : f32
    %205 = vector.broadcast %cst_77 : f32 to vector<64x256xf32>
    %206 = arith.addf %204, %205 : vector<64x256xf32>
    %207 = arith.mulf %206, %193 : vector<64x256xf32>
    %cst_78 = arith.constant 0.000000e+00 : f32
    %208 = vector.broadcast %cst_78 : f32 to vector<64x256xf32>
    %209 = arith.subf %208, %187 : vector<64x256xf32>
    %210 = arith.mulf %209, %187 : vector<64x256xf32>
    %211 = math.exp %210 : vector<64x256xf32>
    %212 = arith.mulf %207, %211 : vector<64x256xf32>
    %cst_79 = arith.constant 1.000000e+00 : f32
    %213 = vector.broadcast %cst_79 : f32 to vector<64x256xf32>
    %214 = arith.subf %213, %212 : vector<64x256xf32>
    %cst_80 = arith.constant 0.000000e+00 : f32
    %215 = vector.broadcast %cst_80 : f32 to vector<64x256xf32>
    %216 = arith.cmpf oge, %186, %215 : vector<64x256xf32>
    %cst_81 = arith.constant 0.000000e+00 : f32
    %217 = vector.broadcast %cst_81 : f32 to vector<64x256xf32>
    %218 = arith.subf %217, %214 : vector<64x256xf32>
    %219 = arith.select %216, %214, %218 : vector<64x256xi1>, vector<64x256xf32>
    %cst_82 = arith.constant 1.000000e+00 : f32
    %220 = vector.broadcast %cst_82 : f32 to vector<64x256xf32>
    %221 = arith.addf %220, %219 : vector<64x256xf32>
    %222 = arith.mulf %184, %221 : vector<64x256xf32>
    %223 = arith.truncf %222 : vector<64x256xf32> to vector<64x256xbf16>
    %c0_83 = arith.constant 0 : index
    %c0_84 = arith.constant 0 : index
    %224 = vector.load %arg10[%c0_83, %c0_84] : memref<256x64xbf16, #tpu.memory_space<vmem>>, vector<256x64xbf16>
    %cst_85 = arith.constant dense<0.000000e+00> : vector<64x64xf32>
    %225 = tpu.matmul %223, %224, %cst_85 {dimension_numbers = #tpu.dot_dimension_numbers<[1], [0], [0], [1], [0, 0, 1, 1], [], []>} : vector<64x256xbf16>, vector<256x64xbf16>, vector<64x64xf32> -> vector<64x64xf32>
    %c0_86 = arith.constant 0 : index
    %c0_87 = arith.constant 0 : index
    %226 = vector.load %arg11[%c0_86, %c0_87] : memref<1x64xf32, #tpu.memory_space<vmem>>, vector<1x64xf32>
    %227 = vector.broadcast %226 : vector<1x64xf32> to vector<64x64xf32>
    %228 = arith.addf %225, %227 : vector<64x64xf32>
    %229 = arith.addf %176, %228 : vector<64x64xf32>
    %c0_88 = arith.constant 0 : index
    %c0_89 = arith.constant 0 : index
    %230 = vector.load %arg12[%c0_88, %c0_89] : memref<1x64xf32, #tpu.memory_space<vmem>>, vector<1x64xf32>
    %c0_90 = arith.constant 0 : index
    %c0_91 = arith.constant 0 : index
    %231 = vector.load %arg13[%c0_90, %c0_91] : memref<1x64xf32, #tpu.memory_space<vmem>>, vector<1x64xf32>
    %cst_92 = arith.constant dense<0.000000e+00> : vector<64xf32>
    %232 = vector.multi_reduction <add>, %229, %cst_92 [1] : vector<64x64xf32> to vector<64xf32>
    %233 = vector.shape_cast %232 : vector<64xf32> to vector<64x1xf32>
    %cst_93 = arith.constant 6.400000e+01 : f32
    %234 = vector.broadcast %cst_93 : f32 to vector<64x1xf32>
    %235 = arith.divf %233, %234 : vector<64x1xf32>
    %236 = vector.broadcast %235 : vector<64x1xf32> to vector<64x64xf32>
    %237 = arith.subf %229, %236 : vector<64x64xf32>
    %238 = arith.mulf %237, %237 : vector<64x64xf32>
    %cst_94 = arith.constant dense<0.000000e+00> : vector<64xf32>
    %239 = vector.multi_reduction <add>, %238, %cst_94 [1] : vector<64x64xf32> to vector<64xf32>
    %240 = vector.shape_cast %239 : vector<64xf32> to vector<64x1xf32>
    %cst_95 = arith.constant 6.400000e+01 : f32
    %241 = vector.broadcast %cst_95 : f32 to vector<64x1xf32>
    %242 = arith.divf %240, %241 : vector<64x1xf32>
    %243 = vector.broadcast %235 : vector<64x1xf32> to vector<64x64xf32>
    %244 = arith.subf %229, %243 : vector<64x64xf32>
    %cst_96 = arith.constant 9.99999974E-6 : f32
    %245 = vector.broadcast %cst_96 : f32 to vector<64x1xf32>
    %246 = arith.addf %242, %245 : vector<64x1xf32>
    %247 = math.rsqrt %246 : vector<64x1xf32>
    %248 = vector.broadcast %247 : vector<64x1xf32> to vector<64x64xf32>
    %249 = arith.mulf %244, %248 : vector<64x64xf32>
    %250 = vector.broadcast %230 : vector<1x64xf32> to vector<64x64xf32>
    %251 = arith.mulf %249, %250 : vector<64x64xf32>
    %252 = vector.broadcast %231 : vector<1x64xf32> to vector<64x64xf32>
    %253 = arith.addf %251, %252 : vector<64x64xf32>
    %254 = vector.shape_cast %253 : vector<64x64xf32> to vector<1x64x64xf32>
    %c0_97 = arith.constant 0 : index
    %c0_98 = arith.constant 0 : index
    %c0_99 = arith.constant 0 : index
    %255 = vector.load %arg14[%c0_97, %c0_98, %c0_99] : memref<1x64x64xf32, #tpu.memory_space<vmem>>, vector<1x64x64xf32>
    tpu.vector_store %arg14[%c0_97, %c0_98, %c0_99], %254 {strides = array<i32>} : memref<1x64x64xf32, #tpu.memory_space<vmem>>, vector<1x64x64xf32>,
    return
  }
  func.func @transform_0(%arg0: i32) -> (i32, i32, i32) {
    %c0_i32 = arith.constant 0 : i32
    %c0_i32_0 = arith.constant 0 : i32
    %c0_i32_1 = arith.constant 0 : i32
    return %arg0, %c0_i32, %c0_i32_0 : i32, i32, i32
  }
  func.func @transform_1(%arg0: i32) -> (i32, i32) {
    %c0_i32 = arith.constant 0 : i32
    %c0_i32_0 = arith.constant 0 : i32
    %c0_i32_1 = arith.constant 0 : i32
    return %c0_i32, %c0_i32_0 : i32, i32
  }
  func.func @transform_2(%arg0: i32) -> (i32, i32) {
    %c0_i32 = arith.constant 0 : i32
    %c0_i32_0 = arith.constant 0 : i32
    %c0_i32_1 = arith.constant 0 : i32
    return %c0_i32, %c0_i32_0 : i32, i32
  }
  func.func @transform_3(%arg0: i32) -> (i32, i32) {
    %c0_i32 = arith.constant 0 : i32
    %c0_i32_0 = arith.constant 0 : i32
    %c0_i32_1 = arith.constant 0 : i32
    return %c0_i32, %c0_i32_0 : i32, i32
  }
  func.func @transform_4(%arg0: i32) -> (i32, i32) {
    %c0_i32 = arith.constant 0 : i32
    %c0_i32_0 = arith.constant 0 : i32
    %c0_i32_1 = arith.constant 0 : i32
    return %c0_i32, %c0_i32_0 : i32, i32
  }
  func.func @transform_5(%arg0: i32) -> (i32, i32) {
    %c0_i32 = arith.constant 0 : i32
    %c0_i32_0 = arith.constant 0 : i32
    %c0_i32_1 = arith.constant 0 : i32
    return %c0_i32, %c0_i32_0 : i32, i32
  }
  func.func @transform_6(%arg0: i32) -> (i32, i32) {
    %c0_i32 = arith.constant 0 : i32
    %c0_i32_0 = arith.constant 0 : i32
    %c0_i32_1 = arith.constant 0 : i32
    return %c0_i32, %c0_i32_0 : i32, i32
  }
  func.func @transform_7(%arg0: i32) -> (i32, i32) {
    %c0_i32 = arith.constant 0 : i32
    %c0_i32_0 = arith.constant 0 : i32
    %c0_i32_1 = arith.constant 0 : i32
    return %c0_i32, %c0_i32_0 : i32, i32
  }
  func.func @transform_8(%arg0: i32) -> (i32, i32) {
    %c0_i32 = arith.constant 0 : i32
    %c0_i32_0 = arith.constant 0 : i32
    %c0_i32_1 = arith.constant 0 : i32
    return %c0_i32, %c0_i32_0 : i32, i32
  }
  func.func @transform_9(%arg0: i32) -> (i32, i32) {
    %c0_i32 = arith.constant 0 : i32
    %c0_i32_0 = arith.constant 0 : i32
    %c0_i32_1 = arith.constant 0 : i32
    return %c0_i32, %c0_i32_0 : i32, i32
  }
  func.func @transform_10(%arg0: i32) -> (i32, i32) {
    %c0_i32 = arith.constant 0 : i32
    %c0_i32_0 = arith.constant 0 : i32
    %c0_i32_1 = arith.constant 0 : i32
    return %c0_i32, %c0_i32_0 : i32, i32
  }
  func.func @transform_11(%arg0: i32) -> (i32, i32) {
    %c0_i32 = arith.constant 0 : i32
    %c0_i32_0 = arith.constant 0 : i32
    %c0_i32_1 = arith.constant 0 : i32
    return %c0_i32, %c0_i32_0 : i32, i32
  }
  func.func @transform_12(%arg0: i32) -> (i32, i32) {
    %c0_i32 = arith.constant 0 : i32
    %c0_i32_0 = arith.constant 0 : i32
    %c0_i32_1 = arith.constant 0 : i32
    return %c0_i32, %c0_i32_0 : i32, i32
  }
  func.func @transform_13(%arg0: i32) -> (i32, i32, i32) {
    %c0_i32 = arith.constant 0 : i32
    %c0_i32_0 = arith.constant 0 : i32
    %c0_i32_1 = arith.constant 0 : i32
    return %arg0, %c0_i32, %c0_i32_0 : i32, i32, i32
  }
}

</mosaic_0001>

<llo_original>
// kernel: tpu_custom_call.1
$region0: #{tpu_custom_call.1}
  #allocation0 [shape = 'u32[]', space=smem, size = 0x4, offset = 0x4, fixed_abs, tag = 'smem constant byte address 0x4 - core index']
  #allocation1 [shape = 'u32[144,128]{1,0:T(1,128)}', space=vmem, size = 0x12000, scoped, tag = 'internal scratch']
  #allocation2 [shape = 'f32[64,64]{1,0:T(8,128)}', space=vmem, size = 0x8000, scoped, tag = 'scratch operand']
  %s0 = inlined_call_operand.vmem [shape: f32[2,64,64], index: 0, kind: input, shape index: {}]
  %s1 = inlined_call_operand.vmem [shape: bf16[64,192], index: 1, kind: input, shape index: {}]
  %s2 = inlined_call_operand.vmem [shape: f32[1,192], index: 2, kind: input, shape index: {}]
  %s3 = inlined_call_operand.hbm [shape: bf16[64,64], index: 3, kind: input, shape index: {}]
  %s4 = inlined_call_operand.vmem [shape: f32[1,64], index: 4, kind: input, shape index: {}]
  %s5 = inlined_call_operand.vmem [shape: f32[1,64], index: 5, kind: input, shape index: {}]
  %s6 = inlined_call_operand.vmem [shape: f32[1,64], index: 6, kind: input, shape index: {}]
  %s7 = inlined_call_operand.hbm [shape: bf16[64,256], index: 7, kind: input, shape index: {}]
  %s8 = inlined_call_operand.vmem [shape: f32[1,256], index: 8, kind: input, shape index: {}]
  %s9 = inlined_call_operand.vmem [shape: bf16[256,64], index: 9, kind: input, shape index: {}]
  %s10 = inlined_call_operand.vmem [shape: f32[1,64], index: 10, kind: input, shape index: {}]
  %s11 = inlined_call_operand.vmem [shape: f32[1,64], index: 11, kind: input, shape index: {}]
  %s12 = inlined_call_operand.vmem [shape: f32[1,64], index: 12, kind: input, shape index: {}]
  %s13 = inlined_call_operand.hbm [shape: f32[2,64,64], index: 13, kind: output, shape index: {}]
  %s14 = sld [smem:[#allocation0]]
  $region93: #{tpu_custom_call.1} parent=0
    _
  %s16 = ssub.s32 1, %s14
  %s17 = scalar_select 0, %s16, %s14
  $region1: #{tpu_custom_call.1} parent=0
    #allocation3 [shape = 'u8[16384]{0}', space=vmem, size = 0x4000, scoped, tag = 'input window, operand 3, single buffered']
    #allocation4 [shape = 's32[2]{0}', space=sflag, size = 0x8, scoped, tag = 'scoped memory for tpu_custom_call.1']
    #allocation5 [shape = 's32[2]{0}', space=sflag, size = 0x8, scoped, tag = 'scoped memory for tpu_custom_call.1']
    #allocation6 [shape = 'u8[32768]{0}', space=vmem, size = 0x8000, scoped, tag = 'input window, operand 7, single buffered']
    #allocation7 [shape = 's32[1]{0}', space=sflag, size = 0x4, scoped, tag = 'scoped memory for tpu_custom_call.1']
    #allocation8 [shape = 'u8[65536]{0}', space=vmem, size = 0x10000, scoped, tag = 'output window, operand 0']
    %18 = vsyncpa [#allocation4], 0
    %19 = vsyncpa [#allocation7], 0
    %20 = vsyncpa [#allocation5], 0
    %s21 = scalar_lea.sflag [#allocation5], 1
    %22 = vsyncpa %s21, 0
    loop: start=0, step=1, limit=4
    $region2: #{tpu_custom_call.1} parent=1 // loop_pre_header
      _
    $region3: #{tpu_custom_call.1} parent=1 // loop_header
      %s24 = sphi 0, %s28
      %p25 = scmp.ge.s32.totalorder %s24, 4
      %s34 = sphi 0, %s36
      %s37 = sphi 0, %s34
      %s38 = sphi 0, %s37
      %s54 = sphi 0, %s38
      %s58 = sphi 0, %s58
      %s60 = sphi 0, %s58
      %s61 = sphi 0, %s60
      %s75 = sphi 0, %s61
      %s79 = sphi 0, %s79
      %s81 = sphi 0, %s79
      %s82 = sphi 0, %s81
      %s96 = sphi 0, %s82
      %s100 = sphi 0, %s100
      %s102 = sphi 0, %s100
      %s103 = sphi 0, %s102
      %s117 = sphi 0, %s103
      %s121 = sphi 0, %s121
      %s123 = sphi 0, %s121
      %s124 = sphi 0, %s123
      %s138 = sphi 0, %s124
      %s142 = sphi 0, %s142
      %s144 = sphi 0, %s142
      %s145 = sphi 0, %s144
      %s159 = sphi 0, %s145
      %s163 = sphi 0, %s163
      %s165 = sphi 0, %s163
      %s166 = sphi 0, %s165
      %s180 = sphi 0, %s166
      %s184 = sphi 0, %s184
      %s186 = sphi 0, %s184
      %s187 = sphi 0, %s186
      %s201 = sphi 0, %s187
      %s205 = sphi 0, %s205
      %s207 = sphi 0, %s205
      %s208 = sphi 0, %s207
      %s222 = sphi 0, %s208
      %s226 = sphi 0, %s226
      %s228 = sphi 0, %s226
      %s229 = sphi 0, %s228
      %s243 = sphi 0, %s229
      %s247 = sphi 0, %s247
      %s249 = sphi 0, %s247
      %s250 = sphi 0, %s249
      %s264 = sphi 0, %s250
      %s268 = sphi 0, %s268
      %s270 = sphi 0, %s268
      %s271 = sphi 0, %s270
      %s285 = sphi 0, %s271
      %s289 = sphi 0, %s289
      %s291 = sphi 0, %s289
      %s292 = sphi 0, %s291
      %s306 = sphi 0, %s292
      %s312 = sphi 0, %s314
      %s315 = sphi 0, %s312
      %s316 = sphi 0, %s315
      %s332 = sphi 0, %s316
    $region4: #{tpu_custom_call.1} parent=1 // loop_header_branch
      %27 = sbr.rel (%p25) target = $region8
    $region5: #{tpu_custom_call.1} parent=1 // loop_body
      %s29 = ssub.s32 %s24, 1
      %s30 = ssub.s32 %s24, 2
      %s31 = sadd.s32 %s24, 1
      %s32 = ssub.s32 %s24, %s31
      %p33 = scmp.eq.s32.totalorder %s32, 0
      %s35 = sadd.s32 %s34, 1
      %s36 = scalar_select %p33, %s34, %s35
      %p39 = pneg %p33
      %p40 = scmp.eq.s32.totalorder %s24, 1
      %p41 = por %p39, %p40
      %p42 = scmp.ne.s32.totalorder %s34, %s37
      %p43 = scmp.eq.s32.totalorder %s24, 0
      %p44 = por %p42, %p43
      %p45 = scmp.ne.s32.totalorder %s34, %s37
      %p46 = scmp.eq.s32.totalorder %s29, 1
      %p47 = por %p45, %p46
      %p48 = scmp.ne.s32.totalorder %s37, %s38
      %p49 = scmp.eq.s32.totalorder %s29, 0
      %p50 = por %p48, %p49
      %p51 = scmp.ne.s32.totalorder %s37, %s38
      %p52 = scmp.eq.s32.totalorder %s30, 1
      %p53 = por %p51, %p52
      %p55 = scmp.ne.s32.totalorder %s38, %s54
      %p56 = scmp.eq.s32.totalorder %s30, 0
      %p57 = por %p55, %p56
      %s59 = sadd.s32 %s58, 1
      %p62 = scmp.eq.s32.totalorder %s24, 1
      %p63 = scmp.ne.s32.totalorder %s58, %s60
      %p64 = scmp.eq.s32.totalorder %s24, 0
      %p65 = por %p63, %p64
      %p66 = scmp.ne.s32.totalorder %s58, %s60
      %p67 = scmp.eq.s32.totalorder %s29, 1
      %p68 = por %p66, %p67
      %p69 = scmp.ne.s32.totalorder %s60, %s61
      %p70 = scmp.eq.s32.totalorder %s29, 0
      %p71 = por %p69, %p70
      %p72 = scmp.ne.s32.totalorder %s60, %s61
      %p73 = scmp.eq.s32.totalorder %s30, 1
      %p74 = por %p72, %p73
      %p76 = scmp.ne.s32.totalorder %s61, %s75
      %p77 = scmp.eq.s32.totalorder %s30, 0
      %p78 = por %p76, %p77
      %s80 = sadd.s32 %s79, 1
      %p83 = scmp.eq.s32.totalorder %s24, 1
      %p84 = scmp.ne.s32.totalorder %s79, %s81
      %p85 = scmp.eq.s32.totalorder %s24, 0
      %p86 = por %p84, %p85
      %p87 = scmp.ne.s32.totalorder %s79, %s81
      %p88 = scmp.eq.s32.totalorder %s29, 1
      %p89 = por %p87, %p88
      %p90 = scmp.ne.s32.totalorder %s81, %s82
      %p91 = scmp.eq.s32.totalorder %s29, 0
      %p92 = por %p90, %p91
      %p93 = scmp.ne.s32.totalorder %s81, %s82
      %p94 = scmp.eq.s32.totalorder %s30, 1
      %p95 = por %p93, %p94
      %p97 = scmp.ne.s32.totalorder %s82, %s96
      %p98 = scmp.eq.s32.totalorder %s30, 0
      %p99 = por %p97, %p98
      %s101 = sadd.s32 %s100, 1
      %p104 = scmp.eq.s32.totalorder %s24, 1
      %p105 = scmp.ne.s32.totalorder %s100, %s102
      %p106 = scmp.eq.s32.totalorder %s24, 0
      %p107 = por %p105, %p106
      %p108 = scmp.ne.s32.totalorder %s100, %s102
      %p109 = scmp.eq.s32.totalorder %s29, 1
      %p110 = por %p108, %p109
      %p111 = scmp.ne.s32.totalorder %s102, %s103
      %p112 = scmp.eq.s32.totalorder %s29, 0
      %p113 = por %p111, %p112
      %p114 = scmp.ne.s32.totalorder %s102, %s103
      %p115 = scmp.eq.s32.totalorder %s30, 1
      %p116 = por %p114, %p115
      %p118 = scmp.ne.s32.totalorder %s103, %s117
      %p119 = scmp.eq.s32.totalorder %s30, 0
      %p120 = por %p118, %p119
      %s122 = sadd.s32 %s121, 1
      %p125 = scmp.eq.s32.totalorder %s24, 1
      %p126 = scmp.ne.s32.totalorder %s121, %s123
      %p127 = scmp.eq.s32.totalorder %s24, 0
      %p128 = por %p126, %p127
      %p129 = scmp.ne.s32.totalorder %s121, %s123
      %p130 = scmp.eq.s32.totalorder %s29, 1
      %p131 = por %p129, %p130
      %p132 = scmp.ne.s32.totalorder %s123, %s124
      %p133 = scmp.eq.s32.totalorder %s29, 0
      %p134 = por %p132, %p133
      %p135 = scmp.ne.s32.totalorder %s123, %s124
      %p136 = scmp.eq.s32.totalorder %s30, 1
      %p137 = por %p135, %p136
      %p139 = scmp.ne.s32.totalorder %s124, %s138
      %p140 = scmp.eq.s32.totalorder %s30, 0
      %p141 = por %p139, %p140
      %s143 = sadd.s32 %s142, 1
      %p146 = scmp.eq.s32.totalorder %s24, 1
      %p147 = scmp.ne.s32.totalorder %s142, %s144
      %p148 = scmp.eq.s32.totalorder %s24, 0
      %p149 = por %p147, %p148
      %p150 = scmp.ne.s32.totalorder %s142, %s144
      %p151 = scmp.eq.s32.totalorder %s29, 1
      %p152 = por %p150, %p151
      %p153 = scmp.ne.s32.totalorder %s144, %s145
      %p154 = scmp.eq.s32.totalorder %s29, 0
      %p155 = por %p153, %p154
      %p156 = scmp.ne.s32.totalorder %s144, %s145
      %p157 = scmp.eq.s32.totalorder %s30, 1
      %p158 = por %p156, %p157
      %p160 = scmp.ne.s32.totalorder %s145, %s159
      %p161 = scmp.eq.s32.totalorder %s30, 0
      %p162 = por %p160, %p161
      %s164 = sadd.s32 %s163, 1
      %p167 = scmp.eq.s32.totalorder %s24, 1
      %p168 = scmp.ne.s32.totalorder %s163, %s165
      %p169 = scmp.eq.s32.totalorder %s24, 0
      %p170 = por %p168, %p169
      %p171 = scmp.ne.s32.totalorder %s163, %s165
      %p172 = scmp.eq.s32.totalorder %s29, 1
      %p173 = por %p171, %p172
      %p174 = scmp.ne.s32.totalorder %s165, %s166
      %p175 = scmp.eq.s32.totalorder %s29, 0
      %p176 = por %p174, %p175
      %p177 = scmp.ne.s32.totalorder %s165, %s166
      %p178 = scmp.eq.s32.totalorder %s30, 1
      %p179 = por %p177, %p178
      %p181 = scmp.ne.s32.totalorder %s166, %s180
      %p182 = scmp.eq.s32.totalorder %s30, 0
      %p183 = por %p181, %p182
      %s185 = sadd.s32 %s184, 1
      %p188 = scmp.eq.s32.totalorder %s24, 1
      %p189 = scmp.ne.s32.totalorder %s184, %s186
      %p190 = scmp.eq.s32.totalorder %s24, 0
      %p191 = por %p189, %p190
      %p192 = scmp.ne.s32.totalorder %s184, %s186
      %p193 = scmp.eq.s32.totalorder %s29, 1
      %p194 = por %p192, %p193
      %p195 = scmp.ne.s32.totalorder %s186, %s187
      %p196 = scmp.eq.s32.totalorder %s29, 0
      %p197 = por %p195, %p196
      %p198 = scmp.ne.s32.totalorder %s186, %s187
      %p199 = scmp.eq.s32.totalorder %s30, 1
      %p200 = por %p198, %p199
      %p202 = scmp.ne.s32.totalorder %s187, %s201
      %p203 = scmp.eq.s32.totalorder %s30, 0
      %p204 = por %p202, %p203
      %s206 = sadd.s32 %s205, 1
      %p209 = scmp.eq.s32.totalorder %s24, 1
      %p210 = scmp.ne.s32.totalorder %s205, %s207
      %p211 = scmp.eq.s32.totalorder %s24, 0
      %p212 = por %p210, %p211
      %p213 = scmp.ne.s32.totalorder %s205, %s207
      %p214 = scmp.eq.s32.totalorder %s29, 1
      %p215 = por %p213, %p214
      %p216 = scmp.ne.s32.totalorder %s207, %s208
      %p217 = scmp.eq.s32.totalorder %s29, 0
      %p218 = por %p216, %p217
      %p219 = scmp.ne.s32.totalorder %s207, %s208
      %p220 = scmp.eq.s32.totalorder %s30, 1
      %p221 = por %p219, %p220
      %p223 = scmp.ne.s32.totalorder %s208, %s222
      %p224 = scmp.eq.s32.totalorder %s30, 0
      %p225 = por %p223, %p224
      %s227 = sadd.s32 %s226, 1
      %p230 = scmp.eq.s32.totalorder %s24, 1
      %p231 = scmp.ne.s32.totalorder %s226, %s228
      %p232 = scmp.eq.s32.totalorder %s24, 0
      %p233 = por %p231, %p232
      %p234 = scmp.ne.s32.totalorder %s226, %s228
      %p235 = scmp.eq.s32.totalorder %s29, 1
      %p236 = por %p234, %p235
      %p237 = scmp.ne.s32.totalorder %s228, %s229
      %p238 = scmp.eq.s32.totalorder %s29, 0
      %p239 = por %p237, %p238
      %p240 = scmp.ne.s32.totalorder %s228, %s229
      %p241 = scmp.eq.s32.totalorder %s30, 1
      %p242 = por %p240, %p241
      %p244 = scmp.ne.s32.totalorder %s229, %s243
      %p245 = scmp.eq.s32.totalorder %s30, 0
      %p246 = por %p244, %p245
      %s248 = sadd.s32 %s247, 1
      %p251 = scmp.eq.s32.totalorder %s24, 1
      %p252 = scmp.ne.s32.totalorder %s247, %s249
      %p253 = scmp.eq.s32.totalorder %s24, 0
      %p254 = por %p252, %p253
      %p255 = scmp.ne.s32.totalorder %s247, %s249
      %p256 = scmp.eq.s32.totalorder %s29, 1
      %p257 = por %p255, %p256
      %p258 = scmp.ne.s32.totalorder %s249, %s250
      %p259 = scmp.eq.s32.totalorder %s29, 0
      %p260 = por %p258, %p259
      %p261 = scmp.ne.s32.totalorder %s249, %s250
      %p262 = scmp.eq.s32.totalorder %s30, 1
      %p263 = por %p261, %p262
      %p265 = scmp.ne.s32.totalorder %s250, %s264
      %p266 = scmp.eq.s32.totalorder %s30, 0
      %p267 = por %p265, %p266
      %s269 = sadd.s32 %s268, 1
      %p272 = scmp.eq.s32.totalorder %s24, 1
      %p273 = scmp.ne.s32.totalorder %s268, %s270
      %p274 = scmp.eq.s32.totalorder %s24, 0
      %p275 = por %p273, %p274
      %p276 = scmp.ne.s32.totalorder %s268, %s270
      %p277 = scmp.eq.s32.totalorder %s29, 1
      %p278 = por %p276, %p277
      %p279 = scmp.ne.s32.totalorder %s270, %s271
      %p280 = scmp.eq.s32.totalorder %s29, 0
      %p281 = por %p279, %p280
      %p282 = scmp.ne.s32.totalorder %s270, %s271
      %p283 = scmp.eq.s32.totalorder %s30, 1
      %p284 = por %p282, %p283
      %p286 = scmp.ne.s32.totalorder %s271, %s285
      %p287 = scmp.eq.s32.totalorder %s30, 0
      %p288 = por %p286, %p287
      %s290 = sadd.s32 %s289, 1
      %p293 = scmp.eq.s32.totalorder %s24, 1
      %p294 = scmp.ne.s32.totalorder %s289, %s291
      %p295 = scmp.eq.s32.totalorder %s24, 0
      %p296 = por %p294, %p295
      %p297 = scmp.ne.s32.totalorder %s289, %s291
      %p298 = scmp.eq.s32.totalorder %s29, 1
      %p299 = por %p297, %p298
      %p300 = scmp.ne.s32.totalorder %s291, %s292
      %p301 = scmp.eq.s32.totalorder %s29, 0
      %p302 = por %p300, %p301
      %p303 = scmp.ne.s32.totalorder %s291, %s292
      %p304 = scmp.eq.s32.totalorder %s30, 1
      %p305 = por %p303, %p304
      %p307 = scmp.ne.s32.totalorder %s292, %s306
      %p308 = scmp.eq.s32.totalorder %s30, 0
      %p309 = por %p307, %p308
      %s310 = ssub.s32 %s24, %s31
      %p311 = scmp.eq.s32.totalorder %s310, 0
      %s313 = sadd.s32 %s312, 1
      %s314 = scalar_select %p311, %s312, %s313
      %p317 = pneg %p311
      %p318 = scmp.eq.s32.totalorder %s24, 1
      %p319 = por %p317, %p318
      %p320 = scmp.ne.s32.totalorder %s312, %s315
      %p321 = scmp.eq.s32.totalorder %s24, 0
      %p322 = por %p320, %p321
      %p323 = scmp.ne.s32.totalorder %s312, %s315
      %p324 = scmp.eq.s32.totalorder %s29, 1
      %p325 = por %p323, %p324
      %p326 = scmp.ne.s32.totalorder %s315, %s316
      %p327 = scmp.eq.s32.totalorder %s29, 0
      %p328 = por %p326, %p327
      %p329 = scmp.ne.s32.totalorder %s315, %s316
      %p330 = scmp.eq.s32.totalorder %s30, 1
      %p331 = por %p329, %p330
      %p333 = scmp.ne.s32.totalorder %s316, %s332
      %p334 = scmp.eq.s32.totalorder %s30, 0
      %p335 = por %p333, %p334
      %p336 = scmp.le.s32.totalorder 1, %s24
      %p337 = scmp.lt.s32.totalorder %s24, 3
      %p338 = pnand %p336, %p337
      %p339 = pneg %p338
      // Predicated region
      $region9: #{tpu_custom_call.1} parent=5 // pred_check
        _
      $region10: #{tpu_custom_call.1} parent=5 // pred_check_branch
        %341 = sbr.rel (%p338) target = $region12
      $region11: #{tpu_custom_call.1} parent=5 // pred_region
        %s342 = ssub.s32 %s24, 1
        // Predicated region
        $region13: #{tpu_custom_call.1} parent=11 // pred_check
          %p343 = pneg %p71
        $region14: #{tpu_custom_call.1} parent=11 // pred_check_branch
          %345 = sbr.rel (%p343) target = $region16
        $region15: #{tpu_custom_call.1} parent=11 // pred_region
          _
        $region16: #{tpu_custom_call.1} parent=11 // pred_fallthru
          _
        // Predicated region
        $region17: #{tpu_custom_call.1} parent=11 // pred_check
          %p346 = pneg %p92
        $region18: #{tpu_custom_call.1} parent=11 // pred_check_branch
          %348 = sbr.rel (%p346) target = $region20
        $region19: #{tpu_custom_call.1} parent=11 // pred_region
          _
        $region20: #{tpu_custom_call.1} parent=11 // pred_fallthru
          _
        // Predicated region
        $region21: #{tpu_custom_call.1} parent=11 // pred_check
          %p349 = pneg %p113
        $region22: #{tpu_custom_call.1} parent=11 // pred_check_branch
          %351 = sbr.rel (%p349) target = $region24
        $region23: #{tpu_custom_call.1} parent=11 // pred_region
          %s353 = ssub.s32 512, 512
          %354 = vsyncadd [#allocation4], %s353
          %s355 = sshll.u32 [#allocation3], 4
          %s356 = int_to_ptr.vmem [resolvable:$true] %s355
          %361 = dma.hbm_to_vmem [thread:$0]  %s3, 512, %s356, [#allocation4], 64, 64, 4
        $region24: #{tpu_custom_call.1} parent=11 // pred_fallthru
          _
        // Predicated region
        $region25: #{tpu_custom_call.1} parent=11 // pred_check
          %p362 = pneg %p134
        $region26: #{tpu_custom_call.1} parent=11 // pred_check_branch
          %364 = sbr.rel (%p362) target = $region28
        $region27: #{tpu_custom_call.1} parent=11 // pred_region
          _
        $region28: #{tpu_custom_call.1} parent=11 // pred_fallthru
          _
        // Predicated region
        $region29: #{tpu_custom_call.1} parent=11 // pred_check
          %p365 = pneg %p155
        $region30: #{tpu_custom_call.1} parent=11 // pred_check_branch
          %367 = sbr.rel (%p365) target = $region32
        $region31: #{tpu_custom_call.1} parent=11 // pred_region
          _
        $region32: #{tpu_custom_call.1} parent=11 // pred_fallthru
          _
        // Predicated region
        $region33: #{tpu_custom_call.1} parent=11 // pred_check
          %p368 = pneg %p176
        $region34: #{tpu_custom_call.1} parent=11 // pred_check_branch
          %370 = sbr.rel (%p368) target = $region36
        $region35: #{tpu_custom_call.1} parent=11 // pred_region
          _
        $region36: #{tpu_custom_call.1} parent=11 // pred_fallthru
          _
        // Predicated region
        $region37: #{tpu_custom_call.1} parent=11 // pred_check
          %p371 = pneg %p197
        $region38: #{tpu_custom_call.1} parent=11 // pred_check_branch
          %373 = sbr.rel (%p371) target = $region40
        $region39: #{tpu_custom_call.1} parent=11 // pred_region
          %s375 = ssub.s32 1024, 1024
          %376 = vsyncadd [#allocation7], %s375
          %s377 = sshll.u32 [#allocation6], 4
          %s378 = int_to_ptr.vmem [resolvable:$true] %s377
          %383 = dma.hbm_to_vmem [thread:$0]  %s7, 1024, %s378, [#allocation7], 128, 128, 8
        $region40: #{tpu_custom_call.1} parent=11 // pred_fallthru
          _
        // Predicated region
        $region41: #{tpu_custom_call.1} parent=11 // pred_check
          %p384 = pneg %p218
        $region42: #{tpu_custom_call.1} parent=11 // pred_check_branch
          %386 = sbr.rel (%p384) target = $region44
        $region43: #{tpu_custom_call.1} parent=11 // pred_region
          _
        $region44: #{tpu_custom_call.1} parent=11 // pred_fallthru
          _
        // Predicated region
        $region45: #{tpu_custom_call.1} parent=11 // pred_check
          %p387 = pneg %p239
        $region46: #{tpu_custom_call.1} parent=11 // pred_check_branch
          %389 = sbr.rel (%p387) target = $region48
        $region47: #{tpu_custom_call.1} parent=11 // pred_region
          _
        $region48: #{tpu_custom_call.1} parent=11 // pred_fallthru
          _
        // Predicated region
        $region49: #{tpu_custom_call.1} parent=11 // pred_check
          %p390 = pneg %p260
        $region50: #{tpu_custom_call.1} parent=11 // pred_check_branch
          %392 = sbr.rel (%p390) target = $region52
        $region51: #{tpu_custom_call.1} parent=11 // pred_region
          _
        $region52: #{tpu_custom_call.1} parent=11 // pred_fallthru
          _
        // Predicated region
        $region53: #{tpu_custom_call.1} parent=11 // pred_check
          %p393 = pneg %p281
        $region54: #{tpu_custom_call.1} parent=11 // pred_check_branch
          %395 = sbr.rel (%p393) target = $region56
        $region55: #{tpu_custom_call.1} parent=11 // pred_region
          _
        $region56: #{tpu_custom_call.1} parent=11 // pred_fallthru
          _
        // Predicated region
        $region57: #{tpu_custom_call.1} parent=11 // pred_check
          %p396 = pneg %p302
        $region58: #{tpu_custom_call.1} parent=11 // pred_check_branch
          %398 = sbr.rel (%p396) target = $region60
        $region59: #{tpu_custom_call.1} parent=11 // pred_region
          _
        $region60: #{tpu_custom_call.1} parent=11 // pred_fallthru
          _
      $region12: #{tpu_custom_call.1} parent=5 // pred_fallthru
        _
      %p399 = scmp.lt.s32.totalorder %s24, 2
      // Predicated region
      $region61: #{tpu_custom_call.1} parent=5 // pred_check
        %p400 = pneg %p399
      $region62: #{tpu_custom_call.1} parent=5 // pred_check_branch
        %402 = sbr.rel (%p400) target = $region64
      $region63: #{tpu_custom_call.1} parent=5 // pred_region
        // Predicated region
        $region65: #{tpu_custom_call.1} parent=63 // pred_check
          %p403 = pneg %p44
        $region66: #{tpu_custom_call.1} parent=63 // pred_check_branch
          %405 = sbr.rel (%p403) target = $region68
        $region67: #{tpu_custom_call.1} parent=63 // pred_region
          %p406 = scmp.lt.s32.totalorder %s24, 1
          %s407 = scalar_select %p406, %s24, 1
          %s408 = smul.addr %s407, 8
          %s409 = smul.addr %s408, 8
          %s410 = scalar_lea.vmem %s0, %s409
        $region68: #{tpu_custom_call.1} parent=63 // pred_fallthru
          _
      $region64: #{tpu_custom_call.1} parent=5 // pred_fallthru
        _
      %p411 = scmp.le.s32.totalorder 1, %s24
      %p412 = scmp.lt.s32.totalorder %s24, 3
      %p413 = pnand %p411, %p412
      %p414 = pneg %p413
      // Predicated region
      $region69: #{tpu_custom_call.1} parent=5 // pred_check
        _
      $region70: #{tpu_custom_call.1} parent=5 // pred_check_branch
        %416 = sbr.rel (%p413) target = $region72
      $region71: #{tpu_custom_call.1} parent=5 // pred_region
        %s417 = ssub.s32 %s24, 1
        // Predicated region
        $region73: #{tpu_custom_call.1} parent=71 // pred_check
          %p418 = pneg %p113
        $region74: #{tpu_custom_call.1} parent=71 // pred_check_branch
          %420 = sbr.rel (%p418) target = $region76
        $region75: #{tpu_custom_call.1} parent=71 // pred_region
          %421 = dma.done [#allocation4], 512
        $region76: #{tpu_custom_call.1} parent=71 // pred_fallthru
          _
        // Predicated region
        $region77: #{tpu_custom_call.1} parent=71 // pred_check
          %p422 = pneg %p197
        $region78: #{tpu_custom_call.1} parent=71 // pred_check_branch
          %424 = sbr.rel (%p422) target = $region80
        $region79: #{tpu_custom_call.1} parent=71 // pred_region
          %425 = dma.done [#allocation7], 1024
        $region80: #{tpu_custom_call.1} parent=71 // pred_fallthru
          _
        %p426 = scmp.lt.s32.totalorder %s29, 1
        %s427 = scalar_select %p426, %s29, 1
        %s428 = smul.addr %s427, 8
        %s429 = smul.addr %s428, 8
        %s430 = scalar_lea.vmem %s0, %s429
        %p431 = pneg %p50
        %p432 = pneg %p47
        %p433 = pneg %p71
        %p434 = pneg %p68
        %p435 = pneg %p92
        %p436 = pneg %p89
        %p437 = pneg %p113
        %p438 = pneg %p110
        %p439 = pneg %p134
        %p440 = pneg %p131
        %p441 = pneg %p155
        %p442 = pneg %p152
        %p443 = pneg %p176
        %p444 = pneg %p173
        %p445 = pneg %p197
        %p446 = pneg %p194
        %p447 = pneg %p218
        %p448 = pneg %p215
        %p449 = pneg %p239
        %p450 = pneg %p236
        %p451 = pneg %p260
        %p452 = pneg %p257
        %p453 = pneg %p281
        %p454 = pneg %p278
        %p455 = pneg %p302
        %p456 = pneg %p299
        %p457 = pneg %p328
        %p458 = pneg %p325
        %s459 = sand.u32 %s315, 1
        %s460 = scalar_lea.sflag [#allocation5], %s459
        %s461 = sand.u32 %s315, 1
        %s462 = smul.addr %s461, 64
        %s463 = scalar_lea.vmem [#allocation8], %s462
        %p464 = scmp.lt.s32.totalorder %s29, 1
        %s465 = scalar_select %p464, %s29, 1
        %s466 = smul.addr %s465, 8
        %s467 = smul.addr %s466, 8
        %s468 = scalar_lea.vmem %s0, %s467
        %v470 = vld [vmem:[%s468] sm:$0xff]
        %v471 = vld [vmem:[%s468 + $0x8] sm:$0xff]
        %v472 = vld [vmem:[%s468 + $0x10] sm:$0xff]
        %v473 = vld [vmem:[%s468 + $0x18] sm:$0xff]
        %v474 = vld [vmem:[%s468 + $0x20] sm:$0xff]
        %v475 = vld [vmem:[%s468 + $0x28] sm:$0xff]
        %v476 = vld [vmem:[%s468 + $0x30] sm:$0xff]
        %v477 = vld [vmem:[%s468 + $0x38] sm:$0xff]
        %v478 = vpack.c.bf16 %v471, %v470
        %v479 = vpack.c.bf16 %v473, %v472
        %v480 = vpack.c.bf16 %v475, %v474
        %v481 = vpack.c.bf16 %v477, %v476
        %v482 = vld [vmem:[%s1] sm:$0xff]
        %v483 = vld [vmem:[%s1 + $0x8] sm:$0xff]
        %v484 = vld [vmem:[%s1 + $0x10] sm:$0xff]
        %v485 = vld [vmem:[%s1 + $0x18] sm:$0xff]
        %v486 = vld [vmem:[%s1 + $0x20] sm:$0xff]
        %v487 = vld [vmem:[%s1 + $0x28] sm:$0xff]
        %v488 = vld [vmem:[%s1 + $0x30] sm:$0xff]
        %v489 = vld [vmem:[%s1 + $0x38] sm:$0xff]
        %v490 = vld [vmem:[%s2] sm:$0x3]
        %v492 = vlaneseq
        %v493 = vshrl.u32 %v492, 7
        %v494 = vsub.s32 0, %v493
        %v495 = vrot.slane %v490, %v494
        %v496 = vlaneseq
        %v497 = vshrl.u32 %v496, 7
        %v498 = vsub.s32 1, %v497
        %v499 = vrot.slane %v490, %v498
        %v510 = vunpack.c.l.b16 %v482
        %v511 = vunpack.c.h.b16 %v482
        %v512 = vunpack.c.l.b16 %v483
        %v513 = vunpack.c.h.b16 %v483
        %v514 = vunpack.c.l.b16 %v484
        %v515 = vunpack.c.h.b16 %v484
        %v516 = vunpack.c.l.b16 %v485
        %v517 = vunpack.c.h.b16 %v485
        %v518 = vunpack.c.l.b16 %v486
        %v519 = vunpack.c.h.b16 %v486
        %v520 = vunpack.c.l.b16 %v487
        %v521 = vunpack.c.h.b16 %v487
        %v522 = vunpack.c.l.b16 %v488
        %v523 = vunpack.c.h.b16 %v488
        %v524 = vunpack.c.l.b16 %v489
        %v525 = vunpack.c.h.b16 %v489
        %v526 = vpack.c.b16 %v512, %v510
        %v527 = vpack.c.b16 %v513, %v511
        %v528 = vpack.c.b16 %v516, %v514
        %v529 = vpack.c.b16 %v517, %v515
        %v530 = vpack.c.b16 %v520, %v518
        %v531 = vpack.c.b16 %v521, %v519
        %v532 = vpack.c.b16 %v524, %v522
        %v533 = vpack.c.b16 %v525, %v523
        %vm542 = vcmask 523264
        %v544 = vsel %vm542, %v478, 0
        %v547 = vsel %vm542, %v479, 0
        %v550 = vsel %vm542, %v480, 0
        %v553 = vsel %vm542, %v481, 0
        %555 = vmatprep.subr.bf16.mxu0 %v527
        %556 = vmatpush1.bf16.msra.mxu0 %v526
        %557 = vmatprep.subr.bf16.mxu0 %v529
        %558 = vmatpush1.bf16.msra.mxu0 %v528
        %559 = vmatprep.subr.bf16.mxu0 %v531
        %560 = vmatpush1.bf16.msra.mxu0 %v530
        %561 = vmatprep.subr.bf16.mxu0 %v533
        %562 = vmatpush1.bf16.msra.mxu0 %v532
        %563 = vmatprep.subr.bf16.mxu0 0
        %564 = vmatpush1.bf16.msra.mxu0 0
        %565 = vmatprep.subr.bf16.mxu0 0
        %566 = vmatpush1.bf16.msra.mxu0 0
        %567 = vmatprep.subr.bf16.mxu0 0
        %568 = vmatpush1.bf16.msra.mxu0 0
        %569 = vmatprep.subr.bf16.mxu0 0
        %570 = vmatpush1.bf16.msra.mxu0 0
        %571 = vmatprep.subr.bf16.mxu0 0
        %572 = vmatpush1.bf16.msra.mxu0 0
        %573 = vmatprep.subr.bf16.mxu0 0
        %574 = vmatpush1.bf16.msra.mxu0 0
        %575 = vmatprep.subr.bf16.mxu0 0
        %576 = vmatpush1.bf16.msra.mxu0 0
        %577 = vmatprep.subr.bf16.mxu0 0
        %578 = vmatpush1.bf16.msra.mxu0 0
        %579 = vmatprep.subr.bf16.mxu0 0
        %580 = vmatpush1.bf16.msra.mxu0 0
        %581 = vmatprep.subr.bf16.mxu0 0
        %582 = vmatpush1.bf16.msra.mxu0 0
        %583 = vmatprep.subr.bf16.mxu0 0
        %584 = vmatpush1.bf16.msra.mxu0 0
        %585 = vmatprep.subr.bf16.mxu0 0
        %586 = vmatpush1.bf16.msra.mxu0 0
        %587 = vmatprep.mubr.bf16.mxu0 0
        %588 = vmatmul.mubr.bf16.gmra.mrb[0].mxu0 %v544
        %v589 = vpop.f32.mrb[0].mxu0
        %v590 = vadd.f32 %v495, %v589
        %v591 = vpop.f32.mrb[0].mxu0
        %v592 = vadd.f32 %v499, %v591
        %v593 = vpop.f32.mrb[0].mxu0
        %v594 = vadd.f32 %v495, %v593
        %v595 = vpop.f32.mrb[0].mxu0
        %v596 = vadd.f32 %v499, %v595
        %597 = vmatprep.mubr.bf16.mxu0 0
        %598 = vmatmul.mubr.bf16.gmra.mrb[0].mxu0 %v547
        %v599 = vpop.f32.mrb[0].mxu0
        %v600 = vadd.f32 %v495, %v599
        %v601 = vpop.f32.mrb[0].mxu0
        %v602 = vadd.f32 %v499, %v601
        %v603 = vpop.f32.mrb[0].mxu0
        %v604 = vadd.f32 %v495, %v603
        %v605 = vpop.f32.mrb[0].mxu0
        %v606 = vadd.f32 %v499, %v605
        %607 = vmatprep.mubr.bf16.mxu0 0
        %608 = vmatmul.mubr.bf16.gmra.mrb[0].mxu0 %v550
        %v609 = vpop.f32.mrb[0].mxu0
        %v610 = vadd.f32 %v495, %v609
        %v611 = vpop.f32.mrb[0].mxu0
        %v612 = vadd.f32 %v499, %v611
        %v613 = vpop.f32.mrb[0].mxu0
        %v614 = vadd.f32 %v495, %v613
        %v615 = vpop.f32.mrb[0].mxu0
        %v616 = vadd.f32 %v499, %v615
        %617 = vmatprep.mubr.bf16.mxu0 0
        %618 = vmatmul.mubr.bf16.gmra.mrb[0].mxu0 %v553
        %v619 = vpop.f32.mrb[0].mxu0
        %v620 = vadd.f32 %v495, %v619
        %v621 = vpop.f32.mrb[0].mxu0
        %v622 = vadd.f32 %v499, %v621
        %v623 = vpop.f32.mrb[0].mxu0
        %v624 = vadd.f32 %v495, %v623
        %v625 = vpop.f32.mrb[0].mxu0
        %v626 = vadd.f32 %v499, %v625
        %627 = vdwg.mxu0
        %v628 = vpack.c.bf16 %v594, %v590
        %v629 = vpack.c.bf16 %v596, %v592
        %v630 = vpack.c.bf16 %v604, %v600
        %v631 = vpack.c.bf16 %v606, %v602
        %v632 = vpack.c.bf16 %v614, %v610
        %v633 = vpack.c.bf16 %v616, %v612
        %v634 = vpack.c.bf16 %v624, %v620
        %v635 = vpack.c.bf16 %v626, %v622
        %640 = vrot.lane.b32.xlu0 %v628, 64
        %v641 = vpop.permute.xlu0 %640
        %642 = vrot.lane.b32.xlu0 %v630, 64
        %v643 = vpop.permute.xlu0 %642
        %644 = vrot.lane.b32.xlu0 %v632, 64
        %v645 = vpop.permute.xlu0 %644
        %646 = vrot.lane.b32.xlu0 %v634, 64
        %v647 = vpop.permute.xlu0 %646
        %vm648 = vcmask 64512
        %v650 = vsel %vm648, %v628, 0
        %v653 = vsel %vm648, %v630, 0
        %v656 = vsel %vm648, %v632, 0
        %v659 = vsel %vm648, %v634, 0
        %v662 = vsel %vm648, %v641, 0
        %v665 = vsel %vm648, %v643, 0
        %v668 = vsel %vm648, %v645, 0
        %v671 = vsel %vm648, %v647, 0
        %673 = vmatprep.subr.bf16.mxu0 0
        %674 = vmatpush1.bf16.xpose.msra.mxu0 %v662
        %675 = vmatprep.subr.bf16.mxu0 0
        %676 = vmatpush1.bf16.xpose.msra.mxu0 %v665
        %677 = vmatprep.subr.bf16.mxu0 0
        %678 = vmatpush1.bf16.xpose.msra.mxu0 %v668
        %679 = vmatprep.subr.bf16.mxu0 0
        %680 = vmatpush1.bf16.xpose.msra.mxu0 %v671
        %681 = vmatprep.subr.bf16.mxu0 0
        %682 = vmatpush1.bf16.xpose.msra.mxu0 0
        %683 = vmatprep.subr.bf16.mxu0 0
        %684 = vmatpush1.bf16.xpose.msra.mxu0 0
        %685 = vmatprep.subr.bf16.mxu0 0
        %686 = vmatpush1.bf16.xpose.msra.mxu0 0
        %687 = vmatprep.subr.bf16.mxu0 0
        %688 = vmatpush1.bf16.xpose.msra.mxu0 0
        %689 = vmatprep.subr.bf16.mxu0 0
        %690 = vmatpush1.bf16.xpose.msra.mxu0 0
        %691 = vmatprep.subr.bf16.mxu0 0
        %692 = vmatpush1.bf16.xpose.msra.mxu0 0
        %693 = vmatprep.subr.bf16.mxu0 0
        %694 = vmatpush1.bf16.xpose.msra.mxu0 0
        %695 = vmatprep.subr.bf16.mxu0 0
        %696 = vmatpush1.bf16.xpose.msra.mxu0 0
        %697 = vmatprep.subr.bf16.mxu0 0
        %698 = vmatpush1.bf16.xpose.msra.mxu0 0
        %699 = vmatprep.subr.bf16.mxu0 0
        %700 = vmatpush1.bf16.xpose.msra.mxu0 0
        %701 = vmatprep.subr.bf16.mxu0 0
        %702 = vmatpush1.bf16.xpose.msra.mxu0 0
        %703 = vmatprep.subr.bf16.mxu0 0
        %704 = vmatpush1.bf16.xpose.msra.mxu0 0
        %705 = vmatprep.mubr.bf16.mxu0 0
        %706 = vmatmul.mubr.bf16.gmra.mrb[0].mxu0 %v650
        %v707 = vpop.f32.mrb[0].mxu0
        %v708 = vadd.f32 0.0, %v707
        %v709 = vpop.f32.mrb[0].mxu0
        %v710 = vpop.f32.mrb[0].mxu0
        %v711 = vadd.f32 0.0, %v710
        %v712 = vpop.f32.mrb[0].mxu0
        %713 = vmatprep.mubr.bf16.mxu0 0
        %714 = vmatmul.mubr.bf16.gmra.mrb[0].mxu0 %v653
        %v715 = vpop.f32.mrb[0].mxu0
        %v716 = vadd.f32 0.0, %v715
        %v717 = vpop.f32.mrb[0].mxu0
        %v718 = vpop.f32.mrb[0].mxu0
        %v719 = vadd.f32 0.0, %v718
        %v720 = vpop.f32.mrb[0].mxu0
        %721 = vmatprep.mubr.bf16.mxu0 0
        %722 = vmatmul.mubr.bf16.gmra.mrb[0].mxu0 %v656
        %v723 = vpop.f32.mrb[0].mxu0
        %v724 = vadd.f32 0.0, %v723
        %v725 = vpop.f32.mrb[0].mxu0
        %v726 = vpop.f32.mrb[0].mxu0
        %v727 = vadd.f32 0.0, %v726
        %v728 = vpop.f32.mrb[0].mxu0
        %729 = vmatprep.mubr.bf16.mxu0 0
        %730 = vmatmul.mubr.bf16.gmra.mrb[0].mxu0 %v659
        %v731 = vpop.f32.mrb[0].mxu0
        %v732 = vadd.f32 0.0, %v731
        %v733 = vpop.f32.mrb[0].mxu0
        %v734 = vpop.f32.mrb[0].mxu0
        %v735 = vadd.f32 0.0, %v734
        %v736 = vpop.f32.mrb[0].mxu0
        %737 = vdwg.mxu0
        %v738 = vsel %vm542, %v708, -inf
        %739 = vmax.xlane.f32.xlu0 %v738
        %v740 = vpop.xlane.xlu0 %739
        %v741 = vsel %vm542, %v711, -inf
        %742 = vmax.xlane.f32.xlu0 %v741
        %v743 = vpop.xlane.xlu0 %742
        %v744 = vsel %vm542, %v716, -inf
        %745 = vmax.xlane.f32.xlu0 %v744
        %v746 = vpop.xlane.xlu0 %745
        %v747 = vsel %vm542, %v719, -inf
        %748 = vmax.xlane.f32.xlu0 %v747
        %v749 = vpop.xlane.xlu0 %748
        %v750 = vsel %vm542, %v724, -inf
        %751 = vmax.xlane.f32.xlu0 %v750
        %v752 = vpop.xlane.xlu0 %751
        %v753 = vsel %vm542, %v727, -inf
        %754 = vmax.xlane.f32.xlu0 %v753
        %v755 = vpop.xlane.xlu0 %754
        %v756 = vsel %vm542, %v732, -inf
        %757 = vmax.xlane.f32.xlu0 %v756
        %v758 = vpop.xlane.xlu0 %757
        %v759 = vsel %vm542, %v735, -inf
        %760 = vmax.xlane.f32.xlu0 %v759
        %v761 = vpop.xlane.xlu0 %760
        %v762 = vsub.f32 %v708, %v740
        %v763 = vsub.f32 %v711, %v743
        %v764 = vsub.f32 %v716, %v746
        %v765 = vsub.f32 %v719, %v749
        %v766 = vsub.f32 %v724, %v752
        %v767 = vsub.f32 %v727, %v755
        %v768 = vsub.f32 %v732, %v758
        %v769 = vsub.f32 %v735, %v761
        %v770 = vmul.f32 %v762, 1.442695
        %v771 = vpow.pop %v770
        %v772 = vmul.f32 %v763, 1.442695
        %v773 = vpow.pop %v772
        %v774 = vmul.f32 %v764, 1.442695
        %v775 = vpow.pop %v774
        %v776 = vmul.f32 %v765, 1.442695
        %v777 = vpow.pop %v776
        %v778 = vmul.f32 %v766, 1.442695
        %v779 = vpow.pop %v778
        %v780 = vmul.f32 %v767, 1.442695
        %v781 = vpow.pop %v780
        %v782 = vmul.f32 %v768, 1.442695
        %v783 = vpow.pop %v782
        %v784 = vmul.f32 %v769, 1.442695
        %v785 = vpow.pop %v784
        %v786 = vsel %vm542, %v771, 0.0
        %787 = vadd.xlane.f32.xlu0 %v786
        %v788 = vpop.xlane.xlu0 %787
        %v789 = vsel %vm542, %v773, 0.0
        %790 = vadd.xlane.f32.xlu0 %v789
        %v791 = vpop.xlane.xlu0 %790
        %v792 = vsel %vm542, %v775, 0.0
        %793 = vadd.xlane.f32.xlu0 %v792
        %v794 = vpop.xlane.xlu0 %793
        %v795 = vsel %vm542, %v777, 0.0
        %796 = vadd.xlane.f32.xlu0 %v795
        %v797 = vpop.xlane.xlu0 %796
        %v798 = vsel %vm542, %v779, 0.0
        %799 = vadd.xlane.f32.xlu0 %v798
        %v800 = vpop.xlane.xlu0 %799
        %v801 = vsel %vm542, %v781, 0.0
        %802 = vadd.xlane.f32.xlu0 %v801
        %v803 = vpop.xlane.xlu0 %802
        %v804 = vsel %vm542, %v783, 0.0
        %805 = vadd.xlane.f32.xlu0 %v804
        %v806 = vpop.xlane.xlu0 %805
        %v807 = vsel %vm542, %v785, 0.0
        %808 = vadd.xlane.f32.xlu0 %v807
        %v809 = vpop.xlane.xlu0 %808
        %v810 = vrcp.pop %v788
        %v811 = vrcp.pop %v791
        %v812 = vrcp.pop %v794
        %v813 = vrcp.pop %v797
        %v814 = vrcp.pop %v800
        %v815 = vrcp.pop %v803
        %v816 = vrcp.pop %v806
        %v817 = vrcp.pop %v809
        %v818 = vmul.f32 %v771, %v810
        %v819 = vmul.f32 %v773, %v811
        %v820 = vmul.f32 %v775, %v812
        %v821 = vmul.f32 %v777, %v813
        %v822 = vmul.f32 %v779, %v814
        %v823 = vmul.f32 %v781, %v815
        %v824 = vmul.f32 %v783, %v816
        %v825 = vmul.f32 %v785, %v817
        %v826 = vpack.c.bf16 %v819, %v818
        %v827 = vpack.c.bf16 %v821, %v820
        %v828 = vpack.c.bf16 %v823, %v822
        %v829 = vpack.c.bf16 %v825, %v824
        %v831 = vsel %vm542, %v826, 0
        %v834 = vsel %vm542, %v827, 0
        %v837 = vsel %vm542, %v828, 0
        %v840 = vsel %vm542, %v829, 0
        %842 = vmatprep.subr.bf16.mxu0 0
        %843 = vmatpush1.bf16.msra.mxu0 %v629
        %844 = vmatprep.subr.bf16.mxu0 0
        %845 = vmatpush1.bf16.msra.mxu0 %v631
        %846 = vmatprep.subr.bf16.mxu0 0
        %847 = vmatpush1.bf16.msra.mxu0 %v633
        %848 = vmatprep.subr.bf16.mxu0 0
        %849 = vmatpush1.bf16.msra.mxu0 %v635
        %850 = vmatprep.subr.bf16.mxu0 0
        %851 = vmatpush1.bf16.msra.mxu0 0
        %852 = vmatprep.subr.bf16.mxu0 0
        %853 = vmatpush1.bf16.msra.mxu0 0
        %854 = vmatprep.subr.bf16.mxu0 0
        %855 = vmatpush1.bf16.msra.mxu0 0
        %856 = vmatprep.subr.bf16.mxu0 0
        %857 = vmatpush1.bf16.msra.mxu0 0
        %858 = vmatprep.subr.bf16.mxu0 0
        %859 = vmatpush1.bf16.msra.mxu0 0
        %860 = vmatprep.subr.bf16.mxu0 0
        %861 = vmatpush1.bf16.msra.mxu0 0
        %862 = vmatprep.subr.bf16.mxu0 0
        %863 = vmatpush1.bf16.msra.mxu0 0
        %864 = vmatprep.subr.bf16.mxu0 0
        %865 = vmatpush1.bf16.msra.mxu0 0
        %866 = vmatprep.subr.bf16.mxu0 0
        %867 = vmatpush1.bf16.msra.mxu0 0
        %868 = vmatprep.subr.bf16.mxu0 0
        %869 = vmatpush1.bf16.msra.mxu0 0
        %870 = vmatprep.subr.bf16.mxu0 0
        %871 = vmatpush1.bf16.msra.mxu0 0
        %872 = vmatprep.subr.bf16.mxu0 0
        %873 = vmatpush1.bf16.msra.mxu0 0
        %874 = vmatprep.mubr.bf16.mxu0 0
        %875 = vmatmul.mubr.bf16.gmra.mrb[0].mxu0 %v831
        %v876 = vpop.f32.mrb[0].mxu0
        %v877 = vadd.f32 0.0, %v876
        %v878 = vpop.f32.mrb[0].mxu0
        %v879 = vpop.f32.mrb[0].mxu0
        %v880 = vadd.f32 0.0, %v879
        %v881 = vpop.f32.mrb[0].mxu0
        %882 = vmatprep.mubr.bf16.mxu0 0
        %883 = vmatmul.mubr.bf16.gmra.mrb[0].mxu0 %v834
        %v884 = vpop.f32.mrb[0].mxu0
        %v885 = vadd.f32 0.0, %v884
        %v886 = vpop.f32.mrb[0].mxu0
        %v887 = vpop.f32.mrb[0].mxu0
        %v888 = vadd.f32 0.0, %v887
        %v889 = vpop.f32.mrb[0].mxu0
        %890 = vmatprep.mubr.bf16.mxu0 0
        %891 = vmatmul.mubr.bf16.gmra.mrb[0].mxu0 %v837
        %v892 = vpop.f32.mrb[0].mxu0
        %v893 = vadd.f32 0.0, %v892
        %v894 = vpop.f32.mrb[0].mxu0
        %v895 = vpop.f32.mrb[0].mxu0
        %v896 = vadd.f32 0.0, %v895
        %v897 = vpop.f32.mrb[0].mxu0
        %898 = vmatprep.mubr.bf16.mxu0 0
        %899 = vmatmul.mubr.bf16.gmra.mrb[0].mxu0 %v840
        %v900 = vpop.f32.mrb[0].mxu0
        %v901 = vadd.f32 0.0, %v900
        %v902 = vpop.f32.mrb[0].mxu0
        %v903 = vpop.f32.mrb[0].mxu0
        %v904 = vadd.f32 0.0, %v903
        %v905 = vpop.f32.mrb[0].mxu0
        %906 = vdwg.mxu0
        %907 = vst.msk [vmem:[#allocation2] sm:$0xff] %vm648, %v877
        %908 = vst.msk [vmem:[#allocation2 + $0x8] sm:$0xff] %vm648, %v880
        %909 = vst.msk [vmem:[#allocation2 + $0x10] sm:$0xff] %vm648, %v885
        %910 = vst.msk [vmem:[#allocation2 + $0x18] sm:$0xff] %vm648, %v888
        %911 = vst.msk [vmem:[#allocation2 + $0x20] sm:$0xff] %vm648, %v893
        %912 = vst.msk [vmem:[#allocation2 + $0x28] sm:$0xff] %vm648, %v896
        %913 = vst.msk [vmem:[#allocation2 + $0x30] sm:$0xff] %vm648, %v901
        %914 = vst.msk [vmem:[#allocation2 + $0x38] sm:$0xff] %vm648, %v904
        %915 = vrot.lane.b32.xlu0 %v628, 120
        %v916 = vpop.permute.xlu0 %915
        %917 = vrot.lane.b32.xlu0 %v630, 120
        %v918 = vpop.permute.xlu0 %917
        %919 = vrot.lane.b32.xlu0 %v632, 120
        %v920 = vpop.permute.xlu0 %919
        %921 = vrot.lane.b32.xlu0 %v634, 120
        %v922 = vpop.permute.xlu0 %921
        %923 = vrot.lane.b32.xlu0 %v628, 56
        %v924 = vpop.permute.xlu0 %923
        %925 = vrot.lane.b32.xlu0 %v630, 56
        %v926 = vpop.permute.xlu0 %925
        %927 = vrot.lane.b32.xlu0 %v632, 56
        %v928 = vpop.permute.xlu0 %927
        %929 = vrot.lane.b32.xlu0 %v634, 56
        %v930 = vpop.permute.xlu0 %929
        %v932 = vsel %vm648, %v916, 0
        %v935 = vsel %vm648, %v918, 0
        %v938 = vsel %vm648, %v920, 0
        %v941 = vsel %vm648, %v922, 0
        %v944 = vsel %vm648, %v924, 0
        %v947 = vsel %vm648, %v926, 0
        %v950 = vsel %vm648, %v928, 0
        %v953 = vsel %vm648, %v930, 0
        %955 = vmatprep.subr.bf16.mxu0 0
        %956 = vmatpush1.bf16.xpose.msra.mxu0 %v944
        %957 = vmatprep.subr.bf16.mxu0 0
        %958 = vmatpush1.bf16.xpose.msra.mxu0 %v947
        %959 = vmatprep.subr.bf16.mxu0 0
        %960 = vmatpush1.bf16.xpose.msra.mxu0 %v950
        %961 = vmatprep.subr.bf16.mxu0 0
        %962 = vmatpush1.bf16.xpose.msra.mxu0 %v953
        %963 = vmatprep.subr.bf16.mxu0 0
        %964 = vmatpush1.bf16.xpose.msra.mxu0 0
        %965 = vmatprep.subr.bf16.mxu0 0
        %966 = vmatpush1.bf16.xpose.msra.mxu0 0
        %967 = vmatprep.subr.bf16.mxu0 0
        %968 = vmatpush1.bf16.xpose.msra.mxu0 0
        %969 = vmatprep.subr.bf16.mxu0 0
        %970 = vmatpush1.bf16.xpose.msra.mxu0 0
        %971 = vmatprep.subr.bf16.mxu0 0
        %972 = vmatpush1.bf16.xpose.msra.mxu0 0
        %973 = vmatprep.subr.bf16.mxu0 0
        %974 = vmatpush1.bf16.xpose.msra.mxu0 0
        %975 = vmatprep.subr.bf16.mxu0 0
        %976 = vmatpush1.bf16.xpose.msra.mxu0 0
        %977 = vmatprep.subr.bf16.mxu0 0
        %978 = vmatpush1.bf16.xpose.msra.mxu0 0
        %979 = vmatprep.subr.bf16.mxu0 0
        %980 = vmatpush1.bf16.xpose.msra.mxu0 0
        %981 = vmatprep.subr.bf16.mxu0 0
        %982 = vmatpush1.bf16.xpose.msra.mxu0 0
        %983 = vmatprep.subr.bf16.mxu0 0
        %984 = vmatpush1.bf16.xpose.msra.mxu0 0
        %985 = vmatprep.subr.bf16.mxu0 0
        %986 = vmatpush1.bf16.xpose.msra.mxu0 0
        %987 = vmatprep.mubr.bf16.mxu0 0
        %988 = vmatmul.mubr.bf16.gmra.mrb[0].mxu0 %v932
        %v989 = vpop.f32.mrb[0].mxu0
        %v990 = vadd.f32 0.0, %v989
        %v991 = vpop.f32.mrb[0].mxu0
        %v992 = vpop.f32.mrb[0].mxu0
        %v993 = vadd.f32 0.0, %v992
        %v994 = vpop.f32.mrb[0].mxu0
        %995 = vmatprep.mubr.bf16.mxu0 0
        %996 = vmatmul.mubr.bf16.gmra.mrb[0].mxu0 %v935
        %v997 = vpop.f32.mrb[0].mxu0
        %v998 = vadd.f32 0.0, %v997
        %v999 = vpop.f32.mrb[0].mxu0
        %v1000 = vpop.f32.mrb[0].mxu0
        %v1001 = vadd.f32 0.0, %v1000
        %v1002 = vpop.f32.mrb[0].mxu0
        %1003 = vmatprep.mubr.bf16.mxu0 0
        %1004 = vmatmul.mubr.bf16.gmra.mrb[0].mxu0 %v938
        %v1005 = vpop.f32.mrb[0].mxu0
        %v1006 = vadd.f32 0.0, %v1005
        %v1007 = vpop.f32.mrb[0].mxu0
        %v1008 = vpop.f32.mrb[0].mxu0
        %v1009 = vadd.f32 0.0, %v1008
        %v1010 = vpop.f32.mrb[0].mxu0
        %1011 = vmatprep.mubr.bf16.mxu0 0
        %1012 = vmatmul.mubr.bf16.gmra.mrb[0].mxu0 %v941
        %v1013 = vpop.f32.mrb[0].mxu0
        %v1014 = vadd.f32 0.0, %v1013
        %v1015 = vpop.f32.mrb[0].mxu0
        %v1016 = vpop.f32.mrb[0].mxu0
        %v1017 = vadd.f32 0.0, %v1016
        %v1018 = vpop.f32.mrb[0].mxu0
        %1019 = vdwg.mxu0
        %v1020 = vsel %vm542, %v990, -inf
        %1021 = vmax.xlane.f32.xlu0 %v1020
        %v1022 = vpop.xlane.xlu0 %1021
        %v1023 = vsel %vm542, %v993, -inf
        %1024 = vmax.xlane.f32.xlu0 %v1023
        %v1025 = vpop.xlane.xlu0 %1024
        %v1026 = vsel %vm542, %v998, -inf
        %1027 = vmax.xlane.f32.xlu0 %v1026
        %v1028 = vpop.xlane.xlu0 %1027
        %v1029 = vsel %vm542, %v1001, -inf
        %1030 = vmax.xlane.f32.xlu0 %v1029
        %v1031 = vpop.xlane.xlu0 %1030
        %v1032 = vsel %vm542, %v1006, -inf
        %1033 = vmax.xlane.f32.xlu0 %v1032
        %v1034 = vpop.xlane.xlu0 %1033
        %v1035 = vsel %vm542, %v1009, -inf
        %1036 = vmax.xlane.f32.xlu0 %v1035
        %v1037 = vpop.xlane.xlu0 %1036
        %v1038 = vsel %vm542, %v1014, -inf
        %1039 = vmax.xlane.f32.xlu0 %v1038
        %v1040 = vpop.xlane.xlu0 %1039
        %v1041 = vsel %vm542, %v1017, -inf
        %1042 = vmax.xlane.f32.xlu0 %v1041
        %v1043 = vpop.xlane.xlu0 %1042
        %v1044 = vsub.f32 %v990, %v1022
        %v1045 = vsub.f32 %v993, %v1025
        %v1046 = vsub.f32 %v998, %v1028
        %v1047 = vsub.f32 %v1001, %v1031
        %v1048 = vsub.f32 %v1006, %v1034
        %v1049 = vsub.f32 %v1009, %v1037
        %v1050 = vsub.f32 %v1014, %v1040
        %v1051 = vsub.f32 %v1017, %v1043
        %v1052 = vmul.f32 %v1044, 1.442695
        %v1053 = vpow.pop %v1052
        %v1054 = vmul.f32 %v1045, 1.442695
        %v1055 = vpow.pop %v1054
        %v1056 = vmul.f32 %v1046, 1.442695
        %v1057 = vpow.pop %v1056
        %v1058 = vmul.f32 %v1047, 1.442695
        %v1059 = vpow.pop %v1058
        %v1060 = vmul.f32 %v1048, 1.442695
        %v1061 = vpow.pop %v1060
        %v1062 = vmul.f32 %v1049, 1.442695
        %v1063 = vpow.pop %v1062
        %v1064 = vmul.f32 %v1050, 1.442695
        %v1065 = vpow.pop %v1064
        %v1066 = vmul.f32 %v1051, 1.442695
        %v1067 = vpow.pop %v1066
        %v1068 = vsel %vm542, %v1053, 0.0
        %1069 = vadd.xlane.f32.xlu0 %v1068
        %v1070 = vpop.xlane.xlu0 %1069
        %v1071 = vsel %vm542, %v1055, 0.0
        %1072 = vadd.xlane.f32.xlu0 %v1071
        %v1073 = vpop.xlane.xlu0 %1072
        %v1074 = vsel %vm542, %v1057, 0.0
        %1075 = vadd.xlane.f32.xlu0 %v1074
        %v1076 = vpop.xlane.xlu0 %1075
        %v1077 = vsel %vm542, %v1059, 0.0
        %1078 = vadd.xlane.f32.xlu0 %v1077
        %v1079 = vpop.xlane.xlu0 %1078
        %v1080 = vsel %vm542, %v1061, 0.0
        %1081 = vadd.xlane.f32.xlu0 %v1080
        %v1082 = vpop.xlane.xlu0 %1081
        %v1083 = vsel %vm542, %v1063, 0.0
        %1084 = vadd.xlane.f32.xlu0 %v1083
        %v1085 = vpop.xlane.xlu0 %1084
        %v1086 = vsel %vm542, %v1065, 0.0
        %1087 = vadd.xlane.f32.xlu0 %v1086
        %v1088 = vpop.xlane.xlu0 %1087
        %v1089 = vsel %vm542, %v1067, 0.0
        %1090 = vadd.xlane.f32.xlu0 %v1089
        %v1091 = vpop.xlane.xlu0 %1090
        %v1092 = vrcp.pop %v1070
        %v1093 = vrcp.pop %v1073
        %v1094 = vrcp.pop %v1076
        %v1095 = vrcp.pop %v1079
        %v1096 = vrcp.pop %v1082
        %v1097 = vrcp.pop %v1085
        %v1098 = vrcp.pop %v1088
        %v1099 = vrcp.pop %v1091
        %v1100 = vmul.f32 %v1053, %v1092
        %v1101 = vmul.f32 %v1055, %v1093
        %v1102 = vmul.f32 %v1057, %v1094
        %v1103 = vmul.f32 %v1059, %v1095
        %v1104 = vmul.f32 %v1061, %v1096
        %v1105 = vmul.f32 %v1063, %v1097
        %v1106 = vmul.f32 %v1065, %v1098
        %v1107 = vmul.f32 %v1067, %v1099
        %v1108 = vpack.c.bf16 %v1101, %v1100
        %v1109 = vpack.c.bf16 %v1103, %v1102
        %v1110 = vpack.c.bf16 %v1105, %v1104
        %v1111 = vpack.c.bf16 %v1107, %v1106
        %1116 = vrot.lane.b32.xlu0 %v629, 120
        %v1117 = vpop.permute.xlu0 %1116
        %1118 = vrot.lane.b32.xlu0 %v631, 120
        %v1119 = vpop.permute.xlu0 %1118
        %1120 = vrot.lane.b32.xlu0 %v633, 120
        %v1121 = vpop.permute.xlu0 %1120
        %1122 = vrot.lane.b32.xlu0 %v635, 120
        %v1123 = vpop.permute.xlu0 %1122
        %v1129 = vsel %vm542, %v1108, 0
        %v1132 = vsel %vm542, %v1109, 0
        %v1135 = vsel %vm542, %v1110, 0
        %v1138 = vsel %vm542, %v1111, 0
        %1140 = vmatprep.subr.bf16.mxu0 0
        %1141 = vmatpush1.bf16.msra.mxu0 %v1117
        %1142 = vmatprep.subr.bf16.mxu0 0
        %1143 = vmatpush1.bf16.msra.mxu0 %v1119
        %1144 = vmatprep.subr.bf16.mxu0 0
        %1145 = vmatpush1.bf16.msra.mxu0 %v1121
        %1146 = vmatprep.subr.bf16.mxu0 0
        %1147 = vmatpush1.bf16.msra.mxu0 %v1123
        %1148 = vmatprep.subr.bf16.mxu0 0
        %1149 = vmatpush1.bf16.msra.mxu0 0
        %1150 = vmatprep.subr.bf16.mxu0 0
        %1151 = vmatpush1.bf16.msra.mxu0 0
        %1152 = vmatprep.subr.bf16.mxu0 0
        %1153 = vmatpush1.bf16.msra.mxu0 0
        %1154 = vmatprep.subr.bf16.mxu0 0
        %1155 = vmatpush1.bf16.msra.mxu0 0
        %1156 = vmatprep.subr.bf16.mxu0 0
        %1157 = vmatpush1.bf16.msra.mxu0 0
        %1158 = vmatprep.subr.bf16.mxu0 0
        %1159 = vmatpush1.bf16.msra.mxu0 0
        %1160 = vmatprep.subr.bf16.mxu0 0
        %1161 = vmatpush1.bf16.msra.mxu0 0
        %1162 = vmatprep.subr.bf16.mxu0 0
        %1163 = vmatpush1.bf16.msra.mxu0 0
        %1164 = vmatprep.subr.bf16.mxu0 0
        %1165 = vmatpush1.bf16.msra.mxu0 0
        %1166 = vmatprep.subr.bf16.mxu0 0
        %1167 = vmatpush1.bf16.msra.mxu0 0
        %1168 = vmatprep.subr.bf16.mxu0 0
        %1169 = vmatpush1.bf16.msra.mxu0 0
        %1170 = vmatprep.subr.bf16.mxu0 0
        %1171 = vmatpush1.bf16.msra.mxu0 0
        %1172 = vmatprep.mubr.bf16.mxu0 0
        %1173 = vmatmul.mubr.bf16.gmra.mrb[0].mxu0 %v1129
        %v1174 = vpop.f32.mrb[0].mxu0
        %v1175 = vadd.f32 0.0, %v1174
        %v1176 = vpop.f32.mrb[0].mxu0
        %v1177 = vpop.f32.mrb[0].mxu0
        %v1178 = vadd.f32 0.0, %v1177
        %v1179 = vpop.f32.mrb[0].mxu0
        %1180 = vmatprep.mubr.bf16.mxu0 0
        %1181 = vmatmul.mubr.bf16.gmra.mrb[0].mxu0 %v1132
        %v1182 = vpop.f32.mrb[0].mxu0
        %v1183 = vadd.f32 0.0, %v1182
        %v1184 = vpop.f32.mrb[0].mxu0
        %v1185 = vpop.f32.mrb[0].mxu0
        %v1186 = vadd.f32 0.0, %v1185
        %v1187 = vpop.f32.mrb[0].mxu0
        %1188 = vmatprep.mubr.bf16.mxu0 0
        %1189 = vmatmul.mubr.bf16.gmra.mrb[0].mxu0 %v1135
        %v1190 = vpop.f32.mrb[0].mxu0
        %v1191 = vadd.f32 0.0, %v1190
        %v1192 = vpop.f32.mrb[0].mxu0
        %v1193 = vpop.f32.mrb[0].mxu0
        %v1194 = vadd.f32 0.0, %v1193
        %v1195 = vpop.f32.mrb[0].mxu0
        %1196 = vmatprep.mubr.bf16.mxu0 0
        %1197 = vmatmul.mubr.bf16.gmra.mrb[0].mxu0 %v1138
        %v1198 = vpop.f32.mrb[0].mxu0
        %v1199 = vadd.f32 0.0, %v1198
        %v1200 = vpop.f32.mrb[0].mxu0
        %v1201 = vpop.f32.mrb[0].mxu0
        %v1202 = vadd.f32 0.0, %v1201
        %v1203 = vpop.f32.mrb[0].mxu0
        %1204 = vdwg.mxu0
        %1213 = vrot.lane.b32.xlu0 %v1175, 8
        %v1214 = vpop.permute.xlu0 %1213
        %1215 = vrot.lane.b32.xlu0 %v1178, 8
        %v1216 = vpop.permute.xlu0 %1215
        %1217 = vrot.lane.b32.xlu0 %v1183, 8
        %v1218 = vpop.permute.xlu0 %1217
        %1219 = vrot.lane.b32.xlu0 %v1186, 8
        %v1220 = vpop.permute.xlu0 %1219
        %1221 = vrot.lane.b32.xlu0 %v1191, 8
        %v1222 = vpop.permute.xlu0 %1221
        %1223 = vrot.lane.b32.xlu0 %v1194, 8
        %v1224 = vpop.permute.xlu0 %1223
        %1225 = vrot.lane.b32.xlu0 %v1199, 8
        %v1226 = vpop.permute.xlu0 %1225
        %1227 = vrot.lane.b32.xlu0 %v1202, 8
        %v1228 = vpop.permute.xlu0 %1227
        %vm1237 = vcmask 130112
        %1238 = vst.msk [vmem:[#allocation2] sm:$0xff] %vm1237, %v1214
        %1239 = vst.msk [vmem:[#allocation2 + $0x8] sm:$0xff] %vm1237, %v1216
        %1240 = vst.msk [vmem:[#allocation2 + $0x10] sm:$0xff] %vm1237, %v1218
        %1241 = vst.msk [vmem:[#allocation2 + $0x18] sm:$0xff] %vm1237, %v1220
        %1242 = vst.msk [vmem:[#allocation2 + $0x20] sm:$0xff] %vm1237, %v1222
        %1243 = vst.msk [vmem:[#allocation2 + $0x28] sm:$0xff] %vm1237, %v1224
        %1244 = vst.msk [vmem:[#allocation2 + $0x30] sm:$0xff] %vm1237, %v1226
        %1245 = vst.msk [vmem:[#allocation2 + $0x38] sm:$0xff] %vm1237, %v1228
        %1246 = vrot.lane.b32.xlu0 %v628, 112
        %v1247 = vpop.permute.xlu0 %1246
        %1248 = vrot.lane.b32.xlu0 %v630, 112
        %v1249 = vpop.permute.xlu0 %1248
        %1250 = vrot.lane.b32.xlu0 %v632, 112
        %v1251 = vpop.permute.xlu0 %1250
        %1252 = vrot.lane.b32.xlu0 %v634, 112
        %v1253 = vpop.permute.xlu0 %1252
        %1254 = vrot.lane.b32.xlu0 %v628, 48
        %v1255 = vpop.permute.xlu0 %1254
        %1256 = vrot.lane.b32.xlu0 %v630, 48
        %v1257 = vpop.permute.xlu0 %1256
        %1258 = vrot.lane.b32.xlu0 %v632, 48
        %v1259 = vpop.permute.xlu0 %1258
        %1260 = vrot.lane.b32.xlu0 %v634, 48
        %v1261 = vpop.permute.xlu0 %1260
        %v1263 = vsel %vm648, %v1247, 0
        %v1266 = vsel %vm648, %v1249, 0
        %v1269 = vsel %vm648, %v1251, 0
        %v1272 = vsel %vm648, %v1253, 0
        %v1275 = vsel %vm648, %v1255, 0
        %v1278 = vsel %vm648, %v1257, 0
        %v1281 = vsel %vm648, %v1259, 0
        %v1284 = vsel %vm648, %v1261, 0
        %1286 = vmatprep.subr.bf16.mxu0 0
        %1287 = vmatpush1.bf16.xpose.msra.mxu0 %v1275
        %1288 = vmatprep.subr.bf16.mxu0 0
        %1289 = vmatpush1.bf16.xpose.msra.mxu0 %v1278
        %1290 = vmatprep.subr.bf16.mxu0 0
        %1291 = vmatpush1.bf16.xpose.msra.mxu0 %v1281
        %1292 = vmatprep.subr.bf16.mxu0 0
        %1293 = vmatpush1.bf16.xpose.msra.mxu0 %v1284
        %1294 = vmatprep.subr.bf16.mxu0 0
        %1295 = vmatpush1.bf16.xpose.msra.mxu0 0
        %1296 = vmatprep.subr.bf16.mxu0 0
        %1297 = vmatpush1.bf16.xpose.msra.mxu0 0
        %1298 = vmatprep.subr.bf16.mxu0 0
        %1299 = vmatpush1.bf16.xpose.msra.mxu0 0
        %1300 = vmatprep.subr.bf16.mxu0 0
        %1301 = vmatpush1.bf16.xpose.msra.mxu0 0
        %1302 = vmatprep.subr.bf16.mxu0 0
        %1303 = vmatpush1.bf16.xpose.msra.mxu0 0
        %1304 = vmatprep.subr.bf16.mxu0 0
        %1305 = vmatpush1.bf16.xpose.msra.mxu0 0
        %1306 = vmatprep.subr.bf16.mxu0 0
        %1307 = vmatpush1.bf16.xpose.msra.mxu0 0
        %1308 = vmatprep.subr.bf16.mxu0 0
        %1309 = vmatpush1.bf16.xpose.msra.mxu0 0
        %1310 = vmatprep.subr.bf16.mxu0 0
        %1311 = vmatpush1.bf16.xpose.msra.mxu0 0
        %1312 = vmatprep.subr.bf16.mxu0 0
        %1313 = vmatpush1.bf16.xpose.msra.mxu0 0
        %1314 = vmatprep.subr.bf16.mxu0 0
        %1315 = vmatpush1.bf16.xpose.msra.mxu0 0
        %1316 = vmatprep.subr.bf16.mxu0 0
        %1317 = vmatpush1.bf16.xpose.msra.mxu0 0
        %1318 = vmatprep.mubr.bf16.mxu0 0
        %1319 = vmatmul.mubr.bf16.gmra.mrb[0].mxu0 %v1263
        %v1320 = vpop.f32.mrb[0].mxu0
        %v1321 = vadd.f32 0.0, %v1320
        %v1322 = vpop.f32.mrb[0].mxu0
        %v1323 = vpop.f32.mrb[0].mxu0
        %v1324 = vadd.f32 0.0, %v1323
        %v1325 = vpop.f32.mrb[0].mxu0
        %1326 = vmatprep.mubr.bf16.mxu0 0
        %1327 = vmatmul.mubr.bf16.gmra.mrb[0].mxu0 %v1266
        %v1328 = vpop.f32.mrb[0].mxu0
        %v1329 = vadd.f32 0.0, %v1328
        %v1330 = vpop.f32.mrb[0].mxu0
        %v1331 = vpop.f32.mrb[0].mxu0
        %v1332 = vadd.f32 0.0, %v1331
        %v1333 = vpop.f32.mrb[0].mxu0
        %1334 = vmatprep.mubr.bf16.mxu0 0
        %1335 = vmatmul.mubr.bf16.gmra.mrb[0].mxu0 %v1269
        %v1336 = vpop.f32.mrb[0].mxu0
        %v1337 = vadd.f32 0.0, %v1336
        %v1338 = vpop.f32.mrb[0].mxu0
        %v1339 = vpop.f32.mrb[0].mxu0
        %v1340 = vadd.f32 0.0, %v1339
        %v1341 = vpop.f32.mrb[0].mxu0
        %1342 = vmatprep.mubr.bf16.mxu0 0
        %1343 = vmatmul.mubr.bf16.gmra.mrb[0].mxu0 %v1272
        %v1344 = vpop.f32.mrb[0].mxu0
        %v1345 = vadd.f32 0.0, %v1344
        %v1346 = vpop.f32.mrb[0].mxu0
        %v1347 = vpop.f32.mrb[0].mxu0
        %v1348 = vadd.f32 0.0, %v1347
        %v1349 = vpop.f32.mrb[0].mxu0
        %1350 = vdwg.mxu0
        %v1351 = vsel %vm542, %v1321, -inf
        %1352 = vmax.xlane.f32.xlu0 %v1351
        %v1353 = vpop.xlane.xlu0 %1352
        %v1354 = vsel %vm542, %v1324, -inf
        %1355 = vmax.xlane.f32.xlu0 %v1354
        %v1356 = vpop.xlane.xlu0 %1355
        %v1357 = vsel %vm542, %v1329, -inf
        %1358 = vmax.xlane.f32.xlu0 %v1357
        %v1359 = vpop.xlane.xlu0 %1358
        %v1360 = vsel %vm542, %v1332, -inf
        %1361 = vmax.xlane.f32.xlu0 %v1360
        %v1362 = vpop.xlane.xlu0 %1361
        %v1363 = vsel %vm542, %v1337, -inf
        %1364 = vmax.xlane.f32.xlu0 %v1363
        %v1365 = vpop.xlane.xlu0 %1364
        %v1366 = vsel %vm542, %v1340, -inf
        %1367 = vmax.xlane.f32.xlu0 %v1366
        %v1368 = vpop.xlane.xlu0 %1367
        %v1369 = vsel %vm542, %v1345, -inf
        %1370 = vmax.xlane.f32.xlu0 %v1369
        %v1371 = vpop.xlane.xlu0 %1370
        %v1372 = vsel %vm542, %v1348, -inf
        %1373 = vmax.xlane.f32.xlu0 %v1372
        %v1374 = vpop.xlane.xlu0 %1373
        %v1375 = vsub.f32 %v1321, %v1353
        %v1376 = vsub.f32 %v1324, %v1356
        %v1377 = vsub.f32 %v1329, %v1359
        %v1378 = vsub.f32 %v1332, %v1362
        %v1379 = vsub.f32 %v1337, %v1365
        %v1380 = vsub.f32 %v1340, %v1368
        %v1381 = vsub.f32 %v1345, %v1371
        %v1382 = vsub.f32 %v1348, %v1374
        %v1383 = vmul.f32 %v1375, 1.442695
        %v1384 = vpow.pop %v1383
        %v1385 = vmul.f32 %v1376, 1.442695
        %v1386 = vpow.pop %v1385
        %v1387 = vmul.f32 %v1377, 1.442695
        %v1388 = vpow.pop %v1387
        %v1389 = vmul.f32 %v1378, 1.442695
        %v1390 = vpow.pop %v1389
        %v1391 = vmul.f32 %v1379, 1.442695
        %v1392 = vpow.pop %v1391
        %v1393 = vmul.f32 %v1380, 1.442695
        %v1394 = vpow.pop %v1393
        %v1395 = vmul.f32 %v1381, 1.442695
        %v1396 = vpow.pop %v1395
        %v1397 = vmul.f32 %v1382, 1.442695
        %v1398 = vpow.pop %v1397
        %v1399 = vsel %vm542, %v1384, 0.0
        %1400 = vadd.xlane.f32.xlu0 %v1399
        %v1401 = vpop.xlane.xlu0 %1400
        %v1402 = vsel %vm542, %v1386, 0.0
        %1403 = vadd.xlane.f32.xlu0 %v1402
        %v1404 = vpop.xlane.xlu0 %1403
        %v1405 = vsel %vm542, %v1388, 0.0
        %1406 = vadd.xlane.f32.xlu0 %v1405
        %v1407 = vpop.xlane.xlu0 %1406
        %v1408 = vsel %vm542, %v1390, 0.0
        %1409 = vadd.xlane.f32.xlu0 %v1408
        %v1410 = vpop.xlane.xlu0 %1409
        %v1411 = vsel %vm542, %v1392, 0.0
        %1412 = vadd.xlane.f32.xlu0 %v1411
        %v1413 = vpop.xlane.xlu0 %1412
        %v1414 = vsel %vm542, %v1394, 0.0
        %1415 = vadd.xlane.f32.xlu0 %v1414
        %v1416 = vpop.xlane.xlu0 %1415
        %v1417 = vsel %vm542, %v1396, 0.0
        %1418 = vadd.xlane.f32.xlu0 %v1417
        %v1419 = vpop.xlane.xlu0 %1418
        %v1420 = vsel %vm542, %v1398, 0.0
        %1421 = vadd.xlane.f32.xlu0 %v1420
        %v1422 = vpop.xlane.xlu0 %1421
        %v1423 = vrcp.pop %v1401
        %v1424 = vrcp.pop %v1404
        %v1425 = vrcp.pop %v1407
        %v1426 = vrcp.pop %v1410
        %v1427 = vrcp.pop %v1413
        %v1428 = vrcp.pop %v1416
        %v1429 = vrcp.pop %v1419
        %v1430 = vrcp.pop %v1422
        %v1431 = vmul.f32 %v1384, %v1423
        %v1432 = vmul.f32 %v1386, %v1424
        %v1433 = vmul.f32 %v1388, %v1425
        %v1434 = vmul.f32 %v1390, %v1426
        %v1435 = vmul.f32 %v1392, %v1427
        %v1436 = vmul.f32 %v1394, %v1428
        %v1437 = vmul.f32 %v1396, %v1429
        %v1438 = vmul.f32 %v1398, %v1430
        %v1439 = vpack.c.bf16 %v1432, %v1431
        %v1440 = vpack.c.bf16 %v1434, %v1433
        %v1441 = vpack.c.bf16 %v1436, %v1435
        %v1442 = vpack.c.bf16 %v1438, %v1437
        %1443 = vrot.lane.b32.xlu0 %v629, 112
        %v1444 = vpop.permute.xlu0 %1443
        %1445 = vrot.lane.b32.xlu0 %v631, 112
        %v1446 = vpop.permute.xlu0 %1445
        %1447 = vrot.lane.b32.xlu0 %v633, 112
        %v1448 = vpop.permute.xlu0 %1447
        %1449 = vrot.lane.b32.xlu0 %v635, 112
        %v1450 = vpop.permute.xlu0 %1449
        %v1456 = vsel %vm542, %v1439, 0
        %v1459 = vsel %vm542, %v1440, 0
        %v1462 = vsel %vm542, %v1441, 0
        %v1465 = vsel %vm542, %v1442, 0
        %1467 = vmatprep.subr.bf16.mxu0 0
        %1468 = vmatpush1.bf16.msra.mxu0 %v1444
        %1469 = vmatprep.subr.bf16.mxu0 0
        %1470 = vmatpush1.bf16.msra.mxu0 %v1446
        %1471 = vmatprep.subr.bf16.mxu0 0
        %1472 = vmatpush1.bf16.msra.mxu0 %v1448
        %1473 = vmatprep.subr.bf16.mxu0 0
        %1474 = vmatpush1.bf16.msra.mxu0 %v1450
        %1475 = vmatprep.subr.bf16.mxu0 0
        %1476 = vmatpush1.bf16.msra.mxu0 0
        %1477 = vmatprep.subr.bf16.mxu0 0
        %1478 = vmatpush1.bf16.msra.mxu0 0
        %1479 = vmatprep.subr.bf16.mxu0 0
        %1480 = vmatpush1.bf16.msra.mxu0 0
        %1481 = vmatprep.subr.bf16.mxu0 0
        %1482 = vmatpush1.bf16.msra.mxu0 0
        %1483 = vmatprep.subr.bf16.mxu0 0
        %1484 = vmatpush1.bf16.msra.mxu0 0
        %1485 = vmatprep.subr.bf16.mxu0 0
        %1486 = vmatpush1.bf16.msra.mxu0 0
        %1487 = vmatprep.subr.bf16.mxu0 0
        %1488 = vmatpush1.bf16.msra.mxu0 0
        %1489 = vmatprep.subr.bf16.mxu0 0
        %1490 = vmatpush1.bf16.msra.mxu0 0
        %1491 = vmatprep.subr.bf16.mxu0 0
        %1492 = vmatpush1.bf16.msra.mxu0 0
        %1493 = vmatprep.subr.bf16.mxu0 0
        %1494 = vmatpush1.bf16.msra.mxu0 0
        %1495 = vmatprep.subr.bf16.mxu0 0
        %1496 = vmatpush1.bf16.msra.mxu0 0
        %1497 = vmatprep.subr.bf16.mxu0 0
        %1498 = vmatpush1.bf16.msra.mxu0 0
        %1499 = vmatprep.mubr.bf16.mxu0 0
        %1500 = vmatmul.mubr.bf16.gmra.mrb[0].mxu0 %v1456
        %v1501 = vpop.f32.mrb[0].mxu0
        %v1502 = vadd.f32 0.0, %v1501
        %v1503 = vpop.f32.mrb[0].mxu0
        %v1504 = vpop.f32.mrb[0].mxu0
        %v1505 = vadd.f32 0.0, %v1504
        %v1506 = vpop.f32.mrb[0].mxu0
        %1507 = vmatprep.mubr.bf16.mxu0 0
        %1508 = vmatmul.mubr.bf16.gmra.mrb[0].mxu0 %v1459
        %v1509 = vpop.f32.mrb[0].mxu0
        %v1510 = vadd.f32 0.0, %v1509
        %v1511 = vpop.f32.mrb[0].mxu0
        %v1512 = vpop.f32.mrb[0].mxu0
        %v1513 = vadd.f32 0.0, %v1512
        %v1514 = vpop.f32.mrb[0].mxu0
        %1515 = vmatprep.mubr.bf16.mxu0 0
        %1516 = vmatmul.mubr.bf16.gmra.mrb[0].mxu0 %v1462
        %v1517 = vpop.f32.mrb[0].mxu0
        %v1518 = vadd.f32 0.0, %v1517
        %v1519 = vpop.f32.mrb[0].mxu0
        %v1520 = vpop.f32.mrb[0].mxu0
        %v1521 = vadd.f32 0.0, %v1520
        %v1522 = vpop.f32.mrb[0].mxu0
        %1523 = vmatprep.mubr.bf16.mxu0 0
        %1524 = vmatmul.mubr.bf16.gmra.mrb[0].mxu0 %v1465
        %v1525 = vpop.f32.mrb[0].mxu0
        %v1526 = vadd.f32 0.0, %v1525
        %v1527 = vpop.f32.mrb[0].mxu0
        %v1528 = vpop.f32.mrb[0].mxu0
        %v1529 = vadd.f32 0.0, %v1528
        %v1530 = vpop.f32.mrb[0].mxu0
        %1531 = vdwg.mxu0
        %1540 = vrot.lane.b32.xlu0 %v1502, 16
        %v1541 = vpop.permute.xlu0 %1540
        %1542 = vrot.lane.b32.xlu0 %v1505, 16
        %v1543 = vpop.permute.xlu0 %1542
        %1544 = vrot.lane.b32.xlu0 %v1510, 16
        %v1545 = vpop.permute.xlu0 %1544
        %1546 = vrot.lane.b32.xlu0 %v1513, 16
        %v1547 = vpop.permute.xlu0 %1546
        %1548 = vrot.lane.b32.xlu0 %v1518, 16
        %v1549 = vpop.permute.xlu0 %1548
        %1550 = vrot.lane.b32.xlu0 %v1521, 16
        %v1551 = vpop.permute.xlu0 %1550
        %1552 = vrot.lane.b32.xlu0 %v1526, 16
        %v1553 = vpop.permute.xlu0 %1552
        %1554 = vrot.lane.b32.xlu0 %v1529, 16
        %v1555 = vpop.permute.xlu0 %1554
        %vm1564 = vcmask 195712
        %1565 = vst.msk [vmem:[#allocation2] sm:$0xff] %vm1564, %v1541
        %1566 = vst.msk [vmem:[#allocation2 + $0x8] sm:$0xff] %vm1564, %v1543
        %1567 = vst.msk [vmem:[#allocation2 + $0x10] sm:$0xff] %vm1564, %v1545
        %1568 = vst.msk [vmem:[#allocation2 + $0x18] sm:$0xff] %vm1564, %v1547
        %1569 = vst.msk [vmem:[#allocation2 + $0x20] sm:$0xff] %vm1564, %v1549
        %1570 = vst.msk [vmem:[#allocation2 + $0x28] sm:$0xff] %vm1564, %v1551
        %1571 = vst.msk [vmem:[#allocation2 + $0x30] sm:$0xff] %vm1564, %v1553
        %1572 = vst.msk [vmem:[#allocation2 + $0x38] sm:$0xff] %vm1564, %v1555
        %1573 = vrot.lane.b32.xlu0 %v628, 104
        %v1574 = vpop.permute.xlu0 %1573
        %1575 = vrot.lane.b32.xlu0 %v630, 104
        %v1576 = vpop.permute.xlu0 %1575
        %1577 = vrot.lane.b32.xlu0 %v632, 104
        %v1578 = vpop.permute.xlu0 %1577
        %1579 = vrot.lane.b32.xlu0 %v634, 104
        %v1580 = vpop.permute.xlu0 %1579
        %1581 = vrot.lane.b32.xlu0 %v628, 40
        %v1582 = vpop.permute.xlu0 %1581
        %1583 = vrot.lane.b32.xlu0 %v630, 40
        %v1584 = vpop.permute.xlu0 %1583
        %1585 = vrot.lane.b32.xlu0 %v632, 40
        %v1586 = vpop.permute.xlu0 %1585
        %1587 = vrot.lane.b32.xlu0 %v634, 40
        %v1588 = vpop.permute.xlu0 %1587
        %v1590 = vsel %vm648, %v1574, 0
        %v1593 = vsel %vm648, %v1576, 0
        %v1596 = vsel %vm648, %v1578, 0
        %v1599 = vsel %vm648, %v1580, 0
        %v1602 = vsel %vm648, %v1582, 0
        %v1605 = vsel %vm648, %v1584, 0
        %v1608 = vsel %vm648, %v1586, 0
        %v1611 = vsel %vm648, %v1588, 0
        %1613 = vmatprep.subr.bf16.mxu0 0
        %1614 = vmatpush1.bf16.xpose.msra.mxu0 %v1602
        %1615 = vmatprep.subr.bf16.mxu0 0
        %1616 = vmatpush1.bf16.xpose.msra.mxu0 %v1605
        %1617 = vmatprep.subr.bf16.mxu0 0
        %1618 = vmatpush1.bf16.xpose.msra.mxu0 %v1608
        %1619 = vmatprep.subr.bf16.mxu0 0
        %1620 = vmatpush1.bf16.xpose.msra.mxu0 %v1611
        %1621 = vmatprep.subr.bf16.mxu0 0
        %1622 = vmatpush1.bf16.xpose.msra.mxu0 0
        %1623 = vmatprep.subr.bf16.mxu0 0
        %1624 = vmatpush1.bf16.xpose.msra.mxu0 0
        %1625 = vmatprep.subr.bf16.mxu0 0
        %1626 = vmatpush1.bf16.xpose.msra.mxu0 0
        %1627 = vmatprep.subr.bf16.mxu0 0
        %1628 = vmatpush1.bf16.xpose.msra.mxu0 0
        %1629 = vmatprep.subr.bf16.mxu0 0
        %1630 = vmatpush1.bf16.xpose.msra.mxu0 0
        %1631 = vmatprep.subr.bf16.mxu0 0
        %1632 = vmatpush1.bf16.xpose.msra.mxu0 0
        %1633 = vmatprep.subr.bf16.mxu0 0
        %1634 = vmatpush1.bf16.xpose.msra.mxu0 0
        %1635 = vmatprep.subr.bf16.mxu0 0
        %1636 = vmatpush1.bf16.xpose.msra.mxu0 0
        %1637 = vmatprep.subr.bf16.mxu0 0
        %1638 = vmatpush1.bf16.xpose.msra.mxu0 0
        %1639 = vmatprep.subr.bf16.mxu0 0
        %1640 = vmatpush1.bf16.xpose.msra.mxu0 0
        %1641 = vmatprep.subr.bf16.mxu0 0
        %1642 = vmatpush1.bf16.xpose.msra.mxu0 0
        %1643 = vmatprep.subr.bf16.mxu0 0
        %1644 = vmatpush1.bf16.xpose.msra.mxu0 0
        %1645 = vmatprep.mubr.bf16.mxu0 0
        %1646 = vmatmul.mubr.bf16.gmra.mrb[0].mxu0 %v1590
        %v1647 = vpop.f32.mrb[0].mxu0
        %v1648 = vadd.f32 0.0, %v1647
        %v1649 = vpop.f32.mrb[0].mxu0
        %v1650 = vpop.f32.mrb[0].mxu0
        %v1651 = vadd.f32 0.0, %v1650
        %v1652 = vpop.f32.mrb[0].mxu0
        %1653 = vmatprep.mubr.bf16.mxu0 0
        %1654 = vmatmul.mubr.bf16.gmra.mrb[0].mxu0 %v1593
        %v1655 = vpop.f32.mrb[0].mxu0
        %v1656 = vadd.f32 0.0, %v1655
        %v1657 = vpop.f32.mrb[0].mxu0
        %v1658 = vpop.f32.mrb[0].mxu0
        %v1659 = vadd.f32 0.0, %v1658
        %v1660 = vpop.f32.mrb[0].mxu0
        %1661 = vmatprep.mubr.bf16.mxu0 0
        %1662 = vmatmul.mubr.bf16.gmra.mrb[0].mxu0 %v1596
        %v1663 = vpop.f32.mrb[0].mxu0
        %v1664 = vadd.f32 0.0, %v1663
        %v1665 = vpop.f32.mrb[0].mxu0
        %v1666 = vpop.f32.mrb[0].mxu0
        %v1667 = vadd.f32 0.0, %v1666
        %v1668 = vpop.f32.mrb[0].mxu0
        %1669 = vmatprep.mubr.bf16.mxu0 0
        %1670 = vmatmul.mubr.bf16.gmra.mrb[0].mxu0 %v1599
        %v1671 = vpop.f32.mrb[0].mxu0
        %v1672 = vadd.f32 0.0, %v1671
        %v1673 = vpop.f32.mrb[0].mxu0
        %v1674 = vpop.f32.mrb[0].mxu0
        %v1675 = vadd.f32 0.0, %v1674
        %v1676 = vpop.f32.mrb[0].mxu0
        %1677 = vdwg.mxu0
        %v1678 = vsel %vm542, %v1648, -inf
        %1679 = vmax.xlane.f32.xlu0 %v1678
        %v1680 = vpop.xlane.xlu0 %1679
        %v1681 = vsel %vm542, %v1651, -inf
        %1682 = vmax.xlane.f32.xlu0 %v1681
        %v1683 = vpop.xlane.xlu0 %1682
        %v1684 = vsel %vm542, %v1656, -inf
        %1685 = vmax.xlane.f32.xlu0 %v1684
        %v1686 = vpop.xlane.xlu0 %1685
        %v1687 = vsel %vm542, %v1659, -inf
        %1688 = vmax.xlane.f32.xlu0 %v1687
        %v1689 = vpop.xlane.xlu0 %1688
        %v1690 = vsel %vm542, %v1664, -inf
        %1691 = vmax.xlane.f32.xlu0 %v1690
        %v1692 = vpop.xlane.xlu0 %1691
        %v1693 = vsel %vm542, %v1667, -inf
        %1694 = vmax.xlane.f32.xlu0 %v1693
        %v1695 = vpop.xlane.xlu0 %1694
        %v1696 = vsel %vm542, %v1672, -inf
        %1697 = vmax.xlane.f32.xlu0 %v1696
        %v1698 = vpop.xlane.xlu0 %1697
        %v1699 = vsel %vm542, %v1675, -inf
        %1700 = vmax.xlane.f32.xlu0 %v1699
        %v1701 = vpop.xlane.xlu0 %1700
        %v1702 = vsub.f32 %v1648, %v1680
        %v1703 = vsub.f32 %v1651, %v1683
        %v1704 = vsub.f32 %v1656, %v1686
        %v1705 = vsub.f32 %v1659, %v1689
        %v1706 = vsub.f32 %v1664, %v1692
        %v1707 = vsub.f32 %v1667, %v1695
        %v1708 = vsub.f32 %v1672, %v1698
        %v1709 = vsub.f32 %v1675, %v1701
        %v1710 = vmul.f32 %v1702, 1.442695
        %v1711 = vpow.pop %v1710
        %v1712 = vmul.f32 %v1703, 1.442695
        %v1713 = vpow.pop %v1712
        %v1714 = vmul.f32 %v1704, 1.442695
        %v1715 = vpow.pop %v1714
        %v1716 = vmul.f32 %v1705, 1.442695
        %v1717 = vpow.pop %v1716
        %v1718 = vmul.f32 %v1706, 1.442695
        %v1719 = vpow.pop %v1718
        %v1720 = vmul.f32 %v1707, 1.442695
        %v1721 = vpow.pop %v1720
        %v1722 = vmul.f32 %v1708, 1.442695
        %v1723 = vpow.pop %v1722
        %v1724 = vmul.f32 %v1709, 1.442695
        %v1725 = vpow.pop %v1724
        %v1726 = vsel %vm542, %v1711, 0.0
        %1727 = vadd.xlane.f32.xlu0 %v1726
        %v1728 = vpop.xlane.xlu0 %1727
        %v1729 = vsel %vm542, %v1713, 0.0
        %1730 = vadd.xlane.f32.xlu0 %v1729
        %v1731 = vpop.xlane.xlu0 %1730
        %v1732 = vsel %vm542, %v1715, 0.0
        %1733 = vadd.xlane.f32.xlu0 %v1732
        %v1734 = vpop.xlane.xlu0 %1733
        %v1735 = vsel %vm542, %v1717, 0.0
        %1736 = vadd.xlane.f32.xlu0 %v1735
        %v1737 = vpop.xlane.xlu0 %1736
        %v1738 = vsel %vm542, %v1719, 0.0
        %1739 = vadd.xlane.f32.xlu0 %v1738
        %v1740 = vpop.xlane.xlu0 %1739
        %v1741 = vsel %vm542, %v1721, 0.0
        %1742 = vadd.xlane.f32.xlu0 %v1741
        %v1743 = vpop.xlane.xlu0 %1742
        %v1744 = vsel %vm542, %v1723, 0.0
        %1745 = vadd.xlane.f32.xlu0 %v1744
        %v1746 = vpop.xlane.xlu0 %1745
        %v1747 = vsel %vm542, %v1725, 0.0
        %1748 = vadd.xlane.f32.xlu0 %v1747
        %v1749 = vpop.xlane.xlu0 %1748
        %v1750 = vrcp.pop %v1728
        %v1751 = vrcp.pop %v1731
        %v1752 = vrcp.pop %v1734
        %v1753 = vrcp.pop %v1737
        %v1754 = vrcp.pop %v1740
        %v1755 = vrcp.pop %v1743
        %v1756 = vrcp.pop %v1746
        %v1757 = vrcp.pop %v1749
        %v1758 = vmul.f32 %v1711, %v1750
        %v1759 = vmul.f32 %v1713, %v1751
        %v1760 = vmul.f32 %v1715, %v1752
        %v1761 = vmul.f32 %v1717, %v1753
        %v1762 = vmul.f32 %v1719, %v1754
        %v1763 = vmul.f32 %v1721, %v1755
        %v1764 = vmul.f32 %v1723, %v1756
        %v1765 = vmul.f32 %v1725, %v1757
        %v1766 = vpack.c.bf16 %v1759, %v1758
        %v1767 = vpack.c.bf16 %v1761, %v1760
        %v1768 = vpack.c.bf16 %v1763, %v1762
        %v1769 = vpack.c.bf16 %v1765, %v1764
        %1770 = vrot.lane.b32.xlu0 %v629, 104
        %v1771 = vpop.permute.xlu0 %1770
        %1772 = vrot.lane.b32.xlu0 %v631, 104
        %v1773 = vpop.permute.xlu0 %1772
        %1774 = vrot.lane.b32.xlu0 %v633, 104
        %v1775 = vpop.permute.xlu0 %1774
        %1776 = vrot.lane.b32.xlu0 %v635, 104
        %v1777 = vpop.permute.xlu0 %1776
        %v1783 = vsel %vm542, %v1766, 0
        %v1786 = vsel %vm542, %v1767, 0
        %v1789 = vsel %vm542, %v1768, 0
        %v1792 = vsel %vm542, %v1769, 0
        %1794 = vmatprep.subr.bf16.mxu0 0
        %1795 = vmatpush1.bf16.msra.mxu0 %v1771
        %1796 = vmatprep.subr.bf16.mxu0 0
        %1797 = vmatpush1.bf16.msra.mxu0 %v1773
        %1798 = vmatprep.subr.bf16.mxu0 0
        %1799 = vmatpush1.bf16.msra.mxu0 %v1775
        %1800 = vmatprep.subr.bf16.mxu0 0
        %1801 = vmatpush1.bf16.msra.mxu0 %v1777
        %1802 = vmatprep.subr.bf16.mxu0 0
        %1803 = vmatpush1.bf16.msra.mxu0 0
        %1804 = vmatprep.subr.bf16.mxu0 0
        %1805 = vmatpush1.bf16.msra.mxu0 0
        %1806 = vmatprep.subr.bf16.mxu0 0
        %1807 = vmatpush1.bf16.msra.mxu0 0
        %1808 = vmatprep.subr.bf16.mxu0 0
        %1809 = vmatpush1.bf16.msra.mxu0 0
        %1810 = vmatprep.subr.bf16.mxu0 0
        %1811 = vmatpush1.bf16.msra.mxu0 0
        %1812 = vmatprep.subr.bf16.mxu0 0
        %1813 = vmatpush1.bf16.msra.mxu0 0
        %1814 = vmatprep.subr.bf16.mxu0 0
        %1815 = vmatpush1.bf16.msra.mxu0 0
        %1816 = vmatprep.subr.bf16.mxu0 0
        %1817 = vmatpush1.bf16.msra.mxu0 0
        %1818 = vmatprep.subr.bf16.mxu0 0
        %1819 = vmatpush1.bf16.msra.mxu0 0
        %1820 = vmatprep.subr.bf16.mxu0 0
        %1821 = vmatpush1.bf16.msra.mxu0 0
        %1822 = vmatprep.subr.bf16.mxu0 0
        %1823 = vmatpush1.bf16.msra.mxu0 0
        %1824 = vmatprep.subr.bf16.mxu0 0
        %1825 = vmatpush1.bf16.msra.mxu0 0
        %1826 = vmatprep.mubr.bf16.mxu0 0
        %1827 = vmatmul.mubr.bf16.gmra.mrb[0].mxu0 %v1783
        %v1828 = vpop.f32.mrb[0].mxu0
        %v1829 = vadd.f32 0.0, %v1828
        %v1830 = vpop.f32.mrb[0].mxu0
        %v1831 = vpop.f32.mrb[0].mxu0
        %v1832 = vadd.f32 0.0, %v1831
        %v1833 = vpop.f32.mrb[0].mxu0
        %1834 = vmatprep.mubr.bf16.mxu0 0
        %1835 = vmatmul.mubr.bf16.gmra.mrb[0].mxu0 %v1786
        %v1836 = vpop.f32.mrb[0].mxu0
        %v1837 = vadd.f32 0.0, %v1836
        %v1838 = vpop.f32.mrb[0].mxu0
        %v1839 = vpop.f32.mrb[0].mxu0
        %v1840 = vadd.f32 0.0, %v1839
        %v1841 = vpop.f32.mrb[0].mxu0
        %1842 = vmatprep.mubr.bf16.mxu0 0
        %1843 = vmatmul.mubr.bf16.gmra.mrb[0].mxu0 %v1789
        %v1844 = vpop.f32.mrb[0].mxu0
        %v1845 = vadd.f32 0.0, %v1844
        %v1846 = vpop.f32.mrb[0].mxu0
        %v1847 = vpop.f32.mrb[0].mxu0
        %v1848 = vadd.f32 0.0, %v1847
        %v1849 = vpop.f32.mrb[0].mxu0
        %1850 = vmatprep.mubr.bf16.mxu0 0
        %1851 = vmatmul.mubr.bf16.gmra.mrb[0].mxu0 %v1792
        %v1852 = vpop.f32.mrb[0].mxu0
        %v1853 = vadd.f32 0.0, %v1852
        %v1854 = vpop.f32.mrb[0].mxu0
        %v1855 = vpop.f32.mrb[0].mxu0
        %v1856 = vadd.f32 0.0, %v1855
        %v1857 = vpop.f32.mrb[0].mxu0
        %1858 = vdwg.mxu0
        %1867 = vrot.lane.b32.xlu0 %v1829, 24
        %v1868 = vpop.permute.xlu0 %1867
        %1869 = vrot.lane.b32.xlu0 %v1832, 24
        %v1870 = vpop.permute.xlu0 %1869
        %1871 = vrot.lane.b32.xlu0 %v1837, 24
        %v1872 = vpop.permute.xlu0 %1871
        %1873 = vrot.lane.b32.xlu0 %v1840, 24
        %v1874 = vpop.permute.xlu0 %1873
        %1875 = vrot.lane.b32.xlu0 %v1845, 24
        %v1876 = vpop.permute.xlu0 %1875
        %1877 = vrot.lane.b32.xlu0 %v1848, 24
        %v1878 = vpop.permute.xlu0 %1877
        %1879 = vrot.lane.b32.xlu0 %v1853, 24
        %v1880 = vpop.permute.xlu0 %1879
        %1881 = vrot.lane.b32.xlu0 %v1856, 24
        %v1882 = vpop.permute.xlu0 %1881
        %vm1891 = vcmask 261312
        %1892 = vst.msk [vmem:[#allocation2] sm:$0xff] %vm1891, %v1868
        %1893 = vst.msk [vmem:[#allocation2 + $0x8] sm:$0xff] %vm1891, %v1870
        %1894 = vst.msk [vmem:[#allocation2 + $0x10] sm:$0xff] %vm1891, %v1872
        %1895 = vst.msk [vmem:[#allocation2 + $0x18] sm:$0xff] %vm1891, %v1874
        %1896 = vst.msk [vmem:[#allocation2 + $0x20] sm:$0xff] %vm1891, %v1876
        %1897 = vst.msk [vmem:[#allocation2 + $0x28] sm:$0xff] %vm1891, %v1878
        %1898 = vst.msk [vmem:[#allocation2 + $0x30] sm:$0xff] %vm1891, %v1880
        %1899 = vst.msk [vmem:[#allocation2 + $0x38] sm:$0xff] %vm1891, %v1882
        %1900 = vrot.lane.b32.xlu0 %v628, 96
        %v1901 = vpop.permute.xlu0 %1900
        %1902 = vrot.lane.b32.xlu0 %v630, 96
        %v1903 = vpop.permute.xlu0 %1902
        %1904 = vrot.lane.b32.xlu0 %v632, 96
        %v1905 = vpop.permute.xlu0 %1904
        %1906 = vrot.lane.b32.xlu0 %v634, 96
        %v1907 = vpop.permute.xlu0 %1906
        %1908 = vrot.lane.b32.xlu0 %v628, 32
        %v1909 = vpop.permute.xlu0 %1908
        %1910 = vrot.lane.b32.xlu0 %v630, 32
        %v1911 = vpop.permute.xlu0 %1910
        %1912 = vrot.lane.b32.xlu0 %v632, 32
        %v1913 = vpop.permute.xlu0 %1912
        %1914 = vrot.lane.b32.xlu0 %v634, 32
        %v1915 = vpop.permute.xlu0 %1914
        %v1917 = vsel %vm648, %v1901, 0
        %v1920 = vsel %vm648, %v1903, 0
        %v1923 = vsel %vm648, %v1905, 0
        %v1926 = vsel %vm648, %v1907, 0
        %v1929 = vsel %vm648, %v1909, 0
        %v1932 = vsel %vm648, %v1911, 0
        %v1935 = vsel %vm648, %v1913, 0
        %v1938 = vsel %vm648, %v1915, 0
        %1940 = vmatprep.subr.bf16.mxu0 0
        %1941 = vmatpush1.bf16.xpose.msra.mxu0 %v1929
        %1942 = vmatprep.subr.bf16.mxu0 0
        %1943 = vmatpush1.bf16.xpose.msra.mxu0 %v1932
        %1944 = vmatprep.subr.bf16.mxu0 0
        %1945 = vmatpush1.bf16.xpose.msra.mxu0 %v1935
        %1946 = vmatprep.subr.bf16.mxu0 0
        %1947 = vmatpush1.bf16.xpose.msra.mxu0 %v1938
        %1948 = vmatprep.subr.bf16.mxu0 0
        %1949 = vmatpush1.bf16.xpose.msra.mxu0 0
        %1950 = vmatprep.subr.bf16.mxu0 0
        %1951 = vmatpush1.bf16.xpose.msra.mxu0 0
        %1952 = vmatprep.subr.bf16.mxu0 0
        %1953 = vmatpush1.bf16.xpose.msra.mxu0 0
        %1954 = vmatprep.subr.bf16.mxu0 0
        %1955 = vmatpush1.bf16.xpose.msra.mxu0 0
        %1956 = vmatprep.subr.bf16.mxu0 0
        %1957 = vmatpush1.bf16.xpose.msra.mxu0 0
        %1958 = vmatprep.subr.bf16.mxu0 0
        %1959 = vmatpush1.bf16.xpose.msra.mxu0 0
        %1960 = vmatprep.subr.bf16.mxu0 0
        %1961 = vmatpush1.bf16.xpose.msra.mxu0 0
        %1962 = vmatprep.subr.bf16.mxu0 0
        %1963 = vmatpush1.bf16.xpose.msra.mxu0 0
        %1964 = vmatprep.subr.bf16.mxu0 0
        %1965 = vmatpush1.bf16.xpose.msra.mxu0 0
        %1966 = vmatprep.subr.bf16.mxu0 0
        %1967 = vmatpush1.bf16.xpose.msra.mxu0 0
        %1968 = vmatprep.subr.bf16.mxu0 0
        %1969 = vmatpush1.bf16.xpose.msra.mxu0 0
        %1970 = vmatprep.subr.bf16.mxu0 0
        %1971 = vmatpush1.bf16.xpose.msra.mxu0 0
        %1972 = vmatprep.mubr.bf16.mxu0 0
        %1973 = vmatmul.mubr.bf16.gmra.mrb[0].mxu0 %v1917
        %v1974 = vpop.f32.mrb[0].mxu0
        %v1975 = vadd.f32 0.0, %v1974
        %v1976 = vpop.f32.mrb[0].mxu0
        %v1977 = vpop.f32.mrb[0].mxu0
        %v1978 = vadd.f32 0.0, %v1977
        %v1979 = vpop.f32.mrb[0].mxu0
        %1980 = vmatprep.mubr.bf16.mxu0 0
        %1981 = vmatmul.mubr.bf16.gmra.mrb[0].mxu0 %v1920
        %v1982 = vpop.f32.mrb[0].mxu0
        %v1983 = vadd.f32 0.0, %v1982
        %v1984 = vpop.f32.mrb[0].mxu0
        %v1985 = vpop.f32.mrb[0].mxu0
        %v1986 = vadd.f32 0.0, %v1985
        %v1987 = vpop.f32.mrb[0].mxu0
        %1988 = vmatprep.mubr.bf16.mxu0 0
        %1989 = vmatmul.mubr.bf16.gmra.mrb[0].mxu0 %v1923
        %v1990 = vpop.f32.mrb[0].mxu0
        %v1991 = vadd.f32 0.0, %v1990
        %v1992 = vpop.f32.mrb[0].mxu0
        %v1993 = vpop.f32.mrb[0].mxu0
        %v1994 = vadd.f32 0.0, %v1993
        %v1995 = vpop.f32.mrb[0].mxu0
        %1996 = vmatprep.mubr.bf16.mxu0 0
        %1997 = vmatmul.mubr.bf16.gmra.mrb[0].mxu0 %v1926
        %v1998 = vpop.f32.mrb[0].mxu0
        %v1999 = vadd.f32 0.0, %v1998
        %v2000 = vpop.f32.mrb[0].mxu0
        %v2001 = vpop.f32.mrb[0].mxu0
        %v2002 = vadd.f32 0.0, %v2001
        %v2003 = vpop.f32.mrb[0].mxu0
        %2004 = vdwg.mxu0
        %v2005 = vsel %vm542, %v1975, -inf
        %2006 = vmax.xlane.f32.xlu0 %v2005
        %v2007 = vpop.xlane.xlu0 %2006
        %v2008 = vsel %vm542, %v1978, -inf
        %2009 = vmax.xlane.f32.xlu0 %v2008
        %v2010 = vpop.xlane.xlu0 %2009
        %v2011 = vsel %vm542, %v1983, -inf
        %2012 = vmax.xlane.f32.xlu0 %v2011
        %v2013 = vpop.xlane.xlu0 %2012
        %v2014 = vsel %vm542, %v1986, -inf
        %2015 = vmax.xlane.f32.xlu0 %v2014
        %v2016 = vpop.xlane.xlu0 %2015
        %v2017 = vsel %vm542, %v1991, -inf
        %2018 = vmax.xlane.f32.xlu0 %v2017
        %v2019 = vpop.xlane.xlu0 %2018
        %v2020 = vsel %vm542, %v1994, -inf
        %2021 = vmax.xlane.f32.xlu0 %v2020
        %v2022 = vpop.xlane.xlu0 %2021
        %v2023 = vsel %vm542, %v1999, -inf
        %2024 = vmax.xlane.f32.xlu0 %v2023
        %v2025 = vpop.xlane.xlu0 %2024
        %v2026 = vsel %vm542, %v2002, -inf
        %2027 = vmax.xlane.f32.xlu0 %v2026
        %v2028 = vpop.xlane.xlu0 %2027
        %v2029 = vsub.f32 %v1975, %v2007
        %v2030 = vsub.f32 %v1978, %v2010
        %v2031 = vsub.f32 %v1983, %v2013
        %v2032 = vsub.f32 %v1986, %v2016
        %v2033 = vsub.f32 %v1991, %v2019
        %v2034 = vsub.f32 %v1994, %v2022
        %v2035 = vsub.f32 %v1999, %v2025
        %v2036 = vsub.f32 %v2002, %v2028
        %v2037 = vmul.f32 %v2029, 1.442695
        %v2038 = vpow.pop %v2037
        %v2039 = vmul.f32 %v2030, 1.442695
        %v2040 = vpow.pop %v2039
        %v2041 = vmul.f32 %v2031, 1.442695
        %v2042 = vpow.pop %v2041
        %v2043 = vmul.f32 %v2032, 1.442695
        %v2044 = vpow.pop %v2043
        %v2045 = vmul.f32 %v2033, 1.442695
        %v2046 = vpow.pop %v2045
        %v2047 = vmul.f32 %v2034, 1.442695
        %v2048 = vpow.pop %v2047
        %v2049 = vmul.f32 %v2035, 1.442695
        %v2050 = vpow.pop %v2049
        %v2051 = vmul.f32 %v2036, 1.442695
        %v2052 = vpow.pop %v2051
        %v2053 = vsel %vm542, %v2038, 0.0
        %2054 = vadd.xlane.f32.xlu0 %v2053
        %v2055 = vpop.xlane.xlu0 %2054
        %v2056 = vsel %vm542, %v2040, 0.0
        %2057 = vadd.xlane.f32.xlu0 %v2056
        %v2058 = vpop.xlane.xlu0 %2057
        %v2059 = vsel %vm542, %v2042, 0.0
        %2060 = vadd.xlane.f32.xlu0 %v2059
        %v2061 = vpop.xlane.xlu0 %2060
        %v2062 = vsel %vm542, %v2044, 0.0
        %2063 = vadd.xlane.f32.xlu0 %v2062
        %v2064 = vpop.xlane.xlu0 %2063
        %v2065 = vsel %vm542, %v2046, 0.0
        %2066 = vadd.xlane.f32.xlu0 %v2065
        %v2067 = vpop.xlane.xlu0 %2066
        %v2068 = vsel %vm542, %v2048, 0.0
        %2069 = vadd.xlane.f32.xlu0 %v2068
        %v2070 = vpop.xlane.xlu0 %2069
        %v2071 = vsel %vm542, %v2050, 0.0
        %2072 = vadd.xlane.f32.xlu0 %v2071
        %v2073 = vpop.xlane.xlu0 %2072
        %v2074 = vsel %vm542, %v2052, 0.0
        %2075 = vadd.xlane.f32.xlu0 %v2074
        %v2076 = vpop.xlane.xlu0 %2075
        %v2077 = vrcp.pop %v2055
        %v2078 = vrcp.pop %v2058
        %v2079 = vrcp.pop %v2061
        %v2080 = vrcp.pop %v2064
        %v2081 = vrcp.pop %v2067
        %v2082 = vrcp.pop %v2070
        %v2083 = vrcp.pop %v2073
        %v2084 = vrcp.pop %v2076
        %v2085 = vmul.f32 %v2038, %v2077
        %v2086 = vmul.f32 %v2040, %v2078
        %v2087 = vmul.f32 %v2042, %v2079
        %v2088 = vmul.f32 %v2044, %v2080
        %v2089 = vmul.f32 %v2046, %v2081
        %v2090 = vmul.f32 %v2048, %v2082
        %v2091 = vmul.f32 %v2050, %v2083
        %v2092 = vmul.f32 %v2052, %v2084
        %v2093 = vpack.c.bf16 %v2086, %v2085
        %v2094 = vpack.c.bf16 %v2088, %v2087
        %v2095 = vpack.c.bf16 %v2090, %v2089
        %v2096 = vpack.c.bf16 %v2092, %v2091
        %2097 = vrot.lane.b32.xlu0 %v629, 96
        %v2098 = vpop.permute.xlu0 %2097
        %2099 = vrot.lane.b32.xlu0 %v631, 96
        %v2100 = vpop.permute.xlu0 %2099
        %2101 = vrot.lane.b32.xlu0 %v633, 96
        %v2102 = vpop.permute.xlu0 %2101
        %2103 = vrot.lane.b32.xlu0 %v635, 96
        %v2104 = vpop.permute.xlu0 %2103
        %v2110 = vsel %vm542, %v2093, 0
        %v2113 = vsel %vm542, %v2094, 0
        %v2116 = vsel %vm542, %v2095, 0
        %v2119 = vsel %vm542, %v2096, 0
        %2121 = vmatprep.subr.bf16.mxu0 0
        %2122 = vmatpush1.bf16.msra.mxu0 %v2098
        %2123 = vmatprep.subr.bf16.mxu0 0
        %2124 = vmatpush1.bf16.msra.mxu0 %v2100
        %2125 = vmatprep.subr.bf16.mxu0 0
        %2126 = vmatpush1.bf16.msra.mxu0 %v2102
        %2127 = vmatprep.subr.bf16.mxu0 0
        %2128 = vmatpush1.bf16.msra.mxu0 %v2104
        %2129 = vmatprep.subr.bf16.mxu0 0
        %2130 = vmatpush1.bf16.msra.mxu0 0
        %2131 = vmatprep.subr.bf16.mxu0 0
        %2132 = vmatpush1.bf16.msra.mxu0 0
        %2133 = vmatprep.subr.bf16.mxu0 0
        %2134 = vmatpush1.bf16.msra.mxu0 0
        %2135 = vmatprep.subr.bf16.mxu0 0
        %2136 = vmatpush1.bf16.msra.mxu0 0
        %2137 = vmatprep.subr.bf16.mxu0 0
        %2138 = vmatpush1.bf16.msra.mxu0 0
        %2139 = vmatprep.subr.bf16.mxu0 0
        %2140 = vmatpush1.bf16.msra.mxu0 0
        %2141 = vmatprep.subr.bf16.mxu0 0
        %2142 = vmatpush1.bf16.msra.mxu0 0
        %2143 = vmatprep.subr.bf16.mxu0 0
        %2144 = vmatpush1.bf16.msra.mxu0 0
        %2145 = vmatprep.subr.bf16.mxu0 0
        %2146 = vmatpush1.bf16.msra.mxu0 0
        %2147 = vmatprep.subr.bf16.mxu0 0
        %2148 = vmatpush1.bf16.msra.mxu0 0
        %2149 = vmatprep.subr.bf16.mxu0 0
        %2150 = vmatpush1.bf16.msra.mxu0 0
        %2151 = vmatprep.subr.bf16.mxu0 0
        %2152 = vmatpush1.bf16.msra.mxu0 0
        %2153 = vmatprep.mubr.bf16.mxu0 0
        %2154 = vmatmul.mubr.bf16.gmra.mrb[0].mxu0 %v2110
        %v2155 = vpop.f32.mrb[0].mxu0
        %v2156 = vadd.f32 0.0, %v2155
        %v2157 = vpop.f32.mrb[0].mxu0
        %v2158 = vpop.f32.mrb[0].mxu0
        %v2159 = vadd.f32 0.0, %v2158
        %v2160 = vpop.f32.mrb[0].mxu0
        %2161 = vmatprep.mubr.bf16.mxu0 0
        %2162 = vmatmul.mubr.bf16.gmra.mrb[0].mxu0 %v2113
        %v2163 = vpop.f32.mrb[0].mxu0
        %v2164 = vadd.f32 0.0, %v2163
        %v2165 = vpop.f32.mrb[0].mxu0
        %v2166 = vpop.f32.mrb[0].mxu0
        %v2167 = vadd.f32 0.0, %v2166
        %v2168 = vpop.f32.mrb[0].mxu0
        %2169 = vmatprep.mubr.bf16.mxu0 0
        %2170 = vmatmul.mubr.bf16.gmra.mrb[0].mxu0 %v2116
        %v2171 = vpop.f32.mrb[0].mxu0
        %v2172 = vadd.f32 0.0, %v2171
        %v2173 = vpop.f32.mrb[0].mxu0
        %v2174 = vpop.f32.mrb[0].mxu0
        %v2175 = vadd.f32 0.0, %v2174
        %v2176 = vpop.f32.mrb[0].mxu0
        %2177 = vmatprep.mubr.bf16.mxu0 0
        %2178 = vmatmul.mubr.bf16.gmra.mrb[0].mxu0 %v2119
        %v2179 = vpop.f32.mrb[0].mxu0
        %v2180 = vadd.f32 0.0, %v2179
        %v2181 = vpop.f32.mrb[0].mxu0
        %v2182 = vpop.f32.mrb[0].mxu0
        %v2183 = vadd.f32 0.0, %v2182
        %v2184 = vpop.f32.mrb[0].mxu0
        %2185 = vdwg.mxu0
        %2194 = vrot.lane.b32.xlu0 %v2156, 32
        %v2195 = vpop.permute.xlu0 %2194
        %2196 = vrot.lane.b32.xlu0 %v2159, 32
        %v2197 = vpop.permute.xlu0 %2196
        %2198 = vrot.lane.b32.xlu0 %v2164, 32
        %v2199 = vpop.permute.xlu0 %2198
        %2200 = vrot.lane.b32.xlu0 %v2167, 32
        %v2201 = vpop.permute.xlu0 %2200
        %2202 = vrot.lane.b32.xlu0 %v2172, 32
        %v2203 = vpop.permute.xlu0 %2202
        %2204 = vrot.lane.b32.xlu0 %v2175, 32
        %v2205 = vpop.permute.xlu0 %2204
        %2206 = vrot.lane.b32.xlu0 %v2180, 32
        %v2207 = vpop.permute.xlu0 %2206
        %2208 = vrot.lane.b32.xlu0 %v2183, 32
        %v2209 = vpop.permute.xlu0 %2208
        %vm2218 = vcmask 326912
        %2219 = vst.msk [vmem:[#allocation2] sm:$0xff] %vm2218, %v2195
        %2220 = vst.msk [vmem:[#allocation2 + $0x8] sm:$0xff] %vm2218, %v2197
        %2221 = vst.msk [vmem:[#allocation2 + $0x10] sm:$0xff] %vm2218, %v2199
        %2222 = vst.msk [vmem:[#allocation2 + $0x18] sm:$0xff] %vm2218, %v2201
        %2223 = vst.msk [vmem:[#allocation2 + $0x20] sm:$0xff] %vm2218, %v2203
        %2224 = vst.msk [vmem:[#allocation2 + $0x28] sm:$0xff] %vm2218, %v2205
        %2225 = vst.msk [vmem:[#allocation2 + $0x30] sm:$0xff] %vm2218, %v2207
        %2226 = vst.msk [vmem:[#allocation2 + $0x38] sm:$0xff] %vm2218, %v2209
        %2227 = vrot.lane.b32.xlu0 %v628, 88
        %v2228 = vpop.permute.xlu0 %2227
        %2229 = vrot.lane.b32.xlu0 %v630, 88
        %v2230 = vpop.permute.xlu0 %2229
        %2231 = vrot.lane.b32.xlu0 %v632, 88
        %v2232 = vpop.permute.xlu0 %2231
        %2233 = vrot.lane.b32.xlu0 %v634, 88
        %v2234 = vpop.permute.xlu0 %2233
        %2235 = vrot.lane.b32.xlu0 %v628, 24
        %v2236 = vpop.permute.xlu0 %2235
        %2237 = vrot.lane.b32.xlu0 %v630, 24
        %v2238 = vpop.permute.xlu0 %2237
        %2239 = vrot.lane.b32.xlu0 %v632, 24
        %v2240 = vpop.permute.xlu0 %2239
        %2241 = vrot.lane.b32.xlu0 %v634, 24
        %v2242 = vpop.permute.xlu0 %2241
        %v2244 = vsel %vm648, %v2228, 0
        %v2247 = vsel %vm648, %v2230, 0
        %v2250 = vsel %vm648, %v2232, 0
        %v2253 = vsel %vm648, %v2234, 0
        %v2256 = vsel %vm648, %v2236, 0
        %v2259 = vsel %vm648, %v2238, 0
        %v2262 = vsel %vm648, %v2240, 0
        %v2265 = vsel %vm648, %v2242, 0
        %2267 = vmatprep.subr.bf16.mxu0 0
        %2268 = vmatpush1.bf16.xpose.msra.mxu0 %v2256
        %2269 = vmatprep.subr.bf16.mxu0 0
        %2270 = vmatpush1.bf16.xpose.msra.mxu0 %v2259
        %2271 = vmatprep.subr.bf16.mxu0 0
        %2272 = vmatpush1.bf16.xpose.msra.mxu0 %v2262
        %2273 = vmatprep.subr.bf16.mxu0 0
        %2274 = vmatpush1.bf16.xpose.msra.mxu0 %v2265
        %2275 = vmatprep.subr.bf16.mxu0 0
        %2276 = vmatpush1.bf16.xpose.msra.mxu0 0
        %2277 = vmatprep.subr.bf16.mxu0 0
        %2278 = vmatpush1.bf16.xpose.msra.mxu0 0
        %2279 = vmatprep.subr.bf16.mxu0 0
        %2280 = vmatpush1.bf16.xpose.msra.mxu0 0
        %2281 = vmatprep.subr.bf16.mxu0 0
        %2282 = vmatpush1.bf16.xpose.msra.mxu0 0
        %2283 = vmatprep.subr.bf16.mxu0 0
        %2284 = vmatpush1.bf16.xpose.msra.mxu0 0
        %2285 = vmatprep.subr.bf16.mxu0 0
        %2286 = vmatpush1.bf16.xpose.msra.mxu0 0
        %2287 = vmatprep.subr.bf16.mxu0 0
        %2288 = vmatpush1.bf16.xpose.msra.mxu0 0
        %2289 = vmatprep.subr.bf16.mxu0 0
        %2290 = vmatpush1.bf16.xpose.msra.mxu0 0
        %2291 = vmatprep.subr.bf16.mxu0 0
        %2292 = vmatpush1.bf16.xpose.msra.mxu0 0
        %2293 = vmatprep.subr.bf16.mxu0 0
        %2294 = vmatpush1.bf16.xpose.msra.mxu0 0
        %2295 = vmatprep.subr.bf16.mxu0 0
        %2296 = vmatpush1.bf16.xpose.msra.mxu0 0
        %2297 = vmatprep.subr.bf16.mxu0 0
        %2298 = vmatpush1.bf16.xpose.msra.mxu0 0
        %2299 = vmatprep.mubr.bf16.mxu0 0
        %2300 = vmatmul.mubr.bf16.gmra.mrb[0].mxu0 %v2244
        %v2301 = vpop.f32.mrb[0].mxu0
        %v2302 = vadd.f32 0.0, %v2301
        %v2303 = vpop.f32.mrb[0].mxu0
        %v2304 = vpop.f32.mrb[0].mxu0
        %v2305 = vadd.f32 0.0, %v2304
        %v2306 = vpop.f32.mrb[0].mxu0
        %2307 = vmatprep.mubr.bf16.mxu0 0
        %2308 = vmatmul.mubr.bf16.gmra.mrb[0].mxu0 %v2247
        %v2309 = vpop.f32.mrb[0].mxu0
        %v2310 = vadd.f32 0.0, %v2309
        %v2311 = vpop.f32.mrb[0].mxu0
        %v2312 = vpop.f32.mrb[0].mxu0
        %v2313 = vadd.f32 0.0, %v2312
        %v2314 = vpop.f32.mrb[0].mxu0
        %2315 = vmatprep.mubr.bf16.mxu0 0
        %2316 = vmatmul.mubr.bf16.gmra.mrb[0].mxu0 %v2250
        %v2317 = vpop.f32.mrb[0].mxu0
        %v2318 = vadd.f32 0.0, %v2317
        %v2319 = vpop.f32.mrb[0].mxu0
        %v2320 = vpop.f32.mrb[0].mxu0
        %v2321 = vadd.f32 0.0, %v2320
        %v2322 = vpop.f32.mrb[0].mxu0
        %2323 = vmatprep.mubr.bf16.mxu0 0
        %2324 = vmatmul.mubr.bf16.gmra.mrb[0].mxu0 %v2253
        %v2325 = vpop.f32.mrb[0].mxu0
        %v2326 = vadd.f32 0.0, %v2325
        %v2327 = vpop.f32.mrb[0].mxu0
        %v2328 = vpop.f32.mrb[0].mxu0
        %v2329 = vadd.f32 0.0, %v2328
        %v2330 = vpop.f32.mrb[0].mxu0
        %2331 = vdwg.mxu0
        %v2332 = vsel %vm542, %v2302, -inf
        %2333 = vmax.xlane.f32.xlu0 %v2332
        %v2334 = vpop.xlane.xlu0 %2333
        %v2335 = vsel %vm542, %v2305, -inf
        %2336 = vmax.xlane.f32.xlu0 %v2335
        %v2337 = vpop.xlane.xlu0 %2336
        %v2338 = vsel %vm542, %v2310, -inf
        %2339 = vmax.xlane.f32.xlu0 %v2338
        %v2340 = vpop.xlane.xlu0 %2339
        %v2341 = vsel %vm542, %v2313, -inf
        %2342 = vmax.xlane.f32.xlu0 %v2341
        %v2343 = vpop.xlane.xlu0 %2342
        %v2344 = vsel %vm542, %v2318, -inf
        %2345 = vmax.xlane.f32.xlu0 %v2344
        %v2346 = vpop.xlane.xlu0 %2345
        %v2347 = vsel %vm542, %v2321, -inf
        %2348 = vmax.xlane.f32.xlu0 %v2347
        %v2349 = vpop.xlane.xlu0 %2348
        %v2350 = vsel %vm542, %v2326, -inf
        %2351 = vmax.xlane.f32.xlu0 %v2350
        %v2352 = vpop.xlane.xlu0 %2351
        %v2353 = vsel %vm542, %v2329, -inf
        %2354 = vmax.xlane.f32.xlu0 %v2353
        %v2355 = vpop.xlane.xlu0 %2354
        %v2356 = vsub.f32 %v2302, %v2334
        %v2357 = vsub.f32 %v2305, %v2337
        %v2358 = vsub.f32 %v2310, %v2340
        %v2359 = vsub.f32 %v2313, %v2343
        %v2360 = vsub.f32 %v2318, %v2346
        %v2361 = vsub.f32 %v2321, %v2349
        %v2362 = vsub.f32 %v2326, %v2352
        %v2363 = vsub.f32 %v2329, %v2355
        %v2364 = vmul.f32 %v2356, 1.442695
        %v2365 = vpow.pop %v2364
        %v2366 = vmul.f32 %v2357, 1.442695
        %v2367 = vpow.pop %v2366
        %v2368 = vmul.f32 %v2358, 1.442695
        %v2369 = vpow.pop %v2368
        %v2370 = vmul.f32 %v2359, 1.442695
        %v2371 = vpow.pop %v2370
        %v2372 = vmul.f32 %v2360, 1.442695
        %v2373 = vpow.pop %v2372
        %v2374 = vmul.f32 %v2361, 1.442695
        %v2375 = vpow.pop %v2374
        %v2376 = vmul.f32 %v2362, 1.442695
        %v2377 = vpow.pop %v2376
        %v2378 = vmul.f32 %v2363, 1.442695
        %v2379 = vpow.pop %v2378
        %v2380 = vsel %vm542, %v2365, 0.0
        %2381 = vadd.xlane.f32.xlu0 %v2380
        %v2382 = vpop.xlane.xlu0 %2381
        %v2383 = vsel %vm542, %v2367, 0.0
        %2384 = vadd.xlane.f32.xlu0 %v2383
        %v2385 = vpop.xlane.xlu0 %2384
        %v2386 = vsel %vm542, %v2369, 0.0
        %2387 = vadd.xlane.f32.xlu0 %v2386
        %v2388 = vpop.xlane.xlu0 %2387
        %v2389 = vsel %vm542, %v2371, 0.0
        %2390 = vadd.xlane.f32.xlu0 %v2389
        %v2391 = vpop.xlane.xlu0 %2390
        %v2392 = vsel %vm542, %v2373, 0.0
        %2393 = vadd.xlane.f32.xlu0 %v2392
        %v2394 = vpop.xlane.xlu0 %2393
        %v2395 = vsel %vm542, %v2375, 0.0
        %2396 = vadd.xlane.f32.xlu0 %v2395
        %v2397 = vpop.xlane.xlu0 %2396
        %v2398 = vsel %vm542, %v2377, 0.0
        %2399 = vadd.xlane.f32.xlu0 %v2398
        %v2400 = vpop.xlane.xlu0 %2399
        %v2401 = vsel %vm542, %v2379, 0.0
        %2402 = vadd.xlane.f32.xlu0 %v2401
        %v2403 = vpop.xlane.xlu0 %2402
        %v2404 = vrcp.pop %v2382
        %v2405 = vrcp.pop %v2385
        %v2406 = vrcp.pop %v2388
        %v2407 = vrcp.pop %v2391
        %v2408 = vrcp.pop %v2394
        %v2409 = vrcp.pop %v2397
        %v2410 = vrcp.pop %v2400
        %v2411 = vrcp.pop %v2403
        %v2412 = vmul.f32 %v2365, %v2404
        %v2413 = vmul.f32 %v2367, %v2405
        %v2414 = vmul.f32 %v2369, %v2406
        %v2415 = vmul.f32 %v2371, %v2407
        %v2416 = vmul.f32 %v2373, %v2408
        %v2417 = vmul.f32 %v2375, %v2409
        %v2418 = vmul.f32 %v2377, %v2410
        %v2419 = vmul.f32 %v2379, %v2411
        %v2420 = vpack.c.bf16 %v2413, %v2412
        %v2421 = vpack.c.bf16 %v2415, %v2414
        %v2422 = vpack.c.bf16 %v2417, %v2416
        %v2423 = vpack.c.bf16 %v2419, %v2418
        %2424 = vrot.lane.b32.xlu0 %v629, 88
        %v2425 = vpop.permute.xlu0 %2424
        %2426 = vrot.lane.b32.xlu0 %v631, 88
        %v2427 = vpop.permute.xlu0 %2426
        %2428 = vrot.lane.b32.xlu0 %v633, 88
        %v2429 = vpop.permute.xlu0 %2428
        %2430 = vrot.lane.b32.xlu0 %v635, 88
        %v2431 = vpop.permute.xlu0 %2430
        %v2437 = vsel %vm542, %v2420, 0
        %v2440 = vsel %vm542, %v2421, 0
        %v2443 = vsel %vm542, %v2422, 0
        %v2446 = vsel %vm542, %v2423, 0
        %2448 = vmatprep.subr.bf16.mxu0 0
        %2449 = vmatpush1.bf16.msra.mxu0 %v2425
        %2450 = vmatprep.subr.bf16.mxu0 0
        %2451 = vmatpush1.bf16.msra.mxu0 %v2427
        %2452 = vmatprep.subr.bf16.mxu0 0
        %2453 = vmatpush1.bf16.msra.mxu0 %v2429
        %2454 = vmatprep.subr.bf16.mxu0 0
        %2455 = vmatpush1.bf16.msra.mxu0 %v2431
        %2456 = vmatprep.subr.bf16.mxu0 0
        %2457 = vmatpush1.bf16.msra.mxu0 0
        %2458 = vmatprep.subr.bf16.mxu0 0
        %2459 = vmatpush1.bf16.msra.mxu0 0
        %2460 = vmatprep.subr.bf16.mxu0 0
        %2461 = vmatpush1.bf16.msra.mxu0 0
        %2462 = vmatprep.subr.bf16.mxu0 0
        %2463 = vmatpush1.bf16.msra.mxu0 0
        %2464 = vmatprep.subr.bf16.mxu0 0
        %2465 = vmatpush1.bf16.msra.mxu0 0
        %2466 = vmatprep.subr.bf16.mxu0 0
        %2467 = vmatpush1.bf16.msra.mxu0 0
        %2468 = vmatprep.subr.bf16.mxu0 0
        %2469 = vmatpush1.bf16.msra.mxu0 0
        %2470 = vmatprep.subr.bf16.mxu0 0
        %2471 = vmatpush1.bf16.msra.mxu0 0
        %2472 = vmatprep.subr.bf16.mxu0 0
        %2473 = vmatpush1.bf16.msra.mxu0 0
        %2474 = vmatprep.subr.bf16.mxu0 0
        %2475 = vmatpush1.bf16.msra.mxu0 0
        %2476 = vmatprep.subr.bf16.mxu0 0
        %2477 = vmatpush1.bf16.msra.mxu0 0
        %2478 = vmatprep.subr.bf16.mxu0 0
        %2479 = vmatpush1.bf16.msra.mxu0 0
        %2480 = vmatprep.mubr.bf16.mxu0 0
        %2481 = vmatmul.mubr.bf16.gmra.mrb[0].mxu0 %v2437
        %v2482 = vpop.f32.mrb[0].mxu0
        %v2483 = vadd.f32 0.0, %v2482
        %v2484 = vpop.f32.mrb[0].mxu0
        %v2485 = vpop.f32.mrb[0].mxu0
        %v2486 = vadd.f32 0.0, %v2485
        %v2487 = vpop.f32.mrb[0].mxu0
        %2488 = vmatprep.mubr.bf16.mxu0 0
        %2489 = vmatmul.mubr.bf16.gmra.mrb[0].mxu0 %v2440
        %v2490 = vpop.f32.mrb[0].mxu0
        %v2491 = vadd.f32 0.0, %v2490
        %v2492 = vpop.f32.mrb[0].mxu0
        %v2493 = vpop.f32.mrb[0].mxu0
        %v2494 = vadd.f32 0.0, %v2493
        %v2495 = vpop.f32.mrb[0].mxu0
        %2496 = vmatprep.mubr.bf16.mxu0 0
        %2497 = vmatmul.mubr.bf16.gmra.mrb[0].mxu0 %v2443
        %v2498 = vpop.f32.mrb[0].mxu0
        %v2499 = vadd.f32 0.0, %v2498
        %v2500 = vpop.f32.mrb[0].mxu0
        %v2501 = vpop.f32.mrb[0].mxu0
        %v2502 = vadd.f32 0.0, %v2501
        %v2503 = vpop.f32.mrb[0].mxu0
        %2504 = vmatprep.mubr.bf16.mxu0 0
        %2505 = vmatmul.mubr.bf16.gmra.mrb[0].mxu0 %v2446
        %v2506 = vpop.f32.mrb[0].mxu0
        %v2507 = vadd.f32 0.0, %v2506
        %v2508 = vpop.f32.mrb[0].mxu0
        %v2509 = vpop.f32.mrb[0].mxu0
        %v2510 = vadd.f32 0.0, %v2509
        %v2511 = vpop.f32.mrb[0].mxu0
        %2512 = vdwg.mxu0
        %2521 = vrot.lane.b32.xlu0 %v2483, 40
        %v2522 = vpop.permute.xlu0 %2521
        %2523 = vrot.lane.b32.xlu0 %v2486, 40
        %v2524 = vpop.permute.xlu0 %2523
        %2525 = vrot.lane.b32.xlu0 %v2491, 40
        %v2526 = vpop.permute.xlu0 %2525
        %2527 = vrot.lane.b32.xlu0 %v2494, 40
        %v2528 = vpop.permute.xlu0 %2527
        %2529 = vrot.lane.b32.xlu0 %v2499, 40
        %v2530 = vpop.permute.xlu0 %2529
        %2531 = vrot.lane.b32.xlu0 %v2502, 40
        %v2532 = vpop.permute.xlu0 %2531
        %2533 = vrot.lane.b32.xlu0 %v2507, 40
        %v2534 = vpop.permute.xlu0 %2533
        %2535 = vrot.lane.b32.xlu0 %v2510, 40
        %v2536 = vpop.permute.xlu0 %2535
        %vm2545 = vcmask 392512
        %2546 = vst.msk [vmem:[#allocation2] sm:$0xff] %vm2545, %v2522
        %2547 = vst.msk [vmem:[#allocation2 + $0x8] sm:$0xff] %vm2545, %v2524
        %2548 = vst.msk [vmem:[#allocation2 + $0x10] sm:$0xff] %vm2545, %v2526
        %2549 = vst.msk [vmem:[#allocation2 + $0x18] sm:$0xff] %vm2545, %v2528
        %2550 = vst.msk [vmem:[#allocation2 + $0x20] sm:$0xff] %vm2545, %v2530
        %2551 = vst.msk [vmem:[#allocation2 + $0x28] sm:$0xff] %vm2545, %v2532
        %2552 = vst.msk [vmem:[#allocation2 + $0x30] sm:$0xff] %vm2545, %v2534
        %2553 = vst.msk [vmem:[#allocation2 + $0x38] sm:$0xff] %vm2545, %v2536
        %2554 = vrot.lane.b32.xlu0 %v628, 80
        %v2555 = vpop.permute.xlu0 %2554
        %2556 = vrot.lane.b32.xlu0 %v630, 80
        %v2557 = vpop.permute.xlu0 %2556
        %2558 = vrot.lane.b32.xlu0 %v632, 80
        %v2559 = vpop.permute.xlu0 %2558
        %2560 = vrot.lane.b32.xlu0 %v634, 80
        %v2561 = vpop.permute.xlu0 %2560
        %2562 = vrot.lane.b32.xlu0 %v628, 16
        %v2563 = vpop.permute.xlu0 %2562
        %2564 = vrot.lane.b32.xlu0 %v630, 16
        %v2565 = vpop.permute.xlu0 %2564
        %2566 = vrot.lane.b32.xlu0 %v632, 16
        %v2567 = vpop.permute.xlu0 %2566
        %2568 = vrot.lane.b32.xlu0 %v634, 16
        %v2569 = vpop.permute.xlu0 %2568
        %v2571 = vsel %vm648, %v2555, 0
        %v2574 = vsel %vm648, %v2557, 0
        %v2577 = vsel %vm648, %v2559, 0
        %v2580 = vsel %vm648, %v2561, 0
        %v2583 = vsel %vm648, %v2563, 0
        %v2586 = vsel %vm648, %v2565, 0
        %v2589 = vsel %vm648, %v2567, 0
        %v2592 = vsel %vm648, %v2569, 0
        %2594 = vmatprep.subr.bf16.mxu0 0
        %2595 = vmatpush1.bf16.xpose.msra.mxu0 %v2583
        %2596 = vmatprep.subr.bf16.mxu0 0
        %2597 = vmatpush1.bf16.xpose.msra.mxu0 %v2586
        %2598 = vmatprep.subr.bf16.mxu0 0
        %2599 = vmatpush1.bf16.xpose.msra.mxu0 %v2589
        %2600 = vmatprep.subr.bf16.mxu0 0
        %2601 = vmatpush1.bf16.xpose.msra.mxu0 %v2592
        %2602 = vmatprep.subr.bf16.mxu0 0
        %2603 = vmatpush1.bf16.xpose.msra.mxu0 0
        %2604 = vmatprep.subr.bf16.mxu0 0
        %2605 = vmatpush1.bf16.xpose.msra.mxu0 0
        %2606 = vmatprep.subr.bf16.mxu0 0
        %2607 = vmatpush1.bf16.xpose.msra.mxu0 0
        %2608 = vmatprep.subr.bf16.mxu0 0
        %2609 = vmatpush1.bf16.xpose.msra.mxu0 0
        %2610 = vmatprep.subr.bf16.mxu0 0
        %2611 = vmatpush1.bf16.xpose.msra.mxu0 0
        %2612 = vmatprep.subr.bf16.mxu0 0
        %2613 = vmatpush1.bf16.xpose.msra.mxu0 0
        %2614 = vmatprep.subr.bf16.mxu0 0
        %2615 = vmatpush1.bf16.xpose.msra.mxu0 0
        %2616 = vmatprep.subr.bf16.mxu0 0
        %2617 = vmatpush1.bf16.xpose.msra.mxu0 0
        %2618 = vmatprep.subr.bf16.mxu0 0
        %2619 = vmatpush1.bf16.xpose.msra.mxu0 0
        %2620 = vmatprep.subr.bf16.mxu0 0
        %2621 = vmatpush1.bf16.xpose.msra.mxu0 0
        %2622 = vmatprep.subr.bf16.mxu0 0
        %2623 = vmatpush1.bf16.xpose.msra.mxu0 0
        %2624 = vmatprep.subr.bf16.mxu0 0
        %2625 = vmatpush1.bf16.xpose.msra.mxu0 0
        %2626 = vmatprep.mubr.bf16.mxu0 0
        %2627 = vmatmul.mubr.bf16.gmra.mrb[0].mxu0 %v2571
        %v2628 = vpop.f32.mrb[0].mxu0
        %v2629 = vadd.f32 0.0, %v2628
        %v2630 = vpop.f32.mrb[0].mxu0
        %v2631 = vpop.f32.mrb[0].mxu0
        %v2632 = vadd.f32 0.0, %v2631
        %v2633 = vpop.f32.mrb[0].mxu0
        %2634 = vmatprep.mubr.bf16.mxu0 0
        %2635 = vmatmul.mubr.bf16.gmra.mrb[0].mxu0 %v2574
        %v2636 = vpop.f32.mrb[0].mxu0
        %v2637 = vadd.f32 0.0, %v2636
        %v2638 = vpop.f32.mrb[0].mxu0
        %v2639 = vpop.f32.mrb[0].mxu0
        %v2640 = vadd.f32 0.0, %v2639
        %v2641 = vpop.f32.mrb[0].mxu0
        %2642 = vmatprep.mubr.bf16.mxu0 0
        %2643 = vmatmul.mubr.bf16.gmra.mrb[0].mxu0 %v2577
        %v2644 = vpop.f32.mrb[0].mxu0
        %v2645 = vadd.f32 0.0, %v2644
        %v2646 = vpop.f32.mrb[0].mxu0
        %v2647 = vpop.f32.mrb[0].mxu0
        %v2648 = vadd.f32 0.0, %v2647
        %v2649 = vpop.f32.mrb[0].mxu0
        %2650 = vmatprep.mubr.bf16.mxu0 0
        %2651 = vmatmul.mubr.bf16.gmra.mrb[0].mxu0 %v2580
        %v2652 = vpop.f32.mrb[0].mxu0
        %v2653 = vadd.f32 0.0, %v2652
        %v2654 = vpop.f32.mrb[0].mxu0
        %v2655 = vpop.f32.mrb[0].mxu0
        %v2656 = vadd.f32 0.0, %v2655
        %v2657 = vpop.f32.mrb[0].mxu0
        %2658 = vdwg.mxu0
        %v2659 = vsel %vm542, %v2629, -inf
        %2660 = vmax.xlane.f32.xlu0 %v2659
        %v2661 = vpop.xlane.xlu0 %2660
        %v2662 = vsel %vm542, %v2632, -inf
        %2663 = vmax.xlane.f32.xlu0 %v2662
        %v2664 = vpop.xlane.xlu0 %2663
        %v2665 = vsel %vm542, %v2637, -inf
        %2666 = vmax.xlane.f32.xlu0 %v2665
        %v2667 = vpop.xlane.xlu0 %2666
        %v2668 = vsel %vm542, %v2640, -inf
        %2669 = vmax.xlane.f32.xlu0 %v2668
        %v2670 = vpop.xlane.xlu0 %2669
        %v2671 = vsel %vm542, %v2645, -inf
        %2672 = vmax.xlane.f32.xlu0 %v2671
        %v2673 = vpop.xlane.xlu0 %2672
        %v2674 = vsel %vm542, %v2648, -inf
        %2675 = vmax.xlane.f32.xlu0 %v2674
        %v2676 = vpop.xlane.xlu0 %2675
        %v2677 = vsel %vm542, %v2653, -inf
        %2678 = vmax.xlane.f32.xlu0 %v2677
        %v2679 = vpop.xlane.xlu0 %2678
        %v2680 = vsel %vm542, %v2656, -inf
        %2681 = vmax.xlane.f32.xlu0 %v2680
        %v2682 = vpop.xlane.xlu0 %2681
        %v2683 = vsub.f32 %v2629, %v2661
        %v2684 = vsub.f32 %v2632, %v2664
        %v2685 = vsub.f32 %v2637, %v2667
        %v2686 = vsub.f32 %v2640, %v2670
        %v2687 = vsub.f32 %v2645, %v2673
        %v2688 = vsub.f32 %v2648, %v2676
        %v2689 = vsub.f32 %v2653, %v2679
        %v2690 = vsub.f32 %v2656, %v2682
        %v2691 = vmul.f32 %v2683, 1.442695
        %v2692 = vpow.pop %v2691
        %v2693 = vmul.f32 %v2684, 1.442695
        %v2694 = vpow.pop %v2693
        %v2695 = vmul.f32 %v2685, 1.442695
        %v2696 = vpow.pop %v2695
        %v2697 = vmul.f32 %v2686, 1.442695
        %v2698 = vpow.pop %v2697
        %v2699 = vmul.f32 %v2687, 1.442695
        %v2700 = vpow.pop %v2699
        %v2701 = vmul.f32 %v2688, 1.442695
        %v2702 = vpow.pop %v2701
        %v2703 = vmul.f32 %v2689, 1.442695
        %v2704 = vpow.pop %v2703
        %v2705 = vmul.f32 %v2690, 1.442695
        %v2706 = vpow.pop %v2705
        %v2707 = vsel %vm542, %v2692, 0.0
        %2708 = vadd.xlane.f32.xlu0 %v2707
        %v2709 = vpop.xlane.xlu0 %2708
        %v2710 = vsel %vm542, %v2694, 0.0
        %2711 = vadd.xlane.f32.xlu0 %v2710
        %v2712 = vpop.xlane.xlu0 %2711
        %v2713 = vsel %vm542, %v2696, 0.0
        %2714 = vadd.xlane.f32.xlu0 %v2713
        %v2715 = vpop.xlane.xlu0 %2714
        %v2716 = vsel %vm542, %v2698, 0.0
        %2717 = vadd.xlane.f32.xlu0 %v2716
        %v2718 = vpop.xlane.xlu0 %2717
        %v2719 = vsel %vm542, %v2700, 0.0
        %2720 = vadd.xlane.f32.xlu0 %v2719
        %v2721 = vpop.xlane.xlu0 %2720
        %v2722 = vsel %vm542, %v2702, 0.0
        %2723 = vadd.xlane.f32.xlu0 %v2722
        %v2724 = vpop.xlane.xlu0 %2723
        %v2725 = vsel %vm542, %v2704, 0.0
        %2726 = vadd.xlane.f32.xlu0 %v2725
        %v2727 = vpop.xlane.xlu0 %2726
        %v2728 = vsel %vm542, %v2706, 0.0
        %2729 = vadd.xlane.f32.xlu0 %v2728
        %v2730 = vpop.xlane.xlu0 %2729
        %v2731 = vrcp.pop %v2709
        %v2732 = vrcp.pop %v2712
        %v2733 = vrcp.pop %v2715
        %v2734 = vrcp.pop %v2718
        %v2735 = vrcp.pop %v2721
        %v2736 = vrcp.pop %v2724
        %v2737 = vrcp.pop %v2727
        %v2738 = vrcp.pop %v2730
        %v2739 = vmul.f32 %v2692, %v2731
        %v2740 = vmul.f32 %v2694, %v2732
        %v2741 = vmul.f32 %v2696, %v2733
        %v2742 = vmul.f32 %v2698, %v2734
        %v2743 = vmul.f32 %v2700, %v2735
        %v2744 = vmul.f32 %v2702, %v2736
        %v2745 = vmul.f32 %v2704, %v2737
        %v2746 = vmul.f32 %v2706, %v2738
        %v2747 = vpack.c.bf16 %v2740, %v2739
        %v2748 = vpack.c.bf16 %v2742, %v2741
        %v2749 = vpack.c.bf16 %v2744, %v2743
        %v2750 = vpack.c.bf16 %v2746, %v2745
        %2751 = vrot.lane.b32.xlu0 %v629, 80
        %v2752 = vpop.permute.xlu0 %2751
        %2753 = vrot.lane.b32.xlu0 %v631, 80
        %v2754 = vpop.permute.xlu0 %2753
        %2755 = vrot.lane.b32.xlu0 %v633, 80
        %v2756 = vpop.permute.xlu0 %2755
        %2757 = vrot.lane.b32.xlu0 %v635, 80
        %v2758 = vpop.permute.xlu0 %2757
        %v2764 = vsel %vm542, %v2747, 0
        %v2767 = vsel %vm542, %v2748, 0
        %v2770 = vsel %vm542, %v2749, 0
        %v2773 = vsel %vm542, %v2750, 0
        %2775 = vmatprep.subr.bf16.mxu0 0
        %2776 = vmatpush1.bf16.msra.mxu0 %v2752
        %2777 = vmatprep.subr.bf16.mxu0 0
        %2778 = vmatpush1.bf16.msra.mxu0 %v2754
        %2779 = vmatprep.subr.bf16.mxu0 0
        %2780 = vmatpush1.bf16.msra.mxu0 %v2756
        %2781 = vmatprep.subr.bf16.mxu0 0
        %2782 = vmatpush1.bf16.msra.mxu0 %v2758
        %2783 = vmatprep.subr.bf16.mxu0 0
        %2784 = vmatpush1.bf16.msra.mxu0 0
        %2785 = vmatprep.subr.bf16.mxu0 0
        %2786 = vmatpush1.bf16.msra.mxu0 0
        %2787 = vmatprep.subr.bf16.mxu0 0
        %2788 = vmatpush1.bf16.msra.mxu0 0
        %2789 = vmatprep.subr.bf16.mxu0 0
        %2790 = vmatpush1.bf16.msra.mxu0 0
        %2791 = vmatprep.subr.bf16.mxu0 0
        %2792 = vmatpush1.bf16.msra.mxu0 0
        %2793 = vmatprep.subr.bf16.mxu0 0
        %2794 = vmatpush1.bf16.msra.mxu0 0
        %2795 = vmatprep.subr.bf16.mxu0 0
        %2796 = vmatpush1.bf16.msra.mxu0 0
        %2797 = vmatprep.subr.bf16.mxu0 0
        %2798 = vmatpush1.bf16.msra.mxu0 0
        %2799 = vmatprep.subr.bf16.mxu0 0
        %2800 = vmatpush1.bf16.msra.mxu0 0
        %2801 = vmatprep.subr.bf16.mxu0 0
        %2802 = vmatpush1.bf16.msra.mxu0 0
        %2803 = vmatprep.subr.bf16.mxu0 0
        %2804 = vmatpush1.bf16.msra.mxu0 0
        %2805 = vmatprep.subr.bf16.mxu0 0
        %2806 = vmatpush1.bf16.msra.mxu0 0
        %2807 = vmatprep.mubr.bf16.mxu0 0
        %2808 = vmatmul.mubr.bf16.gmra.mrb[0].mxu0 %v2764
        %v2809 = vpop.f32.mrb[0].mxu0
        %v2810 = vadd.f32 0.0, %v2809
        %v2811 = vpop.f32.mrb[0].mxu0
        %v2812 = vpop.f32.mrb[0].mxu0
        %v2813 = vadd.f32 0.0, %v2812
        %v2814 = vpop.f32.mrb[0].mxu0
        %2815 = vmatprep.mubr.bf16.mxu0 0
        %2816 = vmatmul.mubr.bf16.gmra.mrb[0].mxu0 %v2767
        %v2817 = vpop.f32.mrb[0].mxu0
        %v2818 = vadd.f32 0.0, %v2817
        %v2819 = vpop.f32.mrb[0].mxu0
        %v2820 = vpop.f32.mrb[0].mxu0
        %v2821 = vadd.f32 0.0, %v2820
        %v2822 = vpop.f32.mrb[0].mxu0
        %2823 = vmatprep.mubr.bf16.mxu0 0
        %2824 = vmatmul.mubr.bf16.gmra.mrb[0].mxu0 %v2770
        %v2825 = vpop.f32.mrb[0].mxu0
        %v2826 = vadd.f32 0.0, %v2825
        %v2827 = vpop.f32.mrb[0].mxu0
        %v2828 = vpop.f32.mrb[0].mxu0
        %v2829 = vadd.f32 0.0, %v2828
        %v2830 = vpop.f32.mrb[0].mxu0
        %2831 = vmatprep.mubr.bf16.mxu0 0
        %2832 = vmatmul.mubr.bf16.gmra.mrb[0].mxu0 %v2773
        %v2833 = vpop.f32.mrb[0].mxu0
        %v2834 = vadd.f32 0.0, %v2833
        %v2835 = vpop.f32.mrb[0].mxu0
        %v2836 = vpop.f32.mrb[0].mxu0
        %v2837 = vadd.f32 0.0, %v2836
        %v2838 = vpop.f32.mrb[0].mxu0
        %2839 = vdwg.mxu0
        %2848 = vrot.lane.b32.xlu0 %v2810, 48
        %v2849 = vpop.permute.xlu0 %2848
        %2850 = vrot.lane.b32.xlu0 %v2813, 48
        %v2851 = vpop.permute.xlu0 %2850
        %2852 = vrot.lane.b32.xlu0 %v2818, 48
        %v2853 = vpop.permute.xlu0 %2852
        %2854 = vrot.lane.b32.xlu0 %v2821, 48
        %v2855 = vpop.permute.xlu0 %2854
        %2856 = vrot.lane.b32.xlu0 %v2826, 48
        %v2857 = vpop.permute.xlu0 %2856
        %2858 = vrot.lane.b32.xlu0 %v2829, 48
        %v2859 = vpop.permute.xlu0 %2858
        %2860 = vrot.lane.b32.xlu0 %v2834, 48
        %v2861 = vpop.permute.xlu0 %2860
        %2862 = vrot.lane.b32.xlu0 %v2837, 48
        %v2863 = vpop.permute.xlu0 %2862
        %vm2872 = vcmask 458112
        %2873 = vst.msk [vmem:[#allocation2] sm:$0xff] %vm2872, %v2849
        %2874 = vst.msk [vmem:[#allocation2 + $0x8] sm:$0xff] %vm2872, %v2851
        %2875 = vst.msk [vmem:[#allocation2 + $0x10] sm:$0xff] %vm2872, %v2853
        %2876 = vst.msk [vmem:[#allocation2 + $0x18] sm:$0xff] %vm2872, %v2855
        %2877 = vst.msk [vmem:[#allocation2 + $0x20] sm:$0xff] %vm2872, %v2857
        %2878 = vst.msk [vmem:[#allocation2 + $0x28] sm:$0xff] %vm2872, %v2859
        %2879 = vst.msk [vmem:[#allocation2 + $0x30] sm:$0xff] %vm2872, %v2861
        %2880 = vst.msk [vmem:[#allocation2 + $0x38] sm:$0xff] %vm2872, %v2863
        %2881 = vrot.lane.b32.xlu0 %v628, 72
        %v2882 = vpop.permute.xlu0 %2881
        %2883 = vrot.lane.b32.xlu0 %v630, 72
        %v2884 = vpop.permute.xlu0 %2883
        %2885 = vrot.lane.b32.xlu0 %v632, 72
        %v2886 = vpop.permute.xlu0 %2885
        %2887 = vrot.lane.b32.xlu0 %v634, 72
        %v2888 = vpop.permute.xlu0 %2887
        %2889 = vrot.lane.b32.xlu0 %v628, 8
        %v2890 = vpop.permute.xlu0 %2889
        %2891 = vrot.lane.b32.xlu0 %v630, 8
        %v2892 = vpop.permute.xlu0 %2891
        %2893 = vrot.lane.b32.xlu0 %v632, 8
        %v2894 = vpop.permute.xlu0 %2893
        %2895 = vrot.lane.b32.xlu0 %v634, 8
        %v2896 = vpop.permute.xlu0 %2895
        %v2898 = vsel %vm648, %v2882, 0
        %v2901 = vsel %vm648, %v2884, 0
        %v2904 = vsel %vm648, %v2886, 0
        %v2907 = vsel %vm648, %v2888, 0
        %v2910 = vsel %vm648, %v2890, 0
        %v2913 = vsel %vm648, %v2892, 0
        %v2916 = vsel %vm648, %v2894, 0
        %v2919 = vsel %vm648, %v2896, 0
        %2921 = vmatprep.subr.bf16.mxu0 0
        %2922 = vmatpush1.bf16.xpose.msra.mxu0 %v2910
        %2923 = vmatprep.subr.bf16.mxu0 0
        %2924 = vmatpush1.bf16.xpose.msra.mxu0 %v2913
        %2925 = vmatprep.subr.bf16.mxu0 0
        %2926 = vmatpush1.bf16.xpose.msra.mxu0 %v2916
        %2927 = vmatprep.subr.bf16.mxu0 0
        %2928 = vmatpush1.bf16.xpose.msra.mxu0 %v2919
        %2929 = vmatprep.subr.bf16.mxu0 0
        %2930 = vmatpush1.bf16.xpose.msra.mxu0 0
        %2931 = vmatprep.subr.bf16.mxu0 0
        %2932 = vmatpush1.bf16.xpose.msra.mxu0 0
        %2933 = vmatprep.subr.bf16.mxu0 0
        %2934 = vmatpush1.bf16.xpose.msra.mxu0 0
        %2935 = vmatprep.subr.bf16.mxu0 0
        %2936 = vmatpush1.bf16.xpose.msra.mxu0 0
        %2937 = vmatprep.subr.bf16.mxu0 0
        %2938 = vmatpush1.bf16.xpose.msra.mxu0 0
        %2939 = vmatprep.subr.bf16.mxu0 0
        %2940 = vmatpush1.bf16.xpose.msra.mxu0 0
        %2941 = vmatprep.subr.bf16.mxu0 0
        %2942 = vmatpush1.bf16.xpose.msra.mxu0 0
        %2943 = vmatprep.subr.bf16.mxu0 0
        %2944 = vmatpush1.bf16.xpose.msra.mxu0 0
        %2945 = vmatprep.subr.bf16.mxu0 0
        %2946 = vmatpush1.bf16.xpose.msra.mxu0 0
        %2947 = vmatprep.subr.bf16.mxu0 0
        %2948 = vmatpush1.bf16.xpose.msra.mxu0 0
        %2949 = vmatprep.subr.bf16.mxu0 0
        %2950 = vmatpush1.bf16.xpose.msra.mxu0 0
        %2951 = vmatprep.subr.bf16.mxu0 0
        %2952 = vmatpush1.bf16.xpose.msra.mxu0 0
        %2953 = vmatprep.mubr.bf16.mxu0 0
        %2954 = vmatmul.mubr.bf16.gmra.mrb[0].mxu0 %v2898
        %v2955 = vpop.f32.mrb[0].mxu0
        %v2956 = vadd.f32 0.0, %v2955
        %v2957 = vpop.f32.mrb[0].mxu0
        %v2958 = vpop.f32.mrb[0].mxu0
        %v2959 = vadd.f32 0.0, %v2958
        %v2960 = vpop.f32.mrb[0].mxu0
        %2961 = vmatprep.mubr.bf16.mxu0 0
        %2962 = vmatmul.mubr.bf16.gmra.mrb[0].mxu0 %v2901
        %v2963 = vpop.f32.mrb[0].mxu0
        %v2964 = vadd.f32 0.0, %v2963
        %v2965 = vpop.f32.mrb[0].mxu0
        %v2966 = vpop.f32.mrb[0].mxu0
        %v2967 = vadd.f32 0.0, %v2966
        %v2968 = vpop.f32.mrb[0].mxu0
        %2969 = vmatprep.mubr.bf16.mxu0 0
        %2970 = vmatmul.mubr.bf16.gmra.mrb[0].mxu0 %v2904
        %v2971 = vpop.f32.mrb[0].mxu0
        %v2972 = vadd.f32 0.0, %v2971
        %v2973 = vpop.f32.mrb[0].mxu0
        %v2974 = vpop.f32.mrb[0].mxu0
        %v2975 = vadd.f32 0.0, %v2974
        %v2976 = vpop.f32.mrb[0].mxu0
        %2977 = vmatprep.mubr.bf16.mxu0 0
        %2978 = vmatmul.mubr.bf16.gmra.mrb[0].mxu0 %v2907
        %v2979 = vpop.f32.mrb[0].mxu0
        %v2980 = vadd.f32 0.0, %v2979
        %v2981 = vpop.f32.mrb[0].mxu0
        %v2982 = vpop.f32.mrb[0].mxu0
        %v2983 = vadd.f32 0.0, %v2982
        %v2984 = vpop.f32.mrb[0].mxu0
        %2985 = vdwg.mxu0
        %v2986 = vsel %vm542, %v2956, -inf
        %2987 = vmax.xlane.f32.xlu0 %v2986
        %v2988 = vpop.xlane.xlu0 %2987
        %v2989 = vsel %vm542, %v2959, -inf
        %2990 = vmax.xlane.f32.xlu0 %v2989
        %v2991 = vpop.xlane.xlu0 %2990
        %v2992 = vsel %vm542, %v2964, -inf
        %2993 = vmax.xlane.f32.xlu0 %v2992
        %v2994 = vpop.xlane.xlu0 %2993
        %v2995 = vsel %vm542, %v2967, -inf
        %2996 = vmax.xlane.f32.xlu0 %v2995
        %v2997 = vpop.xlane.xlu0 %2996
        %v2998 = vsel %vm542, %v2972, -inf
        %2999 = vmax.xlane.f32.xlu0 %v2998
        %v3000 = vpop.xlane.xlu0 %2999
        %v3001 = vsel %vm542, %v2975, -inf
        %3002 = vmax.xlane.f32.xlu0 %v3001
        %v3003 = vpop.xlane.xlu0 %3002
        %v3004 = vsel %vm542, %v2980, -inf
        %3005 = vmax.xlane.f32.xlu0 %v3004
        %v3006 = vpop.xlane.xlu0 %3005
        %v3007 = vsel %vm542, %v2983, -inf
        %3008 = vmax.xlane.f32.xlu0 %v3007
        %v3009 = vpop.xlane.xlu0 %3008
        %v3010 = vsub.f32 %v2956, %v2988
        %v3011 = vsub.f32 %v2959, %v2991
        %v3012 = vsub.f32 %v2964, %v2994
        %v3013 = vsub.f32 %v2967, %v2997
        %v3014 = vsub.f32 %v2972, %v3000
        %v3015 = vsub.f32 %v2975, %v3003
        %v3016 = vsub.f32 %v2980, %v3006
        %v3017 = vsub.f32 %v2983, %v3009
        %v3018 = vmul.f32 %v3010, 1.442695
        %v3019 = vpow.pop %v3018
        %v3020 = vmul.f32 %v3011, 1.442695
        %v3021 = vpow.pop %v3020
        %v3022 = vmul.f32 %v3012, 1.442695
        %v3023 = vpow.pop %v3022
        %v3024 = vmul.f32 %v3013, 1.442695
        %v3025 = vpow.pop %v3024
        %v3026 = vmul.f32 %v3014, 1.442695
        %v3027 = vpow.pop %v3026
        %v3028 = vmul.f32 %v3015, 1.442695
        %v3029 = vpow.pop %v3028
        %v3030 = vmul.f32 %v3016, 1.442695
        %v3031 = vpow.pop %v3030
        %v3032 = vmul.f32 %v3017, 1.442695
        %v3033 = vpow.pop %v3032
        %v3034 = vsel %vm542, %v3019, 0.0
        %3035 = vadd.xlane.f32.xlu0 %v3034
        %v3036 = vpop.xlane.xlu0 %3035
        %v3037 = vsel %vm542, %v3021, 0.0
        %3038 = vadd.xlane.f32.xlu0 %v3037
        %v3039 = vpop.xlane.xlu0 %3038
        %v3040 = vsel %vm542, %v3023, 0.0
        %3041 = vadd.xlane.f32.xlu0 %v3040
        %v3042 = vpop.xlane.xlu0 %3041
        %v3043 = vsel %vm542, %v3025, 0.0
        %3044 = vadd.xlane.f32.xlu0 %v3043
        %v3045 = vpop.xlane.xlu0 %3044
        %v3046 = vsel %vm542, %v3027, 0.0
        %3047 = vadd.xlane.f32.xlu0 %v3046
        %v3048 = vpop.xlane.xlu0 %3047
        %v3049 = vsel %vm542, %v3029, 0.0
        %3050 = vadd.xlane.f32.xlu0 %v3049
        %v3051 = vpop.xlane.xlu0 %3050
        %v3052 = vsel %vm542, %v3031, 0.0
        %3053 = vadd.xlane.f32.xlu0 %v3052
        %v3054 = vpop.xlane.xlu0 %3053
        %v3055 = vsel %vm542, %v3033, 0.0
        %3056 = vadd.xlane.f32.xlu0 %v3055
        %v3057 = vpop.xlane.xlu0 %3056
        %v3058 = vrcp.pop %v3036
        %v3059 = vrcp.pop %v3039
        %v3060 = vrcp.pop %v3042
        %v3061 = vrcp.pop %v3045
        %v3062 = vrcp.pop %v3048
        %v3063 = vrcp.pop %v3051
        %v3064 = vrcp.pop %v3054
        %v3065 = vrcp.pop %v3057
        %v3066 = vmul.f32 %v3019, %v3058
        %v3067 = vmul.f32 %v3021, %v3059
        %v3068 = vmul.f32 %v3023, %v3060
        %v3069 = vmul.f32 %v3025, %v3061
        %v3070 = vmul.f32 %v3027, %v3062
        %v3071 = vmul.f32 %v3029, %v3063
        %v3072 = vmul.f32 %v3031, %v3064
        %v3073 = vmul.f32 %v3033, %v3065
        %v3074 = vpack.c.bf16 %v3067, %v3066
        %v3075 = vpack.c.bf16 %v3069, %v3068
        %v3076 = vpack.c.bf16 %v3071, %v3070
        %v3077 = vpack.c.bf16 %v3073, %v3072
        %3078 = vrot.lane.b32.xlu0 %v629, 72
        %v3079 = vpop.permute.xlu0 %3078
        %3080 = vrot.lane.b32.xlu0 %v631, 72
        %v3081 = vpop.permute.xlu0 %3080
        %3082 = vrot.lane.b32.xlu0 %v633, 72
        %v3083 = vpop.permute.xlu0 %3082
        %3084 = vrot.lane.b32.xlu0 %v635, 72
        %v3085 = vpop.permute.xlu0 %3084
        %v3091 = vsel %vm542, %v3074, 0
        %v3094 = vsel %vm542, %v3075, 0
        %v3097 = vsel %vm542, %v3076, 0
        %v3100 = vsel %vm542, %v3077, 0
        %3102 = vmatprep.subr.bf16.mxu0 0
        %3103 = vmatpush1.bf16.msra.mxu0 %v3079
        %3104 = vmatprep.subr.bf16.mxu0 0
        %3105 = vmatpush1.bf16.msra.mxu0 %v3081
        %3106 = vmatprep.subr.bf16.mxu0 0
        %3107 = vmatpush1.bf16.msra.mxu0 %v3083
        %3108 = vmatprep.subr.bf16.mxu0 0
        %3109 = vmatpush1.bf16.msra.mxu0 %v3085
        %3110 = vmatprep.subr.bf16.mxu0 0
        %3111 = vmatpush1.bf16.msra.mxu0 0
        %3112 = vmatprep.subr.bf16.mxu0 0
        %3113 = vmatpush1.bf16.msra.mxu0 0
        %3114 = vmatprep.subr.bf16.mxu0 0
        %3115 = vmatpush1.bf16.msra.mxu0 0
        %3116 = vmatprep.subr.bf16.mxu0 0
        %3117 = vmatpush1.bf16.msra.mxu0 0
        %3118 = vmatprep.subr.bf16.mxu0 0
        %3119 = vmatpush1.bf16.msra.mxu0 0
        %3120 = vmatprep.subr.bf16.mxu0 0
        %3121 = vmatpush1.bf16.msra.mxu0 0
        %3122 = vmatprep.subr.bf16.mxu0 0
        %3123 = vmatpush1.bf16.msra.mxu0 0
        %3124 = vmatprep.subr.bf16.mxu0 0
        %3125 = vmatpush1.bf16.msra.mxu0 0
        %3126 = vmatprep.subr.bf16.mxu0 0
        %3127 = vmatpush1.bf16.msra.mxu0 0
        %3128 = vmatprep.subr.bf16.mxu0 0
        %3129 = vmatpush1.bf16.msra.mxu0 0
        %3130 = vmatprep.subr.bf16.mxu0 0
        %3131 = vmatpush1.bf16.msra.mxu0 0
        %3132 = vmatprep.subr.bf16.mxu0 0
        %3133 = vmatpush1.bf16.msra.mxu0 0
        %3134 = vmatprep.mubr.bf16.mxu0 0
        %3135 = vmatmul.mubr.bf16.gmra.mrb[0].mxu0 %v3091
        %v3136 = vpop.f32.mrb[0].mxu0
        %v3137 = vadd.f32 0.0, %v3136
        %v3138 = vpop.f32.mrb[0].mxu0
        %v3139 = vpop.f32.mrb[0].mxu0
        %v3140 = vadd.f32 0.0, %v3139
        %v3141 = vpop.f32.mrb[0].mxu0
        %3142 = vmatprep.mubr.bf16.mxu0 0
        %3143 = vmatmul.mubr.bf16.gmra.mrb[0].mxu0 %v3094
        %v3144 = vpop.f32.mrb[0].mxu0
        %v3145 = vadd.f32 0.0, %v3144
        %v3146 = vpop.f32.mrb[0].mxu0
        %v3147 = vpop.f32.mrb[0].mxu0
        %v3148 = vadd.f32 0.0, %v3147
        %v3149 = vpop.f32.mrb[0].mxu0
        %3150 = vmatprep.mubr.bf16.mxu0 0
        %3151 = vmatmul.mubr.bf16.gmra.mrb[0].mxu0 %v3097
        %v3152 = vpop.f32.mrb[0].mxu0
        %v3153 = vadd.f32 0.0, %v3152
        %v3154 = vpop.f32.mrb[0].mxu0
        %v3155 = vpop.f32.mrb[0].mxu0
        %v3156 = vadd.f32 0.0, %v3155
        %v3157 = vpop.f32.mrb[0].mxu0
        %3158 = vmatprep.mubr.bf16.mxu0 0
        %3159 = vmatmul.mubr.bf16.gmra.mrb[0].mxu0 %v3100
        %v3160 = vpop.f32.mrb[0].mxu0
        %v3161 = vadd.f32 0.0, %v3160
        %v3162 = vpop.f32.mrb[0].mxu0
        %v3163 = vpop.f32.mrb[0].mxu0
        %v3164 = vadd.f32 0.0, %v3163
        %v3165 = vpop.f32.mrb[0].mxu0
        %3166 = vdwg.mxu0
        %3175 = vrot.lane.b32.xlu0 %v3137, 56
        %v3176 = vpop.permute.xlu0 %3175
        %3177 = vrot.lane.b32.xlu0 %v3140, 56
        %v3178 = vpop.permute.xlu0 %3177
        %3179 = vrot.lane.b32.xlu0 %v3145, 56
        %v3180 = vpop.permute.xlu0 %3179
        %3181 = vrot.lane.b32.xlu0 %v3148, 56
        %v3182 = vpop.permute.xlu0 %3181
        %3183 = vrot.lane.b32.xlu0 %v3153, 56
        %v3184 = vpop.permute.xlu0 %3183
        %3185 = vrot.lane.b32.xlu0 %v3156, 56
        %v3186 = vpop.permute.xlu0 %3185
        %3187 = vrot.lane.b32.xlu0 %v3161, 56
        %v3188 = vpop.permute.xlu0 %3187
        %3189 = vrot.lane.b32.xlu0 %v3164, 56
        %v3190 = vpop.permute.xlu0 %3189
        %vm3199 = vcmask 523712
        %3200 = vst.msk [vmem:[#allocation2] sm:$0xff] %vm3199, %v3176
        %3201 = vst.msk [vmem:[#allocation2 + $0x8] sm:$0xff] %vm3199, %v3178
        %3202 = vst.msk [vmem:[#allocation2 + $0x10] sm:$0xff] %vm3199, %v3180
        %3203 = vst.msk [vmem:[#allocation2 + $0x18] sm:$0xff] %vm3199, %v3182
        %3204 = vst.msk [vmem:[#allocation2 + $0x20] sm:$0xff] %vm3199, %v3184
        %3205 = vst.msk [vmem:[#allocation2 + $0x28] sm:$0xff] %vm3199, %v3186
        %3206 = vst.msk [vmem:[#allocation2 + $0x30] sm:$0xff] %vm3199, %v3188
        %3207 = vst.msk [vmem:[#allocation2 + $0x38] sm:$0xff] %vm3199, %v3190
        %v3208 = vld [vmem:[#allocation2] sm:$0xff]
        %v3209 = vld [vmem:[#allocation2 + $0x8] sm:$0xff]
        %v3210 = vld [vmem:[#allocation2 + $0x10] sm:$0xff]
        %v3211 = vld [vmem:[#allocation2 + $0x18] sm:$0xff]
        %v3212 = vld [vmem:[#allocation2 + $0x20] sm:$0xff]
        %v3213 = vld [vmem:[#allocation2 + $0x28] sm:$0xff]
        %v3214 = vld [vmem:[#allocation2 + $0x30] sm:$0xff]
        %v3215 = vld [vmem:[#allocation2 + $0x38] sm:$0xff]
        %v3216 = vpack.c.bf16 %v3209, %v3208
        %v3217 = vpack.c.bf16 %v3211, %v3210
        %v3218 = vpack.c.bf16 %v3213, %v3212
        %v3219 = vpack.c.bf16 %v3215, %v3214
        %v3220 = vld [vmem:[#allocation3] sm:$0xf]
        %v3221 = vld [vmem:[#allocation3 + $0x4] sm:$0xf]
        %v3222 = vld [vmem:[#allocation3 + $0x8] sm:$0xf]
        %v3223 = vld [vmem:[#allocation3 + $0xc] sm:$0xf]
        %v3224 = vld [vmem:[#allocation3 + $0x10] sm:$0xf]
        %v3225 = vld [vmem:[#allocation3 + $0x14] sm:$0xf]
        %v3226 = vld [vmem:[#allocation3 + $0x18] sm:$0xf]
        %v3227 = vld [vmem:[#allocation3 + $0x1c] sm:$0xf]
        %v3228 = vld [vmem:[%s4] sm:$0x1]
        %v3230 = vlaneseq
        %v3231 = vshrl.u32 %v3230, 7
        %v3232 = vsub.s32 0, %v3231
        %v3233 = vrot.slane %v3228, %v3232
        %v3243 = vunpack.c.l.b16 %v3220
        %v3244 = vunpack.c.l.b16 %v3221
        %v3245 = vunpack.c.l.b16 %v3222
        %v3246 = vunpack.c.l.b16 %v3223
        %v3247 = vunpack.c.l.b16 %v3224
        %v3248 = vunpack.c.l.b16 %v3225
        %v3249 = vunpack.c.l.b16 %v3226
        %v3250 = vunpack.c.l.b16 %v3227
        %v3251 = vpack.c.b16 %v3244, %v3243
        %v3252 = vpack.c.b16 %v3246, %v3245
        %v3253 = vpack.c.b16 %v3248, %v3247
        %v3254 = vpack.c.b16 %v3250, %v3249
        %v3260 = vsel %vm542, %v3216, 0
        %v3263 = vsel %vm542, %v3217, 0
        %v3266 = vsel %vm542, %v3218, 0
        %v3269 = vsel %vm542, %v3219, 0
        %3271 = vmatprep.subr.bf16.mxu0 0
        %3272 = vmatpush1.bf16.msra.mxu0 %v3251
        %3273 = vmatprep.subr.bf16.mxu0 0
        %3274 = vmatpush1.bf16.msra.mxu0 %v3252
        %3275 = vmatprep.subr.bf16.mxu0 0
        %3276 = vmatpush1.bf16.msra.mxu0 %v3253
        %3277 = vmatprep.subr.bf16.mxu0 0
        %3278 = vmatpush1.bf16.msra.mxu0 %v3254
        %3279 = vmatprep.subr.bf16.mxu0 0
        %3280 = vmatpush1.bf16.msra.mxu0 0
        %3281 = vmatprep.subr.bf16.mxu0 0
        %3282 = vmatpush1.bf16.msra.mxu0 0
        %3283 = vmatprep.subr.bf16.mxu0 0
        %3284 = vmatpush1.bf16.msra.mxu0 0
        %3285 = vmatprep.subr.bf16.mxu0 0
        %3286 = vmatpush1.bf16.msra.mxu0 0
        %3287 = vmatprep.subr.bf16.mxu0 0
        %3288 = vmatpush1.bf16.msra.mxu0 0
        %3289 = vmatprep.subr.bf16.mxu0 0
        %3290 = vmatpush1.bf16.msra.mxu0 0
        %3291 = vmatprep.subr.bf16.mxu0 0
        %3292 = vmatpush1.bf16.msra.mxu0 0
        %3293 = vmatprep.subr.bf16.mxu0 0
        %3294 = vmatpush1.bf16.msra.mxu0 0
        %3295 = vmatprep.subr.bf16.mxu0 0
        %3296 = vmatpush1.bf16.msra.mxu0 0
        %3297 = vmatprep.subr.bf16.mxu0 0
        %3298 = vmatpush1.bf16.msra.mxu0 0
        %3299 = vmatprep.subr.bf16.mxu0 0
        %3300 = vmatpush1.bf16.msra.mxu0 0
        %3301 = vmatprep.subr.bf16.mxu0 0
        %3302 = vmatpush1.bf16.msra.mxu0 0
        %3303 = vmatprep.mubr.bf16.mxu0 0
        %3304 = vmatmul.mubr.bf16.gmra.mrb[0].mxu0 %v3260
        %v3305 = vpop.f32.mrb[0].mxu0
        %v3306 = vadd.f32 %v3233, %v3305
        %v3307 = vpop.f32.mrb[0].mxu0
        %v3308 = vpop.f32.mrb[0].mxu0
        %v3309 = vadd.f32 %v3233, %v3308
        %v3310 = vpop.f32.mrb[0].mxu0
        %3311 = vmatprep.mubr.bf16.mxu0 0
        %3312 = vmatmul.mubr.bf16.gmra.mrb[0].mxu0 %v3263
        %v3313 = vpop.f32.mrb[0].mxu0
        %v3314 = vadd.f32 %v3233, %v3313
        %v3315 = vpop.f32.mrb[0].mxu0
        %v3316 = vpop.f32.mrb[0].mxu0
        %v3317 = vadd.f32 %v3233, %v3316
        %v3318 = vpop.f32.mrb[0].mxu0
        %3319 = vmatprep.mubr.bf16.mxu0 0
        %3320 = vmatmul.mubr.bf16.gmra.mrb[0].mxu0 %v3266
        %v3321 = vpop.f32.mrb[0].mxu0
        %v3322 = vadd.f32 %v3233, %v3321
        %v3323 = vpop.f32.mrb[0].mxu0
        %v3324 = vpop.f32.mrb[0].mxu0
        %v3325 = vadd.f32 %v3233, %v3324
        %v3326 = vpop.f32.mrb[0].mxu0
        %3327 = vmatprep.mubr.bf16.mxu0 0
        %3328 = vmatmul.mubr.bf16.gmra.mrb[0].mxu0 %v3269
        %v3329 = vpop.f32.mrb[0].mxu0
        %v3330 = vadd.f32 %v3233, %v3329
        %v3331 = vpop.f32.mrb[0].mxu0
        %v3332 = vpop.f32.mrb[0].mxu0
        %v3333 = vadd.f32 %v3233, %v3332
        %v3334 = vpop.f32.mrb[0].mxu0
        %3335 = vdwg.mxu0
        %v3336 = vadd.f32 %v470, %v3306
        %v3337 = vadd.f32 %v471, %v3309
        %v3338 = vadd.f32 %v472, %v3314
        %v3339 = vadd.f32 %v473, %v3317
        %v3340 = vadd.f32 %v474, %v3322
        %v3341 = vadd.f32 %v475, %v3325
        %v3342 = vadd.f32 %v476, %v3330
        %v3343 = vadd.f32 %v477, %v3333
        %v3344 = vld [vmem:[%s5] sm:$0x1]
        %v3345 = vld [vmem:[%s6] sm:$0x1]
        %v3346 = vsel %vm542, %v3336, 0.0
        %3347 = vadd.xlane.f32.xlu0 %v3346
        %v3348 = vpop.xlane.xlu0 %3347
        %v3349 = vsel %vm542, %v3337, 0.0
        %3350 = vadd.xlane.f32.xlu0 %v3349
        %v3351 = vpop.xlane.xlu0 %3350
        %v3352 = vsel %vm542, %v3338, 0.0
        %3353 = vadd.xlane.f32.xlu0 %v3352
        %v3354 = vpop.xlane.xlu0 %3353
        %v3355 = vsel %vm542, %v3339, 0.0
        %3356 = vadd.xlane.f32.xlu0 %v3355
        %v3357 = vpop.xlane.xlu0 %3356
        %v3358 = vsel %vm542, %v3340, 0.0
        %3359 = vadd.xlane.f32.xlu0 %v3358
        %v3360 = vpop.xlane.xlu0 %3359
        %v3361 = vsel %vm542, %v3341, 0.0
        %3362 = vadd.xlane.f32.xlu0 %v3361
        %v3363 = vpop.xlane.xlu0 %3362
        %v3364 = vsel %vm542, %v3342, 0.0
        %3365 = vadd.xlane.f32.xlu0 %v3364
        %v3366 = vpop.xlane.xlu0 %3365
        %v3367 = vsel %vm542, %v3343, 0.0
        %3368 = vadd.xlane.f32.xlu0 %v3367
        %v3369 = vpop.xlane.xlu0 %3368
        %v3370 = vrcp.pop 64.0
        %v3371 = vmul.f32 %v3348, %v3370
        %v3372 = vmul.f32 %v3351, %v3370
        %v3373 = vmul.f32 %v3354, %v3370
        %v3374 = vmul.f32 %v3357, %v3370
        %v3375 = vmul.f32 %v3360, %v3370
        %v3376 = vmul.f32 %v3363, %v3370
        %v3377 = vmul.f32 %v3366, %v3370
        %v3378 = vmul.f32 %v3369, %v3370
        %v3379 = vsub.f32 %v3336, %v3371
        %v3380 = vsub.f32 %v3337, %v3372
        %v3381 = vsub.f32 %v3338, %v3373
        %v3382 = vsub.f32 %v3339, %v3374
        %v3383 = vsub.f32 %v3340, %v3375
        %v3384 = vsub.f32 %v3341, %v3376
        %v3385 = vsub.f32 %v3342, %v3377
        %v3386 = vsub.f32 %v3343, %v3378
        %v3387 = vmul.f32 %v3379, %v3379
        %v3388 = vmul.f32 %v3380, %v3380
        %v3389 = vmul.f32 %v3381, %v3381
        %v3390 = vmul.f32 %v3382, %v3382
        %v3391 = vmul.f32 %v3383, %v3383
        %v3392 = vmul.f32 %v3384, %v3384
        %v3393 = vmul.f32 %v3385, %v3385
        %v3394 = vmul.f32 %v3386, %v3386
        %v3395 = vsel %vm542, %v3387, 0.0
        %3396 = vadd.xlane.f32.xlu0 %v3395
        %v3397 = vpop.xlane.xlu0 %3396
        %v3398 = vsel %vm542, %v3388, 0.0
        %3399 = vadd.xlane.f32.xlu0 %v3398
        %v3400 = vpop.xlane.xlu0 %3399
        %v3401 = vsel %vm542, %v3389, 0.0
        %3402 = vadd.xlane.f32.xlu0 %v3401
        %v3403 = vpop.xlane.xlu0 %3402
        %v3404 = vsel %vm542, %v3390, 0.0
        %3405 = vadd.xlane.f32.xlu0 %v3404
        %v3406 = vpop.xlane.xlu0 %3405
        %v3407 = vsel %vm542, %v3391, 0.0
        %3408 = vadd.xlane.f32.xlu0 %v3407
        %v3409 = vpop.xlane.xlu0 %3408
        %v3410 = vsel %vm542, %v3392, 0.0
        %3411 = vadd.xlane.f32.xlu0 %v3410
        %v3412 = vpop.xlane.xlu0 %3411
        %v3413 = vsel %vm542, %v3393, 0.0
        %3414 = vadd.xlane.f32.xlu0 %v3413
        %v3415 = vpop.xlane.xlu0 %3414
        %v3416 = vsel %vm542, %v3394, 0.0
        %3417 = vadd.xlane.f32.xlu0 %v3416
        %v3418 = vpop.xlane.xlu0 %3417
        %v3419 = vmul.f32 %v3397, %v3370
        %v3420 = vmul.f32 %v3400, %v3370
        %v3421 = vmul.f32 %v3403, %v3370
        %v3422 = vmul.f32 %v3406, %v3370
        %v3423 = vmul.f32 %v3409, %v3370
        %v3424 = vmul.f32 %v3412, %v3370
        %v3425 = vmul.f32 %v3415, %v3370
        %v3426 = vmul.f32 %v3418, %v3370
        %v3427 = vadd.f32 %v3419, 1e-05
        %v3428 = vadd.f32 %v3420, 1e-05
        %v3429 = vadd.f32 %v3421, 1e-05
        %v3430 = vadd.f32 %v3422, 1e-05
        %v3431 = vadd.f32 %v3423, 1e-05
        %v3432 = vadd.f32 %v3424, 1e-05
        %v3433 = vadd.f32 %v3425, 1e-05
        %v3434 = vadd.f32 %v3426, 1e-05
        %v3435 = vrsqrt.pop %v3427
        %v3436 = vrsqrt.pop %v3428
        %v3437 = vrsqrt.pop %v3429
        %v3438 = vrsqrt.pop %v3430
        %v3439 = vrsqrt.pop %v3431
        %v3440 = vrsqrt.pop %v3432
        %v3441 = vrsqrt.pop %v3433
        %v3442 = vrsqrt.pop %v3434
        %v3443 = vmul.f32 %v3379, %v3435
        %v3444 = vmul.f32 %v3380, %v3436
        %v3445 = vmul.f32 %v3381, %v3437
        %v3446 = vmul.f32 %v3382, %v3438
        %v3447 = vmul.f32 %v3383, %v3439
        %v3448 = vmul.f32 %v3384, %v3440
        %v3449 = vmul.f32 %v3385, %v3441
        %v3450 = vmul.f32 %v3386, %v3442
        %v3452 = vlaneseq
        %v3453 = vshrl.u32 %v3452, 7
        %v3454 = vsub.s32 0, %v3453
        %v3455 = vrot.slane %v3344, %v3454
        %v3457 = vmul.f32 %v3443, %v3455
        %v3458 = vmul.f32 %v3444, %v3455
        %v3459 = vmul.f32 %v3445, %v3455
        %v3460 = vmul.f32 %v3446, %v3455
        %v3461 = vmul.f32 %v3447, %v3455
        %v3462 = vmul.f32 %v3448, %v3455
        %v3463 = vmul.f32 %v3449, %v3455
        %v3464 = vmul.f32 %v3450, %v3455
        %v3466 = vlaneseq
        %v3467 = vshrl.u32 %v3466, 7
        %v3468 = vsub.s32 0, %v3467
        %v3469 = vrot.slane %v3345, %v3468
        %v3471 = vadd.f32 %v3457, %v3469
        %v3472 = vadd.f32 %v3458, %v3469
        %v3473 = vadd.f32 %v3459, %v3469
        %v3474 = vadd.f32 %v3460, %v3469
        %v3475 = vadd.f32 %v3461, %v3469
        %v3476 = vadd.f32 %v3462, %v3469
        %v3477 = vadd.f32 %v3463, %v3469
        %v3478 = vadd.f32 %v3464, %v3469
        %v3479 = vpack.c.bf16 %v3472, %v3471
        %v3480 = vpack.c.bf16 %v3474, %v3473
        %v3481 = vpack.c.bf16 %v3476, %v3475
        %v3482 = vpack.c.bf16 %v3478, %v3477
        %v3483 = vld [vmem:[#allocation6] sm:$0xff]
        %v3484 = vld [vmem:[#allocation6 + $0x8] sm:$0xff]
        %v3485 = vld [vmem:[#allocation6 + $0x10] sm:$0xff]
        %v3486 = vld [vmem:[#allocation6 + $0x18] sm:$0xff]
        %v3487 = vld [vmem:[#allocation6 + $0x20] sm:$0xff]
        %v3488 = vld [vmem:[#allocation6 + $0x28] sm:$0xff]
        %v3489 = vld [vmem:[#allocation6 + $0x30] sm:$0xff]
        %v3490 = vld [vmem:[#allocation6 + $0x38] sm:$0xff]
        %v3491 = vld [vmem:[%s8] sm:$0x3]
        %v3493 = vlaneseq
        %v3494 = vshrl.u32 %v3493, 7
        %v3495 = vsub.s32 0, %v3494
        %v3496 = vrot.slane %v3491, %v3495
        %v3497 = vlaneseq
        %v3498 = vshrl.u32 %v3497, 7
        %v3499 = vsub.s32 1, %v3498
        %v3500 = vrot.slane %v3491, %v3499
        %v3511 = vunpack.c.l.b16 %v3483
        %v3512 = vunpack.c.h.b16 %v3483
        %v3513 = vunpack.c.l.b16 %v3484
        %v3514 = vunpack.c.h.b16 %v3484
        %v3515 = vunpack.c.l.b16 %v3485
        %v3516 = vunpack.c.h.b16 %v3485
        %v3517 = vunpack.c.l.b16 %v3486
        %v3518 = vunpack.c.h.b16 %v3486
        %v3519 = vunpack.c.l.b16 %v3487
        %v3520 = vunpack.c.h.b16 %v3487
        %v3521 = vunpack.c.l.b16 %v3488
        %v3522 = vunpack.c.h.b16 %v3488
        %v3523 = vunpack.c.l.b16 %v3489
        %v3524 = vunpack.c.h.b16 %v3489
        %v3525 = vunpack.c.l.b16 %v3490
        %v3526 = vunpack.c.h.b16 %v3490
        %v3527 = vpack.c.b16 %v3513, %v3511
        %v3528 = vpack.c.b16 %v3514, %v3512
        %v3529 = vpack.c.b16 %v3517, %v3515
        %v3530 = vpack.c.b16 %v3518, %v3516
        %v3531 = vpack.c.b16 %v3521, %v3519
        %v3532 = vpack.c.b16 %v3522, %v3520
        %v3533 = vpack.c.b16 %v3525, %v3523
        %v3534 = vpack.c.b16 %v3526, %v3524
        %v3544 = vsel %vm542, %v3479, 0
        %v3547 = vsel %vm542, %v3480, 0
        %v3550 = vsel %vm542, %v3481, 0
        %v3553 = vsel %vm542, %v3482, 0
        %3555 = vmatprep.subr.bf16.mxu0 %v3528
        %3556 = vmatpush1.bf16.msra.mxu0 %v3527
        %3557 = vmatprep.subr.bf16.mxu0 %v3530
        %3558 = vmatpush1.bf16.msra.mxu0 %v3529
        %3559 = vmatprep.subr.bf16.mxu0 %v3532
        %3560 = vmatpush1.bf16.msra.mxu0 %v3531
        %3561 = vmatprep.subr.bf16.mxu0 %v3534
        %3562 = vmatpush1.bf16.msra.mxu0 %v3533
        %3563 = vmatprep.subr.bf16.mxu0 0
        %3564 = vmatpush1.bf16.msra.mxu0 0
        %3565 = vmatprep.subr.bf16.mxu0 0
        %3566 = vmatpush1.bf16.msra.mxu0 0
        %3567 = vmatprep.subr.bf16.mxu0 0
        %3568 = vmatpush1.bf16.msra.mxu0 0
        %3569 = vmatprep.subr.bf16.mxu0 0
        %3570 = vmatpush1.bf16.msra.mxu0 0
        %3571 = vmatprep.subr.bf16.mxu0 0
        %3572 = vmatpush1.bf16.msra.mxu0 0
        %3573 = vmatprep.subr.bf16.mxu0 0
        %3574 = vmatpush1.bf16.msra.mxu0 0
        %3575 = vmatprep.subr.bf16.mxu0 0
        %3576 = vmatpush1.bf16.msra.mxu0 0
        %3577 = vmatprep.subr.bf16.mxu0 0
        %3578 = vmatpush1.bf16.msra.mxu0 0
        %3579 = vmatprep.subr.bf16.mxu0 0
        %3580 = vmatpush1.bf16.msra.mxu0 0
        %3581 = vmatprep.subr.bf16.mxu0 0
        %3582 = vmatpush1.bf16.msra.mxu0 0
        %3583 = vmatprep.subr.bf16.mxu0 0
        %3584 = vmatpush1.bf16.msra.mxu0 0
        %3585 = vmatprep.subr.bf16.mxu0 0
        %3586 = vmatpush1.bf16.msra.mxu0 0
        %3587 = vmatprep.mubr.bf16.mxu0 0
        %3588 = vmatmul.mubr.bf16.gmra.mrb[0].mxu0 %v3544
        %v3589 = vpop.f32.mrb[0].mxu0
        %v3590 = vadd.f32 %v3496, %v3589
        %v3591 = vpop.f32.mrb[0].mxu0
        %v3592 = vadd.f32 %v3500, %v3591
        %v3593 = vpop.f32.mrb[0].mxu0
        %v3594 = vadd.f32 %v3496, %v3593
        %v3595 = vpop.f32.mrb[0].mxu0
        %v3596 = vadd.f32 %v3500, %v3595
        %3597 = vmatprep.mubr.bf16.mxu0 0
        %3598 = vmatmul.mubr.bf16.gmra.mrb[0].mxu0 %v3547
        %v3599 = vpop.f32.mrb[0].mxu0
        %v3600 = vadd.f32 %v3496, %v3599
        %v3601 = vpop.f32.mrb[0].mxu0
        %v3602 = vadd.f32 %v3500, %v3601
        %v3603 = vpop.f32.mrb[0].mxu0
        %v3604 = vadd.f32 %v3496, %v3603
        %v3605 = vpop.f32.mrb[0].mxu0
        %v3606 = vadd.f32 %v3500, %v3605
        %3607 = vmatprep.mubr.bf16.mxu0 0
        %3608 = vmatmul.mubr.bf16.gmra.mrb[0].mxu0 %v3550
        %v3609 = vpop.f32.mrb[0].mxu0
        %v3610 = vadd.f32 %v3496, %v3609
        %v3611 = vpop.f32.mrb[0].mxu0
        %v3612 = vadd.f32 %v3500, %v3611
        %v3613 = vpop.f32.mrb[0].mxu0
        %v3614 = vadd.f32 %v3496, %v3613
        %v3615 = vpop.f32.mrb[0].mxu0
        %v3616 = vadd.f32 %v3500, %v3615
        %3617 = vmatprep.mubr.bf16.mxu0 0
        %3618 = vmatmul.mubr.bf16.gmra.mrb[0].mxu0 %v3553
        %v3619 = vpop.f32.mrb[0].mxu0
        %v3620 = vadd.f32 %v3496, %v3619
        %v3621 = vpop.f32.mrb[0].mxu0
        %v3622 = vadd.f32 %v3500, %v3621
        %v3623 = vpop.f32.mrb[0].mxu0
        %v3624 = vadd.f32 %v3496, %v3623
        %v3625 = vpop.f32.mrb[0].mxu0
        %v3626 = vadd.f32 %v3500, %v3625
        %3627 = vdwg.mxu0
        %v3628 = vmul.f32 %v3590, 0.5
        %v3629 = vmul.f32 %v3592, 0.5
        %v3630 = vmul.f32 %v3594, 0.5
        %v3631 = vmul.f32 %v3596, 0.5
        %v3632 = vmul.f32 %v3600, 0.5
        %v3633 = vmul.f32 %v3602, 0.5
        %v3634 = vmul.f32 %v3604, 0.5
        %v3635 = vmul.f32 %v3606, 0.5
        %v3636 = vmul.f32 %v3610, 0.5
        %v3637 = vmul.f32 %v3612, 0.5
        %v3638 = vmul.f32 %v3614, 0.5
        %v3639 = vmul.f32 %v3616, 0.5
        %v3640 = vmul.f32 %v3620, 0.5
        %v3641 = vmul.f32 %v3622, 0.5
        %v3642 = vmul.f32 %v3624, 0.5
        %v3643 = vmul.f32 %v3626, 0.5
        %v3644 = vmul.f32 %v3590, 0.70710677
        %v3645 = vmul.f32 %v3592, 0.70710677
        %v3646 = vmul.f32 %v3594, 0.70710677
        %v3647 = vmul.f32 %v3596, 0.70710677
        %v3648 = vmul.f32 %v3600, 0.70710677
        %v3649 = vmul.f32 %v3602, 0.70710677
        %v3650 = vmul.f32 %v3604, 0.70710677
        %v3651 = vmul.f32 %v3606, 0.70710677
        %v3652 = vmul.f32 %v3610, 0.70710677
        %v3653 = vmul.f32 %v3612, 0.70710677
        %v3654 = vmul.f32 %v3614, 0.70710677
        %v3655 = vmul.f32 %v3616, 0.70710677
        %v3656 = vmul.f32 %v3620, 0.70710677
        %v3657 = vmul.f32 %v3622, 0.70710677
        %v3658 = vmul.f32 %v3624, 0.70710677
        %v3659 = vmul.f32 %v3626, 0.70710677
        %v3660 = vand.u32 2147483647, %v3644
        %v3661 = vand.u32 2147483647, %v3645
        %v3662 = vand.u32 2147483647, %v3646
        %v3663 = vand.u32 2147483647, %v3647
        %v3664 = vand.u32 2147483647, %v3648
        %v3665 = vand.u32 2147483647, %v3649
        %v3666 = vand.u32 2147483647, %v3650
        %v3667 = vand.u32 2147483647, %v3651
        %v3668 = vand.u32 2147483647, %v3652
        %v3669 = vand.u32 2147483647, %v3653
        %v3670 = vand.u32 2147483647, %v3654
        %v3671 = vand.u32 2147483647, %v3655
        %v3672 = vand.u32 2147483647, %v3656
        %v3673 = vand.u32 2147483647, %v3657
        %v3674 = vand.u32 2147483647, %v3658
        %v3675 = vand.u32 2147483647, %v3659
        %v3676 = vmul.f32 %v3660, 0.3275911
        %v3677 = vmul.f32 %v3661, 0.3275911
        %v3678 = vmul.f32 %v3662, 0.3275911
        %v3679 = vmul.f32 %v3663, 0.3275911
        %v3680 = vmul.f32 %v3664, 0.3275911
        %v3681 = vmul.f32 %v3665, 0.3275911
        %v3682 = vmul.f32 %v3666, 0.3275911
        %v3683 = vmul.f32 %v3667, 0.3275911
        %v3684 = vmul.f32 %v3668, 0.3275911
        %v3685 = vmul.f32 %v3669, 0.3275911
        %v3686 = vmul.f32 %v3670, 0.3275911
        %v3687 = vmul.f32 %v3671, 0.3275911
        %v3688 = vmul.f32 %v3672, 0.3275911
        %v3689 = vmul.f32 %v3673, 0.3275911
        %v3690 = vmul.f32 %v3674, 0.3275911
        %v3691 = vmul.f32 %v3675, 0.3275911
        %v3692 = vadd.f32 %v3676, 1.0
        %v3693 = vadd.f32 %v3677, 1.0
        %v3694 = vadd.f32 %v3678, 1.0
        %v3695 = vadd.f32 %v3679, 1.0
        %v3696 = vadd.f32 %v3680, 1.0
        %v3697 = vadd.f32 %v3681, 1.0
        %v3698 = vadd.f32 %v3682, 1.0
        %v3699 = vadd.f32 %v3683, 1.0
        %v3700 = vadd.f32 %v3684, 1.0
        %v3701 = vadd.f32 %v3685, 1.0
        %v3702 = vadd.f32 %v3686, 1.0
        %v3703 = vadd.f32 %v3687, 1.0
        %v3704 = vadd.f32 %v3688, 1.0
        %v3705 = vadd.f32 %v3689, 1.0
        %v3706 = vadd.f32 %v3690, 1.0
        %v3707 = vadd.f32 %v3691, 1.0
        %v3708 = vrcp.pop %v3692
        %v3709 = vmul.f32 1.0, %v3708
        %v3710 = vrcp.pop %v3693
        %v3711 = vmul.f32 1.0, %v3710
        %v3712 = vrcp.pop %v3694
        %v3713 = vmul.f32 1.0, %v3712
        %v3714 = vrcp.pop %v3695
        %v3715 = vmul.f32 1.0, %v3714
        %v3716 = vrcp.pop %v3696
        %v3717 = vmul.f32 1.0, %v3716
        %v3718 = vrcp.pop %v3697
        %v3719 = vmul.f32 1.0, %v3718
        %v3720 = vrcp.pop %v3698
        %v3721 = vmul.f32 1.0, %v3720
        %v3722 = vrcp.pop %v3699
        %v3723 = vmul.f32 1.0, %v3722
        %v3724 = vrcp.pop %v3700
        %v3725 = vmul.f32 1.0, %v3724
        %v3726 = vrcp.pop %v3701
        %v3727 = vmul.f32 1.0, %v3726
        %v3728 = vrcp.pop %v3702
        %v3729 = vmul.f32 1.0, %v3728
        %v3730 = vrcp.pop %v3703
        %v3731 = vmul.f32 1.0, %v3730
        %v3732 = vrcp.pop %v3704
        %v3733 = vmul.f32 1.0, %v3732
        %v3734 = vrcp.pop %v3705
        %v3735 = vmul.f32 1.0, %v3734
        %v3736 = vrcp.pop %v3706
        %v3737 = vmul.f32 1.0, %v3736
        %v3738 = vrcp.pop %v3707
        %v3739 = vmul.f32 1.0, %v3738
        %v3740 = vmul.f32 %v3709, 1.0614054
        %v3741 = vmul.f32 %v3711, 1.0614054
        %v3742 = vmul.f32 %v3713, 1.0614054
        %v3743 = vmul.f32 %v3715, 1.0614054
        %v3744 = vmul.f32 %v3717, 1.0614054
        %v3745 = vmul.f32 %v3719, 1.0614054
        %v3746 = vmul.f32 %v3721, 1.0614054
        %v3747 = vmul.f32 %v3723, 1.0614054
        %v3748 = vmul.f32 %v3725, 1.0614054
        %v3749 = vmul.f32 %v3727, 1.0614054
        %v3750 = vmul.f32 %v3729, 1.0614054
        %v3751 = vmul.f32 %v3731, 1.0614054
        %v3752 = vmul.f32 %v3733, 1.0614054
        %v3753 = vmul.f32 %v3735, 1.0614054
        %v3754 = vmul.f32 %v3737, 1.0614054
        %v3755 = vmul.f32 %v3739, 1.0614054
        %v3756 = vadd.f32 %v3740, -1.4531521
        %v3757 = vadd.f32 %v3741, -1.4531521
        %v3758 = vadd.f32 %v3742, -1.4531521
        %v3759 = vadd.f32 %v3743, -1.4531521
        %v3760 = vadd.f32 %v3744, -1.4531521
        %v3761 = vadd.f32 %v3745, -1.4531521
        %v3762 = vadd.f32 %v3746, -1.4531521
        %v3763 = vadd.f32 %v3747, -1.4531521
        %v3764 = vadd.f32 %v3748, -1.4531521
        %v3765 = vadd.f32 %v3749, -1.4531521
        %v3766 = vadd.f32 %v3750, -1.4531521
        %v3767 = vadd.f32 %v3751, -1.4531521
        %v3768 = vadd.f32 %v3752, -1.4531521
        %v3769 = vadd.f32 %v3753, -1.4531521
        %v3770 = vadd.f32 %v3754, -1.4531521
        %v3771 = vadd.f32 %v3755, -1.4531521
        %v3772 = vmul.f32 %v3756, %v3709
        %v3773 = vmul.f32 %v3757, %v3711
        %v3774 = vmul.f32 %v3758, %v3713
        %v3775 = vmul.f32 %v3759, %v3715
        %v3776 = vmul.f32 %v3760, %v3717
        %v3777 = vmul.f32 %v3761, %v3719
        %v3778 = vmul.f32 %v3762, %v3721
        %v3779 = vmul.f32 %v3763, %v3723
        %v3780 = vmul.f32 %v3764, %v3725
        %v3781 = vmul.f32 %v3765, %v3727
        %v3782 = vmul.f32 %v3766, %v3729
        %v3783 = vmul.f32 %v3767, %v3731
        %v3784 = vmul.f32 %v3768, %v3733
        %v3785 = vmul.f32 %v3769, %v3735
        %v3786 = vmul.f32 %v3770, %v3737
        %v3787 = vmul.f32 %v3771, %v3739
        %v3788 = vadd.f32 %v3772, 1.4214138
        %v3789 = vadd.f32 %v3773, 1.4214138
        %v3790 = vadd.f32 %v3774, 1.4214138
        %v3791 = vadd.f32 %v3775, 1.4214138
        %v3792 = vadd.f32 %v3776, 1.4214138
        %v3793 = vadd.f32 %v3777, 1.4214138
        %v3794 = vadd.f32 %v3778, 1.4214138
        %v3795 = vadd.f32 %v3779, 1.4214138
        %v3796 = vadd.f32 %v3780, 1.4214138
        %v3797 = vadd.f32 %v3781, 1.4214138
        %v3798 = vadd.f32 %v3782, 1.4214138
        %v3799 = vadd.f32 %v3783, 1.4214138
        %v3800 = vadd.f32 %v3784, 1.4214138
        %v3801 = vadd.f32 %v3785, 1.4214138
        %v3802 = vadd.f32 %v3786, 1.4214138
        %v3803 = vadd.f32 %v3787, 1.4214138
        %v3804 = vmul.f32 %v3788, %v3709
        %v3805 = vmul.f32 %v3789, %v3711
        %v3806 = vmul.f32 %v3790, %v3713
        %v3807 = vmul.f32 %v3791, %v3715
        %v3808 = vmul.f32 %v3792, %v3717
        %v3809 = vmul.f32 %v3793, %v3719
        %v3810 = vmul.f32 %v3794, %v3721
        %v3811 = vmul.f32 %v3795, %v3723
        %v3812 = vmul.f32 %v3796, %v3725
        %v3813 = vmul.f32 %v3797, %v3727
        %v3814 = vmul.f32 %v3798, %v3729
        %v3815 = vmul.f32 %v3799, %v3731
        %v3816 = vmul.f32 %v3800, %v3733
        %v3817 = vmul.f32 %v3801, %v3735
        %v3818 = vmul.f32 %v3802, %v3737
        %v3819 = vmul.f32 %v3803, %v3739
        %v3820 = vadd.f32 %v3804, -0.28449672
        %v3821 = vadd.f32 %v3805, -0.28449672
        %v3822 = vadd.f32 %v3806, -0.28449672
        %v3823 = vadd.f32 %v3807, -0.28449672
        %v3824 = vadd.f32 %v3808, -0.28449672
        %v3825 = vadd.f32 %v3809, -0.28449672
        %v3826 = vadd.f32 %v3810, -0.28449672
        %v3827 = vadd.f32 %v3811, -0.28449672
        %v3828 = vadd.f32 %v3812, -0.28449672
        %v3829 = vadd.f32 %v3813, -0.28449672
        %v3830 = vadd.f32 %v3814, -0.28449672
        %v3831 = vadd.f32 %v3815, -0.28449672
        %v3832 = vadd.f32 %v3816, -0.28449672
        %v3833 = vadd.f32 %v3817, -0.28449672
        %v3834 = vadd.f32 %v3818, -0.28449672
        %v3835 = vadd.f32 %v3819, -0.28449672
        %v3836 = vmul.f32 %v3820, %v3709
        %v3837 = vmul.f32 %v3821, %v3711
        %v3838 = vmul.f32 %v3822, %v3713
        %v3839 = vmul.f32 %v3823, %v3715
        %v3840 = vmul.f32 %v3824, %v3717
        %v3841 = vmul.f32 %v3825, %v3719
        %v3842 = vmul.f32 %v3826, %v3721
        %v3843 = vmul.f32 %v3827, %v3723
        %v3844 = vmul.f32 %v3828, %v3725
        %v3845 = vmul.f32 %v3829, %v3727
        %v3846 = vmul.f32 %v3830, %v3729
        %v3847 = vmul.f32 %v3831, %v3731
        %v3848 = vmul.f32 %v3832, %v3733
        %v3849 = vmul.f32 %v3833, %v3735
        %v3850 = vmul.f32 %v3834, %v3737
        %v3851 = vmul.f32 %v3835, %v3739
        %v3852 = vadd.f32 %v3836, 0.2548296
        %v3853 = vadd.f32 %v3837, 0.2548296
        %v3854 = vadd.f32 %v3838, 0.2548296
        %v3855 = vadd.f32 %v3839, 0.2548296
        %v3856 = vadd.f32 %v3840, 0.2548296
        %v3857 = vadd.f32 %v3841, 0.2548296
        %v3858 = vadd.f32 %v3842, 0.2548296
        %v3859 = vadd.f32 %v3843, 0.2548296
        %v3860 = vadd.f32 %v3844, 0.2548296
        %v3861 = vadd.f32 %v3845, 0.2548296
        %v3862 = vadd.f32 %v3846, 0.2548296
        %v3863 = vadd.f32 %v3847, 0.2548296
        %v3864 = vadd.f32 %v3848, 0.2548296
        %v3865 = vadd.f32 %v3849, 0.2548296
        %v3866 = vadd.f32 %v3850, 0.2548296
        %v3867 = vadd.f32 %v3851, 0.2548296
        %v3868 = vmul.f32 %v3852, %v3709
        %v3869 = vmul.f32 %v3853, %v3711
        %v3870 = vmul.f32 %v3854, %v3713
        %v3871 = vmul.f32 %v3855, %v3715
        %v3872 = vmul.f32 %v3856, %v3717
        %v3873 = vmul.f32 %v3857, %v3719
        %v3874 = vmul.f32 %v3858, %v3721
        %v3875 = vmul.f32 %v3859, %v3723
        %v3876 = vmul.f32 %v3860, %v3725
        %v3877 = vmul.f32 %v3861, %v3727
        %v3878 = vmul.f32 %v3862, %v3729
        %v3879 = vmul.f32 %v3863, %v3731
        %v3880 = vmul.f32 %v3864, %v3733
        %v3881 = vmul.f32 %v3865, %v3735
        %v3882 = vmul.f32 %v3866, %v3737
        %v3883 = vmul.f32 %v3867, %v3739
        %v3884 = vsub.f32 0.0, %v3660
        %v3885 = vsub.f32 0.0, %v3661
        %v3886 = vsub.f32 0.0, %v3662
        %v3887 = vsub.f32 0.0, %v3663
        %v3888 = vsub.f32 0.0, %v3664
        %v3889 = vsub.f32 0.0, %v3665
        %v3890 = vsub.f32 0.0, %v3666
        %v3891 = vsub.f32 0.0, %v3667
        %v3892 = vsub.f32 0.0, %v3668
        %v3893 = vsub.f32 0.0, %v3669
        %v3894 = vsub.f32 0.0, %v3670
        %v3895 = vsub.f32 0.0, %v3671
        %v3896 = vsub.f32 0.0, %v3672
        %v3897 = vsub.f32 0.0, %v3673
        %v3898 = vsub.f32 0.0, %v3674
        %v3899 = vsub.f32 0.0, %v3675
        %v3900 = vmul.f32 %v3884, %v3660
        %v3901 = vmul.f32 %v3885, %v3661
        %v3902 = vmul.f32 %v3886, %v3662
        %v3903 = vmul.f32 %v3887, %v3663
        %v3904 = vmul.f32 %v3888, %v3664
        %v3905 = vmul.f32 %v3889, %v3665
        %v3906 = vmul.f32 %v3890, %v3666
        %v3907 = vmul.f32 %v3891, %v3667
        %v3908 = vmul.f32 %v3892, %v3668
        %v3909 = vmul.f32 %v3893, %v3669
        %v3910 = vmul.f32 %v3894, %v3670
        %v3911 = vmul.f32 %v3895, %v3671
        %v3912 = vmul.f32 %v3896, %v3672
        %v3913 = vmul.f32 %v3897, %v3673
        %v3914 = vmul.f32 %v3898, %v3674
        %v3915 = vmul.f32 %v3899, %v3675
        %v3916 = vmul.f32 %v3900, 1.442695
        %v3917 = vpow.pop %v3916
        %v3918 = vmul.f32 %v3901, 1.442695
        %v3919 = vpow.pop %v3918
        %v3920 = vmul.f32 %v3902, 1.442695
        %v3921 = vpow.pop %v3920
        %v3922 = vmul.f32 %v3903, 1.442695
        %v3923 = vpow.pop %v3922
        %v3924 = vmul.f32 %v3904, 1.442695
        %v3925 = vpow.pop %v3924
        %v3926 = vmul.f32 %v3905, 1.442695
        %v3927 = vpow.pop %v3926
        %v3928 = vmul.f32 %v3906, 1.442695
        %v3929 = vpow.pop %v3928
        %v3930 = vmul.f32 %v3907, 1.442695
        %v3931 = vpow.pop %v3930
        %v3932 = vmul.f32 %v3908, 1.442695
        %v3933 = vpow.pop %v3932
        %v3934 = vmul.f32 %v3909, 1.442695
        %v3935 = vpow.pop %v3934
        %v3936 = vmul.f32 %v3910, 1.442695
        %v3937 = vpow.pop %v3936
        %v3938 = vmul.f32 %v3911, 1.442695
        %v3939 = vpow.pop %v3938
        %v3940 = vmul.f32 %v3912, 1.442695
        %v3941 = vpow.pop %v3940
        %v3942 = vmul.f32 %v3913, 1.442695
        %v3943 = vpow.pop %v3942
        %v3944 = vmul.f32 %v3914, 1.442695
        %v3945 = vpow.pop %v3944
        %v3946 = vmul.f32 %v3915, 1.442695
        %v3947 = vpow.pop %v3946
        %v3948 = vmul.f32 %v3868, %v3917
        %v3949 = vmul.f32 %v3869, %v3919
        %v3950 = vmul.f32 %v3870, %v3921
        %v3951 = vmul.f32 %v3871, %v3923
        %v3952 = vmul.f32 %v3872, %v3925
        %v3953 = vmul.f32 %v3873, %v3927
        %v3954 = vmul.f32 %v3874, %v3929
        %v3955 = vmul.f32 %v3875, %v3931
        %v3956 = vmul.f32 %v3876, %v3933
        %v3957 = vmul.f32 %v3877, %v3935
        %v3958 = vmul.f32 %v3878, %v3937
        %v3959 = vmul.f32 %v3879, %v3939
        %v3960 = vmul.f32 %v3880, %v3941
        %v3961 = vmul.f32 %v3881, %v3943
        %v3962 = vmul.f32 %v3882, %v3945
        %v3963 = vmul.f32 %v3883, %v3947
        %v3964 = vsub.f32 1.0, %v3948
        %v3965 = vsub.f32 1.0, %v3949
        %v3966 = vsub.f32 1.0, %v3950
        %v3967 = vsub.f32 1.0, %v3951
        %v3968 = vsub.f32 1.0, %v3952
        %v3969 = vsub.f32 1.0, %v3953
        %v3970 = vsub.f32 1.0, %v3954
        %v3971 = vsub.f32 1.0, %v3955
        %v3972 = vsub.f32 1.0, %v3956
        %v3973 = vsub.f32 1.0, %v3957
        %v3974 = vsub.f32 1.0, %v3958
        %v3975 = vsub.f32 1.0, %v3959
        %v3976 = vsub.f32 1.0, %v3960
        %v3977 = vsub.f32 1.0, %v3961
        %v3978 = vsub.f32 1.0, %v3962
        %v3979 = vsub.f32 1.0, %v3963
        %vm3980 = vcmp.ge.f32.partialorder %v3644, 0.0
        %vm3981 = vcmp.ge.f32.partialorder %v3645, 0.0
        %vm3982 = vcmp.ge.f32.partialorder %v3646, 0.0
        %vm3983 = vcmp.ge.f32.partialorder %v3647, 0.0
        %vm3984 = vcmp.ge.f32.partialorder %v3648, 0.0
        %vm3985 = vcmp.ge.f32.partialorder %v3649, 0.0
        %vm3986 = vcmp.ge.f32.partialorder %v3650, 0.0
        %vm3987 = vcmp.ge.f32.partialorder %v3651, 0.0
        %vm3988 = vcmp.ge.f32.partialorder %v3652, 0.0
        %vm3989 = vcmp.ge.f32.partialorder %v3653, 0.0
        %vm3990 = vcmp.ge.f32.partialorder %v3654, 0.0
        %vm3991 = vcmp.ge.f32.partialorder %v3655, 0.0
        %vm3992 = vcmp.ge.f32.partialorder %v3656, 0.0
        %vm3993 = vcmp.ge.f32.partialorder %v3657, 0.0
        %vm3994 = vcmp.ge.f32.partialorder %v3658, 0.0
        %vm3995 = vcmp.ge.f32.partialorder %v3659, 0.0
        %v3996 = vsub.f32 0.0, %v3964
        %v3997 = vsub.f32 0.0, %v3965
        %v3998 = vsub.f32 0.0, %v3966
        %v3999 = vsub.f32 0.0, %v3967
        %v4000 = vsub.f32 0.0, %v3968
        %v4001 = vsub.f32 0.0, %v3969
        %v4002 = vsub.f32 0.0, %v3970
        %v4003 = vsub.f32 0.0, %v3971
        %v4004 = vsub.f32 0.0, %v3972
        %v4005 = vsub.f32 0.0, %v3973
        %v4006 = vsub.f32 0.0, %v3974
        %v4007 = vsub.f32 0.0, %v3975
        %v4008 = vsub.f32 0.0, %v3976
        %v4009 = vsub.f32 0.0, %v3977
        %v4010 = vsub.f32 0.0, %v3978
        %v4011 = vsub.f32 0.0, %v3979
        %v4012 = vsel %vm3980, %v3964, %v3996
        %v4013 = vsel %vm3981, %v3965, %v3997
        %v4014 = vsel %vm3982, %v3966, %v3998
        %v4015 = vsel %vm3983, %v3967, %v3999
        %v4016 = vsel %vm3984, %v3968, %v4000
        %v4017 = vsel %vm3985, %v3969, %v4001
        %v4018 = vsel %vm3986, %v3970, %v4002
        %v4019 = vsel %vm3987, %v3971, %v4003
        %v4020 = vsel %vm3988, %v3972, %v4004
        %v4021 = vsel %vm3989, %v3973, %v4005
        %v4022 = vsel %vm3990, %v3974, %v4006
        %v4023 = vsel %vm3991, %v3975, %v4007
        %v4024 = vsel %vm3992, %v3976, %v4008
        %v4025 = vsel %vm3993, %v3977, %v4009
        %v4026 = vsel %vm3994, %v3978, %v4010
        %v4027 = vsel %vm3995, %v3979, %v4011
        %v4028 = vadd.f32 %v4012, 1.0
        %v4029 = vadd.f32 %v4013, 1.0
        %v4030 = vadd.f32 %v4014, 1.0
        %v4031 = vadd.f32 %v4015, 1.0
        %v4032 = vadd.f32 %v4016, 1.0
        %v4033 = vadd.f32 %v4017, 1.0
        %v4034 = vadd.f32 %v4018, 1.0
        %v4035 = vadd.f32 %v4019, 1.0
        %v4036 = vadd.f32 %v4020, 1.0
        %v4037 = vadd.f32 %v4021, 1.0
        %v4038 = vadd.f32 %v4022, 1.0
        %v4039 = vadd.f32 %v4023, 1.0
        %v4040 = vadd.f32 %v4024, 1.0
        %v4041 = vadd.f32 %v4025, 1.0
        %v4042 = vadd.f32 %v4026, 1.0
        %v4043 = vadd.f32 %v4027, 1.0
        %v4044 = vmul.f32 %v3628, %v4028
        %v4045 = vmul.f32 %v3629, %v4029
        %v4046 = vmul.f32 %v3630, %v4030
        %v4047 = vmul.f32 %v3631, %v4031
        %v4048 = vmul.f32 %v3632, %v4032
        %v4049 = vmul.f32 %v3633, %v4033
        %v4050 = vmul.f32 %v3634, %v4034
        %v4051 = vmul.f32 %v3635, %v4035
        %v4052 = vmul.f32 %v3636, %v4036
        %v4053 = vmul.f32 %v3637, %v4037
        %v4054 = vmul.f32 %v3638, %v4038
        %v4055 = vmul.f32 %v3639, %v4039
        %v4056 = vmul.f32 %v3640, %v4040
        %v4057 = vmul.f32 %v3641, %v4041
        %v4058 = vmul.f32 %v3642, %v4042
        %v4059 = vmul.f32 %v3643, %v4043
        %v4060 = vpack.c.bf16 %v4046, %v4044
        %v4061 = vpack.c.bf16 %v4047, %v4045
        %v4062 = vpack.c.bf16 %v4050, %v4048
        %v4063 = vpack.c.bf16 %v4051, %v4049
        %v4064 = vpack.c.bf16 %v4054, %v4052
        %v4065 = vpack.c.bf16 %v4055, %v4053
        %v4066 = vpack.c.bf16 %v4058, %v4056
        %v4067 = vpack.c.bf16 %v4059, %v4057
        %v4068 = vld [vmem:[%s9] sm:$0xf]
        %v4069 = vld [vmem:[%s9 + $0x4] sm:$0xf]
        %v4070 = vld [vmem:[%s9 + $0x8] sm:$0xf]
        %v4071 = vld [vmem:[%s9 + $0xc] sm:$0xf]
        %v4072 = vld [vmem:[%s9 + $0x10] sm:$0xf]
        %v4073 = vld [vmem:[%s9 + $0x14] sm:$0xf]
        %v4074 = vld [vmem:[%s9 + $0x18] sm:$0xf]
        %v4075 = vld [vmem:[%s9 + $0x1c] sm:$0xf]
        %v4076 = vld [vmem:[%s9 + $0x20] sm:$0xf]
        %v4077 = vld [vmem:[%s9 + $0x24] sm:$0xf]
        %v4078 = vld [vmem:[%s9 + $0x28] sm:$0xf]
        %v4079 = vld [vmem:[%s9 + $0x2c] sm:$0xf]
        %v4080 = vld [vmem:[%s9 + $0x30] sm:$0xf]
        %v4081 = vld [vmem:[%s9 + $0x34] sm:$0xf]
        %v4082 = vld [vmem:[%s9 + $0x38] sm:$0xf]
        %v4083 = vld [vmem:[%s9 + $0x3c] sm:$0xf]
        %v4084 = vld [vmem:[%s9 + $0x40] sm:$0xf]
        %v4085 = vld [vmem:[%s9 + $0x44] sm:$0xf]
        %v4086 = vld [vmem:[%s9 + $0x48] sm:$0xf]
        %v4087 = vld [vmem:[%s9 + $0x4c] sm:$0xf]
        %v4088 = vld [vmem:[%s9 + $0x50] sm:$0xf]
        %v4089 = vld [vmem:[%s9 + $0x54] sm:$0xf]
        %v4090 = vld [vmem:[%s9 + $0x58] sm:$0xf]
        %v4091 = vld [vmem:[%s9 + $0x5c] sm:$0xf]
        %v4092 = vld [vmem:[%s9 + $0x60] sm:$0xf]
        %v4093 = vld [vmem:[%s9 + $0x64] sm:$0xf]
        %v4094 = vld [vmem:[%s9 + $0x68] sm:$0xf]
        %v4095 = vld [vmem:[%s9 + $0x6c] sm:$0xf]
        %v4096 = vld [vmem:[%s9 + $0x70] sm:$0xf]
        %v4097 = vld [vmem:[%s9 + $0x74] sm:$0xf]
        %v4098 = vld [vmem:[%s9 + $0x78] sm:$0xf]
        %v4099 = vld [vmem:[%s9 + $0x7c] sm:$0xf]
        %v4100 = vld [vmem:[%s10] sm:$0x1]
        %v4102 = vlaneseq
        %v4103 = vshrl.u32 %v4102, 7
        %v4104 = vsub.s32 0, %v4103
        %v4105 = vrot.slane %v4100, %v4104
        %v4139 = vunpack.c.l.b16 %v4068
        %v4140 = vunpack.c.l.b16 %v4069
        %v4141 = vunpack.c.l.b16 %v4070
        %v4142 = vunpack.c.l.b16 %v4071
        %v4143 = vunpack.c.l.b16 %v4072
        %v4144 = vunpack.c.l.b16 %v4073
        %v4145 = vunpack.c.l.b16 %v4074
        %v4146 = vunpack.c.l.b16 %v4075
        %v4147 = vunpack.c.l.b16 %v4076
        %v4148 = vunpack.c.l.b16 %v4077
        %v4149 = vunpack.c.l.b16 %v4078
        %v4150 = vunpack.c.l.b16 %v4079
        %v4151 = vunpack.c.l.b16 %v4080
        %v4152 = vunpack.c.l.b16 %v4081
        %v4153 = vunpack.c.l.b16 %v4082
        %v4154 = vunpack.c.l.b16 %v4083
        %v4155 = vunpack.c.l.b16 %v4084
        %v4156 = vunpack.c.l.b16 %v4085
        %v4157 = vunpack.c.l.b16 %v4086
        %v4158 = vunpack.c.l.b16 %v4087
        %v4159 = vunpack.c.l.b16 %v4088
        %v4160 = vunpack.c.l.b16 %v4089
        %v4161 = vunpack.c.l.b16 %v4090
        %v4162 = vunpack.c.l.b16 %v4091
        %v4163 = vunpack.c.l.b16 %v4092
        %v4164 = vunpack.c.l.b16 %v4093
        %v4165 = vunpack.c.l.b16 %v4094
        %v4166 = vunpack.c.l.b16 %v4095
        %v4167 = vunpack.c.l.b16 %v4096
        %v4168 = vunpack.c.l.b16 %v4097
        %v4169 = vunpack.c.l.b16 %v4098
        %v4170 = vunpack.c.l.b16 %v4099
        %v4171 = vpack.c.b16 %v4140, %v4139
        %v4172 = vpack.c.b16 %v4142, %v4141
        %v4173 = vpack.c.b16 %v4144, %v4143
        %v4174 = vpack.c.b16 %v4146, %v4145
        %v4175 = vpack.c.b16 %v4148, %v4147
        %v4176 = vpack.c.b16 %v4150, %v4149
        %v4177 = vpack.c.b16 %v4152, %v4151
        %v4178 = vpack.c.b16 %v4154, %v4153
        %v4179 = vpack.c.b16 %v4156, %v4155
        %v4180 = vpack.c.b16 %v4158, %v4157
        %v4181 = vpack.c.b16 %v4160, %v4159
        %v4182 = vpack.c.b16 %v4162, %v4161
        %v4183 = vpack.c.b16 %v4164, %v4163
        %v4184 = vpack.c.b16 %v4166, %v4165
        %v4185 = vpack.c.b16 %v4168, %v4167
        %v4186 = vpack.c.b16 %v4170, %v4169
        %4203 = vmatprep.subr.bf16.mxu0 0
        %4204 = vmatpush1.bf16.msra.mxu0 %v4171
        %4205 = vmatprep.subr.bf16.mxu0 0
        %4206 = vmatpush1.bf16.msra.mxu0 %v4172
        %4207 = vmatprep.subr.bf16.mxu0 0
        %4208 = vmatpush1.bf16.msra.mxu0 %v4173
        %4209 = vmatprep.subr.bf16.mxu0 0
        %4210 = vmatpush1.bf16.msra.mxu0 %v4174
        %4211 = vmatprep.subr.bf16.mxu0 0
        %4212 = vmatpush1.bf16.msra.mxu0 %v4175
        %4213 = vmatprep.subr.bf16.mxu0 0
        %4214 = vmatpush1.bf16.msra.mxu0 %v4176
        %4215 = vmatprep.subr.bf16.mxu0 0
        %4216 = vmatpush1.bf16.msra.mxu0 %v4177
        %4217 = vmatprep.subr.bf16.mxu0 0
        %4218 = vmatpush1.bf16.msra.mxu0 %v4178
        %4219 = vmatprep.subr.bf16.mxu0 0
        %4220 = vmatpush1.bf16.msra.mxu0 %v4179
        %4221 = vmatprep.subr.bf16.mxu0 0
        %4222 = vmatpush1.bf16.msra.mxu0 %v4180
        %4223 = vmatprep.subr.bf16.mxu0 0
        %4224 = vmatpush1.bf16.msra.mxu0 %v4181
        %4225 = vmatprep.subr.bf16.mxu0 0
        %4226 = vmatpush1.bf16.msra.mxu0 %v4182
        %4227 = vmatprep.subr.bf16.mxu0 0
        %4228 = vmatpush1.bf16.msra.mxu0 %v4183
        %4229 = vmatprep.subr.bf16.mxu0 0
        %4230 = vmatpush1.bf16.msra.mxu0 %v4184
        %4231 = vmatprep.subr.bf16.mxu0 0
        %4232 = vmatpush1.bf16.msra.mxu0 %v4185
        %4233 = vmatprep.subr.bf16.mxu0 0
        %4234 = vmatpush1.bf16.msra.mxu0 %v4186
        %4235 = vmatprep.mubr.bf16.mxu0 %v4061
        %4236 = vmatmul.mubr.bf16.gmra.mrb[0].mxu0 %v4060
        %v4237 = vpop.f32.mrb[0].mxu0
        %v4238 = vadd.f32 %v4105, %v4237
        %v4239 = vpop.f32.mrb[0].mxu0
        %v4240 = vpop.f32.mrb[0].mxu0
        %v4241 = vadd.f32 %v4105, %v4240
        %v4242 = vpop.f32.mrb[0].mxu0
        %4243 = vmatprep.mubr.bf16.mxu0 %v4063
        %4244 = vmatmul.mubr.bf16.gmra.mrb[0].mxu0 %v4062
        %v4245 = vpop.f32.mrb[0].mxu0
        %v4246 = vadd.f32 %v4105, %v4245
        %v4247 = vpop.f32.mrb[0].mxu0
        %v4248 = vpop.f32.mrb[0].mxu0
        %v4249 = vadd.f32 %v4105, %v4248
        %v4250 = vpop.f32.mrb[0].mxu0
        %4251 = vmatprep.mubr.bf16.mxu0 %v4065
        %4252 = vmatmul.mubr.bf16.gmra.mrb[0].mxu0 %v4064
        %v4253 = vpop.f32.mrb[0].mxu0
        %v4254 = vadd.f32 %v4105, %v4253
        %v4255 = vpop.f32.mrb[0].mxu0
        %v4256 = vpop.f32.mrb[0].mxu0
        %v4257 = vadd.f32 %v4105, %v4256
        %v4258 = vpop.f32.mrb[0].mxu0
        %4259 = vmatprep.mubr.bf16.mxu0 %v4067
        %4260 = vmatmul.mubr.bf16.gmra.mrb[0].mxu0 %v4066
        %v4261 = vpop.f32.mrb[0].mxu0
        %v4262 = vadd.f32 %v4105, %v4261
        %v4263 = vpop.f32.mrb[0].mxu0
        %v4264 = vpop.f32.mrb[0].mxu0
        %v4265 = vadd.f32 %v4105, %v4264
        %v4266 = vpop.f32.mrb[0].mxu0
        %4267 = vdwg.mxu0
        %v4268 = vadd.f32 %v3471, %v4238
        %v4269 = vadd.f32 %v3472, %v4241
        %v4270 = vadd.f32 %v3473, %v4246
        %v4271 = vadd.f32 %v3474, %v4249
        %v4272 = vadd.f32 %v3475, %v4254
        %v4273 = vadd.f32 %v3476, %v4257
        %v4274 = vadd.f32 %v3477, %v4262
        %v4275 = vadd.f32 %v3478, %v4265
        %v4276 = vld [vmem:[%s11] sm:$0x1]
        %v4277 = vld [vmem:[%s12] sm:$0x1]
        %v4278 = vsel %vm542, %v4268, 0.0
        %4279 = vadd.xlane.f32.xlu0 %v4278
        %v4280 = vpop.xlane.xlu0 %4279
        %v4281 = vsel %vm542, %v4269, 0.0
        %4282 = vadd.xlane.f32.xlu0 %v4281
        %v4283 = vpop.xlane.xlu0 %4282
        %v4284 = vsel %vm542, %v4270, 0.0
        %4285 = vadd.xlane.f32.xlu0 %v4284
        %v4286 = vpop.xlane.xlu0 %4285
        %v4287 = vsel %vm542, %v4271, 0.0
        %4288 = vadd.xlane.f32.xlu0 %v4287
        %v4289 = vpop.xlane.xlu0 %4288
        %v4290 = vsel %vm542, %v4272, 0.0
        %4291 = vadd.xlane.f32.xlu0 %v4290
        %v4292 = vpop.xlane.xlu0 %4291
        %v4293 = vsel %vm542, %v4273, 0.0
        %4294 = vadd.xlane.f32.xlu0 %v4293
        %v4295 = vpop.xlane.xlu0 %4294
        %v4296 = vsel %vm542, %v4274, 0.0
        %4297 = vadd.xlane.f32.xlu0 %v4296
        %v4298 = vpop.xlane.xlu0 %4297
        %v4299 = vsel %vm542, %v4275, 0.0
        %4300 = vadd.xlane.f32.xlu0 %v4299
        %v4301 = vpop.xlane.xlu0 %4300
        %v4302 = vmul.f32 %v4280, %v3370
        %v4303 = vmul.f32 %v4283, %v3370
        %v4304 = vmul.f32 %v4286, %v3370
        %v4305 = vmul.f32 %v4289, %v3370
        %v4306 = vmul.f32 %v4292, %v3370
        %v4307 = vmul.f32 %v4295, %v3370
        %v4308 = vmul.f32 %v4298, %v3370
        %v4309 = vmul.f32 %v4301, %v3370
        %v4310 = vsub.f32 %v4268, %v4302
        %v4311 = vsub.f32 %v4269, %v4303
        %v4312 = vsub.f32 %v4270, %v4304
        %v4313 = vsub.f32 %v4271, %v4305
        %v4314 = vsub.f32 %v4272, %v4306
        %v4315 = vsub.f32 %v4273, %v4307
        %v4316 = vsub.f32 %v4274, %v4308
        %v4317 = vsub.f32 %v4275, %v4309
        %v4318 = vmul.f32 %v4310, %v4310
        %v4319 = vmul.f32 %v4311, %v4311
        %v4320 = vmul.f32 %v4312, %v4312
        %v4321 = vmul.f32 %v4313, %v4313
        %v4322 = vmul.f32 %v4314, %v4314
        %v4323 = vmul.f32 %v4315, %v4315
        %v4324 = vmul.f32 %v4316, %v4316
        %v4325 = vmul.f32 %v4317, %v4317
        %v4326 = vsel %vm542, %v4318, 0.0
        %4327 = vadd.xlane.f32.xlu0 %v4326
        %v4328 = vpop.xlane.xlu0 %4327
        %v4329 = vsel %vm542, %v4319, 0.0
        %4330 = vadd.xlane.f32.xlu0 %v4329
        %v4331 = vpop.xlane.xlu0 %4330
        %v4332 = vsel %vm542, %v4320, 0.0
        %4333 = vadd.xlane.f32.xlu0 %v4332
        %v4334 = vpop.xlane.xlu0 %4333
        %v4335 = vsel %vm542, %v4321, 0.0
        %4336 = vadd.xlane.f32.xlu0 %v4335
        %v4337 = vpop.xlane.xlu0 %4336
        %v4338 = vsel %vm542, %v4322, 0.0
        %4339 = vadd.xlane.f32.xlu0 %v4338
        %v4340 = vpop.xlane.xlu0 %4339
        %v4341 = vsel %vm542, %v4323, 0.0
        %4342 = vadd.xlane.f32.xlu0 %v4341
        %v4343 = vpop.xlane.xlu0 %4342
        %v4344 = vsel %vm542, %v4324, 0.0
        %4345 = vadd.xlane.f32.xlu0 %v4344
        %v4346 = vpop.xlane.xlu0 %4345
        %v4347 = vsel %vm542, %v4325, 0.0
        %4348 = vadd.xlane.f32.xlu0 %v4347
        %v4349 = vpop.xlane.xlu0 %4348
        %v4350 = vmul.f32 %v4328, %v3370
        %v4351 = vmul.f32 %v4331, %v3370
        %v4352 = vmul.f32 %v4334, %v3370
        %v4353 = vmul.f32 %v4337, %v3370
        %v4354 = vmul.f32 %v4340, %v3370
        %v4355 = vmul.f32 %v4343, %v3370
        %v4356 = vmul.f32 %v4346, %v3370
        %v4357 = vmul.f32 %v4349, %v3370
        %v4358 = vadd.f32 %v4350, 1e-05
        %v4359 = vadd.f32 %v4351, 1e-05
        %v4360 = vadd.f32 %v4352, 1e-05
        %v4361 = vadd.f32 %v4353, 1e-05
        %v4362 = vadd.f32 %v4354, 1e-05
        %v4363 = vadd.f32 %v4355, 1e-05
        %v4364 = vadd.f32 %v4356, 1e-05
        %v4365 = vadd.f32 %v4357, 1e-05
        %v4366 = vrsqrt.pop %v4358
        %v4367 = vrsqrt.pop %v4359
        %v4368 = vrsqrt.pop %v4360
        %v4369 = vrsqrt.pop %v4361
        %v4370 = vrsqrt.pop %v4362
        %v4371 = vrsqrt.pop %v4363
        %v4372 = vrsqrt.pop %v4364
        %v4373 = vrsqrt.pop %v4365
        %v4374 = vmul.f32 %v4310, %v4366
        %v4375 = vmul.f32 %v4311, %v4367
        %v4376 = vmul.f32 %v4312, %v4368
        %v4377 = vmul.f32 %v4313, %v4369
        %v4378 = vmul.f32 %v4314, %v4370
        %v4379 = vmul.f32 %v4315, %v4371
        %v4380 = vmul.f32 %v4316, %v4372
        %v4381 = vmul.f32 %v4317, %v4373
        %v4383 = vlaneseq
        %v4384 = vshrl.u32 %v4383, 7
        %v4385 = vsub.s32 0, %v4384
        %v4386 = vrot.slane %v4276, %v4385
        %v4388 = vmul.f32 %v4374, %v4386
        %v4389 = vmul.f32 %v4375, %v4386
        %v4390 = vmul.f32 %v4376, %v4386
        %v4391 = vmul.f32 %v4377, %v4386
        %v4392 = vmul.f32 %v4378, %v4386
        %v4393 = vmul.f32 %v4379, %v4386
        %v4394 = vmul.f32 %v4380, %v4386
        %v4395 = vmul.f32 %v4381, %v4386
        %v4397 = vlaneseq
        %v4398 = vshrl.u32 %v4397, 7
        %v4399 = vsub.s32 0, %v4398
        %v4400 = vrot.slane %v4277, %v4399
        %v4402 = vadd.f32 %v4388, %v4400
        %v4403 = vadd.f32 %v4389, %v4400
        %v4404 = vadd.f32 %v4390, %v4400
        %v4405 = vadd.f32 %v4391, %v4400
        %v4406 = vadd.f32 %v4392, %v4400
        %v4407 = vadd.f32 %v4393, %v4400
        %v4408 = vadd.f32 %v4394, %v4400
        %v4409 = vadd.f32 %v4395, %v4400
        %4410 = vst.msk [vmem:[%s463] sm:$0xff] %vm542, %v4402
        %4411 = vst.msk [vmem:[%s463 + $0x8] sm:$0xff] %vm542, %v4403
        %4412 = vst.msk [vmem:[%s463 + $0x10] sm:$0xff] %vm542, %v4404
        %4413 = vst.msk [vmem:[%s463 + $0x18] sm:$0xff] %vm542, %v4405
        %4414 = vst.msk [vmem:[%s463 + $0x20] sm:$0xff] %vm542, %v4406
        %4415 = vst.msk [vmem:[%s463 + $0x28] sm:$0xff] %vm542, %v4407
        %4416 = vst.msk [vmem:[%s463 + $0x30] sm:$0xff] %vm542, %v4408
        %4417 = vst.msk [vmem:[%s463 + $0x38] sm:$0xff] %vm542, %v4409
        %s4418 = sand.u32 %s315, 1
        %s4419 = scalar_lea.sflag [#allocation5], %s4418
        %s4420 = sand.u32 %s315, 1
        %s4421 = smul.addr %s4420, 64
        %s4422 = scalar_lea.vmem [#allocation8], %s4421
        // Predicated region
        $region81: #{tpu_custom_call.1} parent=71 // pred_check
          %p4423 = pneg %p325
        $region82: #{tpu_custom_call.1} parent=71 // pred_check_branch
          %4425 = sbr.rel (%p4423) target = $region84
        $region83: #{tpu_custom_call.1} parent=71 // pred_region
          %s4427 = ssub.s32 1024, 1024
          %4428 = vsyncadd %s4419, %s4427
          %s4429 = smul.addr %s29, 8
          %s4430 = smul.addr %s4429, 128
          %s4431 = scalar_lea.hbm %s13, %s4430
          %s4432 = sshll.u32 %s4422, 4
          %s4433 = int_to_ptr.vmem [resolvable:$true] %s4432
          %4438 = dma.vmem_to_hbm [thread:$0]  %s4433, 1024, %s4431, %s4419, 128, 128, 8
        $region84: #{tpu_custom_call.1} parent=71 // pred_fallthru
          _
      $region72: #{tpu_custom_call.1} parent=5 // pred_fallthru
        _
      %p4439 = scmp.le.s32.totalorder 2, %s24
      // Predicated region
      $region85: #{tpu_custom_call.1} parent=5 // pred_check
        %p4440 = pneg %p4439
      $region86: #{tpu_custom_call.1} parent=5 // pred_check_branch
        %4442 = sbr.rel (%p4440) target = $region88
      $region87: #{tpu_custom_call.1} parent=5 // pred_region
        %s4443 = ssub.s32 %s24, 2
        // Predicated region
        $region89: #{tpu_custom_call.1} parent=87 // pred_check
          %p4444 = pneg %p331
        $region90: #{tpu_custom_call.1} parent=87 // pred_check_branch
          %4446 = sbr.rel (%p4444) target = $region92
        $region91: #{tpu_custom_call.1} parent=87 // pred_region
          %s4447 = sand.u32 %s316, 1
          %s4448 = scalar_lea.sflag [#allocation5], %s4447
          %s4449 = sand.u32 %s316, 1
          %s4450 = smul.addr %s4449, 64
          %s4451 = scalar_lea.vmem [#allocation8], %s4450
          %4452 = dma.done %s4448, 1024
        $region92: #{tpu_custom_call.1} parent=87 // pred_fallthru
          _
      $region88: #{tpu_custom_call.1} parent=5 // pred_fallthru
        _
    $region6: #{tpu_custom_call.1} parent=1 // loop_footer
      %s28 = sadd.s32 1, %s24
    $region7: #{tpu_custom_call.1} parent=1 // loop_footer_branch
      %23 = sbr.rel target = $region3
    $region8: #{tpu_custom_call.1} parent=1 // loop_exit
      _
    %4453 = vsyncpa [#allocation4], 1
    %s4454 = scalar_lea.sflag [#allocation4], 1
    %4455 = vsyncpa %s4454, 1
    %4456 = vsyncpa [#allocation7], 1
    %4457 = vsyncpa [#allocation5], 1
    %s4458 = scalar_lea.sflag [#allocation5], 1
    %4459 = vsyncpa %s4458, 1

</llo_original>
